<compile_context>
chip_gen: v5e
topology: v5e:2x2
jax: 0.10.0
libtpu: 0.0.40
codegen_flags: <defaults>
</compile_context>

<pallas_src>
import math

import jax
import jax.numpy as jnp
from jax.experimental import pallas as pl
from jax.experimental.pallas import tpu as pltpu


# ----------------------------------------------------------------------------
# Fused decoder-stack kernel: grid = (batch_tiles, n_layers); activation kept
# resident in VMEM scratch across the layer axis.  Optionally fuses the final
# vocab projection into the last layer step.
# ----------------------------------------------------------------------------
def _make_decoder_stack_kernel(n_head, head_dim, BT, S, Ss, D, F, V_pad,
                               fuse_out):
    scale = 1.0 / math.sqrt(head_dim)
    M_q = BT * S
    M_kv = BT * Ss

    def kernel(trg_ref, enc_ref, tmask_ref, smask_ref,
               sa_in_w_ref, sa_in_b_ref, sa_out_w_ref, sa_out_b_ref,
               ca_in_w_ref, ca_in_b_ref, ca_out_w_ref, ca_out_b_ref,
               lng_ref, lnb_ref, w1_ref, b1_ref, w2_ref, b2_ref,
               *rest):
        if fuse_out:
            outw_ref, outb_ref, out_ref, x_vmem = rest
        else:
            out_ref, x_vmem = rest

        l = pl.program_id(1)
        n_layers = pl.num_programs(1)

        @pl.when(l == 0)
        def _():
            x_vmem[...] = trg_ref[...].astype(jnp.float32)

        x = x_vmem[...].reshape(M_q, D)                       # (BT*S, D) f32
        enc = enc_ref[...].astype(jnp.float32).reshape(M_kv, D)

        # Boolean masks computed once per grid step (not per head).
        tmask = tmask_ref[...] != 0.0                         # (BT, S, S)
        smask = smask_ref[...] != 0.0                         # (BT, 1, Ss)

        sa_in_w = sa_in_w_ref[0]    # (3, D, D) bf16
        sa_in_b = sa_in_b_ref[0]    # (3, D)    f32
        sa_out_w = sa_out_w_ref[0]  # (H, hd, D) bf16
        sa_out_b = sa_out_b_ref[0]  # (1, D)     f32
        ca_in_w = ca_in_w_ref[0]
        ca_in_b = ca_in_b_ref[0]
        ca_out_w = ca_out_w_ref[0]
        ca_out_b = ca_out_b_ref[0]
        lng = lng_ref[0]            # (3, D)
        lnb = lnb_ref[0]            # (3, D)
        w1 = w1_ref[0]              # (D, F) bf16
        b1 = b1_ref[0]              # (1, F) f32
        w2 = w2_ref[0]              # (F, D) bf16
        b2 = b2_ref[0]              # (1, D) f32

        def mha(xq, xkv, s_q, s_k, mask, w_in, b_in, w_out, b_out):
            xq_bf = xq.astype(jnp.bfloat16)
            xkv_bf = xkv.astype(jnp.bfloat16)
            q = jnp.dot(xq_bf, w_in[0], preferred_element_type=jnp.float32) + b_in[0:1]
            k = jnp.dot(xkv_bf, w_in[1], preferred_element_type=jnp.float32) + b_in[1:2]
            v = jnp.dot(xkv_bf, w_in[2], preferred_element_type=jnp.float32) + b_in[2:3]
            # scale q instead of the SxS score matrix
            qb = (q * scale).reshape(BT, s_q, D).astype(jnp.bfloat16)
            kb = k.reshape(BT, s_k, D).astype(jnp.bfloat16)
            vb = v.reshape(BT, s_k, D).astype(jnp.bfloat16)
            acc = jnp.zeros((BT * s_q, D), jnp.float32)
            for h in range(n_head):              # accumulate-into-W_out: no concat
                lo = h * head_dim
                qh = qb[:, :, lo:lo + head_dim]
                kh = kb[:, :, lo:lo + head_dim]
                vh = vb[:, :, lo:lo + head_dim]
                s = jnp.einsum('bqd,bkd->bqk', qh, kh,
                               preferred_element_type=jnp.float32)
                s = jnp.where(mask, s, -10000.0)     # masked_fill semantics, f32
                s = s - jnp.max(s, axis=-1, keepdims=True)
                p = jnp.exp(s)
                p = p * pl.reciprocal(jnp.sum(p, axis=-1, keepdims=True),
                                      approx=True)
                oh = jnp.einsum('bqk,bkd->bqd', p.astype(jnp.bfloat16), vh,
                                preferred_element_type=jnp.float32)
                acc = acc + jnp.dot(
                    oh.reshape(BT * s_q, head_dim).astype(jnp.bfloat16),
                    w_out[h], preferred_element_type=jnp.float32)
            return acc + b_out

        def layer_norm(y, g, bb):     # biased variance, eps=1e-12 (matches ref)
            mu = jnp.mean(y, axis=-1, keepdims=True)
            var = jnp.mean((y - mu) ** 2, axis=-1, keepdims=True)
            return (y - mu) * jax.lax.rsqrt(var + 1e-12) * g + bb

        # TODO(synk): dropout layers omitted (eval-mode identity).

        # 1) masked self-attention + add & norm
        res = x
        x = mha(x, x, S, S, tmask, sa_in_w, sa_in_b, sa_out_w, sa_out_b)
        x = layer_norm(x + res, lng[0:1], lnb[0:1])

        # 2) encoder-decoder attention + add & norm
        res = x
        x = mha(x, enc, S, Ss, smask, ca_in_w, ca_in_b, ca_out_w, ca_out_b)
        x = layer_norm(x + res, lng[1:2], lnb[1:2])

        # 3) position-wise feed-forward + add & norm
        res = x
        h1 = jnp.maximum(
            jnp.dot(x.astype(jnp.bfloat16), w1,
                    preferred_element_type=jnp.float32) + b1, 0.0)
        x = jnp.dot(h1.astype(jnp.bfloat16), w2,
                    preferred_element_type=jnp.float32) + b2
        x = layer_norm(x + res, lng[2:3], lnb[2:3])

        x_vmem[...] = x.reshape(BT, S, D)

        @pl.when(l == n_layers - 1)
        def _():
            if fuse_out:
                logits = jnp.dot(x.astype(jnp.bfloat16), outw_ref[...],
                                 preferred_element_type=jnp.float32) + outb_ref[...]
                out_ref[...] = logits.reshape(BT, S, V_pad).astype(out_ref.dtype)
            else:
                out_ref[...] = x.reshape(BT, S, D).astype(out_ref.dtype)

    return kernel


_PARAM_ORDER = ("sa_in_w", "sa_in_b", "sa_out_w", "sa_out_b",
                "ca_in_w", "ca_in_b", "ca_out_w", "ca_out_b",
                "ln_g", "ln_b", "ffn_w1", "ffn_b1", "ffn_w2", "ffn_b2")


def decoder_stack(trg, enc_src, tmask, smask, params, n_head,
                  out_w=None, out_b=None):
    """Run the layer stack; if out_w/out_b given, fuse the vocab projection."""
    B, S, D = trg.shape
    Ss = enc_src.shape[1]
    L = params["sa_in_w"].shape[0]
    F = params["ffn_w1"].shape[-1]
    head_dim = D // n_head
    BT = B                       # whole (small) batch folded into M per step
    num_bt = B // BT
    fuse_out = out_w is not None

    if fuse_out:
        V = out_w.shape[1]
        V_pad = ((V + 127) // 128) * 128
        if V_pad != V:
            out_w = jnp.pad(out_w, ((0, 0), (0, V_pad - V)))
            out_b = jnp.pad(out_b, ((0, 0), (0, V_pad - V)))
        out_w = out_w.astype(jnp.bfloat16)
        out_b = out_b.astype(jnp.float32)
    else:
        V_pad = 0

    kernel = _make_decoder_stack_kernel(n_head, head_dim, BT, S, Ss, D, F,
                                        V_pad, fuse_out)

    def batch_spec(shape):
        blk = (BT,) + tuple(shape[1:])
        nrest = len(shape) - 1
        return pl.BlockSpec(blk, lambda b, l, _n=nrest: (b,) + (0,) * _n)

    def layer_spec(shape):
        blk = (1,) + tuple(shape[1:])
        nrest = len(shape) - 1
        return pl.BlockSpec(blk, lambda b, l, _n=nrest: (l,) + (0,) * _n)

    in_specs = ([batch_spec(trg.shape), batch_spec(enc_src.shape),
                 batch_spec(tmask.shape), batch_spec(smask.shape)]
                + [layer_spec(params[n].shape) for n in _PARAM_ORDER])
    extra_args = []
    if fuse_out:
        in_specs += [pl.BlockSpec((D, V_pad), lambda b, l: (0, 0)),
                     pl.BlockSpec((1, V_pad), lambda b, l: (0, 0))]
        extra_args = [out_w, out_b]
        out_specs = pl.BlockSpec((BT, S, V_pad), lambda b, l: (b, 0, 0))
        out_shape = jax.ShapeDtypeStruct((B, S, V_pad), jnp.float32)
    else:
        out_specs = pl.BlockSpec((BT, S, D), lambda b, l: (b, 0, 0))
        out_shape = jax.ShapeDtypeStruct((B, S, D), trg.dtype)

    # Explicit VMEM budget: double-buffered per-layer weights + resident acts.
    per_layer_w = sum(int(params[n].size * params[n].dtype.itemsize)
                      for n in _PARAM_ORDER) // L
    act_bytes = 4 * (4 * BT * S * D + BT * Ss * D
                     + BT * S * max(S, Ss) + BT * S * F)
    out_bytes = 4 * BT * S * (V_pad if fuse_out else D)
    outw_bytes = 2 * D * V_pad if fuse_out else 0
    vmem_limit = min(max(2 * per_layer_w + 4 * act_bytes + 2 * out_bytes
                         + 2 * outw_bytes + (4 << 20), 16 << 20), 64 << 20)

    grid_spec = pltpu.PrefetchScalarGridSpec(
        num_scalar_prefetch=0, grid=(num_bt, L),
        in_specs=in_specs, out_specs=out_specs,
        scratch_shapes=[pltpu.VMEM((BT, S, D), jnp.float32)])

    return pl.pallas_call(
        kernel,
        grid_spec=grid_spec,
        out_shape=out_shape,
        compiler_params=pltpu.CompilerParams(
            dimension_semantics=("parallel", "arbitrary"),
            vmem_limit_bytes=int(vmem_limit)),
    )(trg, enc_src, tmask, smask,
      *[params[n] for n in _PARAM_ORDER], *extra_args)


# ----------------------------------------------------------------------------
# Stand-alone vocabulary projection (fallback for large vocabularies):
# lane-dense 128-wide V tiles, bf16 weight stream.
# ----------------------------------------------------------------------------
def _final_linear_kernel(x_ref, w_ref, b_ref, out_ref):
    y = jnp.dot(x_ref[...].astype(jnp.bfloat16), w_ref[...],
                preferred_element_type=jnp.float32) + b_ref[...]
    out_ref[...] = y.astype(out_ref.dtype)


def final_linear(x, w, b, tile_v=128):
    B, S, D = x.shape
    V = w.shape[1]
    M = B * S
    V_pad = ((V + tile_v - 1) // tile_v) * tile_v
    if V_pad != V:
        w = jnp.pad(w, ((0, 0), (0, V_pad - V)))
        b = jnp.pad(b, ((0, 0), (0, V_pad - V)))
    w = w.astype(jnp.bfloat16)
    x_flat = x.reshape(M, D)

    vmem_limit = min(max(8 * (M * D + D * tile_v + M * tile_v) * 4, 16 << 20),
                     64 << 20)
    grid_spec = pltpu.PrefetchScalarGridSpec(
        num_scalar_prefetch=0, grid=(V_pad // tile_v,),
        in_specs=[pl.BlockSpec((M, D), lambda j: (0, 0)),
                  pl.BlockSpec((D, tile_v), lambda j: (0, j)),
                  pl.BlockSpec((1, tile_v), lambda j: (0, j))],
        out_specs=pl.BlockSpec((M, tile_v), lambda j: (0, j)))
    out = pl.pallas_call(
        _final_linear_kernel,
        grid_spec=grid_spec,
        out_shape=jax.ShapeDtypeStruct((M, V_pad), jnp.float32),
        compiler_params=pltpu.CompilerParams(
            dimension_semantics=("parallel",),
            vmem_limit_bytes=int(vmem_limit)),
    )(x_flat, w, b)
    return out[:, :V].reshape(B, S, V)


# ----------------------------------------------------------------------------
# Deterministic synthetic parameters (matching module shapes).
# Matmul weights stored in bf16; biases / layernorm params in f32.
# ----------------------------------------------------------------------------
def init_params(key, n_layers, d_model, ffn_hidden, n_head, voc_size):
    head_dim = d_model // n_head
    L = n_layers

    def rnd(k, shape, dtype=jnp.float32):
        return (0.05 * jax.random.normal(k, shape, jnp.float32)).astype(dtype)

    keys = jax.random.split(key, 14)
    params = dict(
        sa_in_w=rnd(keys[0], (L, 3, d_model, d_model), jnp.bfloat16),
        sa_in_b=rnd(keys[1], (L, 3, d_model)),
        sa_out_w=rnd(keys[2], (L, n_head, head_dim, d_model), jnp.bfloat16),
        sa_out_b=rnd(keys[3], (L, 1, d_model)),
        ca_in_w=rnd(keys[4], (L, 3, d_model, d_model), jnp.bfloat16),
        ca_in_b=rnd(keys[5], (L, 3, d_model)),
        ca_out_w=rnd(keys[6], (L, n_head, head_dim, d_model), jnp.bfloat16),
        ca_out_b=rnd(keys[7], (L, 1, d_model)),
        ln_g=jnp.ones((L, 3, d_model), jnp.float32),
        ln_b=jnp.zeros((L, 3, d_model), jnp.float32),
        ffn_w1=rnd(keys[8], (L, d_model, ffn_hidden), jnp.bfloat16),
        ffn_b1=rnd(keys[9], (L, 1, ffn_hidden)),
        ffn_w2=rnd(keys[10], (L, ffn_hidden, d_model), jnp.bfloat16),
        ffn_b2=rnd(keys[11], (L, 1, d_model)),
    )
    out_w = rnd(keys[12], (d_model, voc_size), jnp.bfloat16)
    out_b = rnd(keys[13], (1, voc_size))
    return params, out_w, out_b


def decoder_forward(trg, enc_src, trg_mask, src_mask, params, out_w, out_b,
                    n_head):
    # torch-style masks (B, 1, S, S) / (B, 1, 1, Ss) -> squeeze the head axis
    tmask = trg_mask[:, 0].astype(jnp.float32)     # (B, S, S)
    smask = src_mask[:, 0].astype(jnp.float32)     # (B, 1, Ss)

    B, S, D = trg.shape
    V = out_w.shape[1]
    V_pad = ((V + 127) // 128) * 128
    fused_bytes = D * V_pad * 2 + B * S * V_pad * 4
    if fused_bytes <= (4 << 20):
        # Fused vocab projection inside the decoder-stack kernel.
        logits = decoder_stack(trg, enc_src, tmask, smask, params, n_head,
                               out_w=out_w, out_b=out_b)
        return logits[:, :, :V]
    # Large-vocab fallback: separate lane-tiled projection kernel.
    x = decoder_stack(trg, enc_src, tmask, smask, params, n_head)
    return final_linear(x, out_w, out_b)


if __name__ == "__main__":
    B, S_TRG, S_SRC = 2, 8, 8
    D_MODEL, FFN_HIDDEN, N_HEAD, N_LAYERS, VOC = 32, 64, 4, 2, 50

    key = jax.random.PRNGKey(0)
    key, k_trg, k_enc = jax.random.split(key, 3)
    trg = jax.random.normal(k_trg, (B, S_TRG, D_MODEL), jnp.float32)
    enc_src = jax.random.normal(k_enc, (B, S_SRC, D_MODEL), jnp.float32)

    # causal target mask (B, 1, S, S) and source padding mask (B, 1, 1, S_src)
    causal = jnp.tril(jnp.ones((S_TRG, S_TRG), jnp.float32))
    trg_mask = jnp.broadcast_to(causal, (B, 1, S_TRG, S_TRG))
    src_lens = jnp.array([S_SRC, S_SRC - 2])
    src_mask = (jnp.arange(S_SRC)[None, None, None, :]
                < src_lens[:, None, None, None]).astype(jnp.float32)

    params, out_w, out_b = init_params(key, N_LAYERS, D_MODEL, FFN_HIDDEN,
                                       N_HEAD, VOC)

    logits = decoder_forward(trg, enc_src, trg_mask, src_mask,
                             params, out_w, out_b, N_HEAD)
    logits = jax.block_until_ready(logits)
    assert logits.shape == (B, S_TRG, VOC)
    assert bool(jnp.all(jnp.isfinite(logits)))
    print("KERNEL_OK")
</pallas_src>

<mosaic_0001>
module attributes {stable_mosaic.version = 11 : i64} {
  func.func @kernel(%arg0: i32, %arg1: i32, %arg2: memref<2x8x32xf32, #tpu.memory_space<vmem>>, %arg3: memref<2x8x32xf32, #tpu.memory_space<vmem>>, %arg4: memref<2x8x8xf32, #tpu.memory_space<vmem>>, %arg5: memref<2x1x8xf32, #tpu.memory_space<vmem>>, %arg6: memref<1x3x32x32xbf16, #tpu.memory_space<vmem>>, %arg7: memref<1x3x32xf32, #tpu.memory_space<vmem>>, %arg8: memref<1x4x8x32xbf16, #tpu.memory_space<vmem>>, %arg9: memref<1x1x32xf32, #tpu.memory_space<vmem>>, %arg10: memref<1x3x32x32xbf16, #tpu.memory_space<vmem>>, %arg11: memref<1x3x32xf32, #tpu.memory_space<vmem>>, %arg12: memref<1x4x8x32xbf16, #tpu.memory_space<vmem>>, %arg13: memref<1x1x32xf32, #tpu.memory_space<vmem>>, %arg14: memref<1x3x32xf32, #tpu.memory_space<vmem>>, %arg15: memref<1x3x32xf32, #tpu.memory_space<vmem>>, %arg16: memref<1x32x64xbf16, #tpu.memory_space<vmem>>, %arg17: memref<1x1x64xf32, #tpu.memory_space<vmem>>, %arg18: memref<1x64x32xbf16, #tpu.memory_space<vmem>>, %arg19: memref<1x1x32xf32, #tpu.memory_space<vmem>>, %arg20: memref<32x128xbf16, #tpu.memory_space<vmem>>, %arg21: memref<1x128xf32, #tpu.memory_space<vmem>>, %arg22: memref<2x8x128xf32, #tpu.memory_space<vmem>>, %arg23: memref<2x8x32xf32, #tpu.memory_space<vmem>>) attributes {dimension_semantics = [#tpu.dimension_semantics<parallel>, #tpu.dimension_semantics<arbitrary>], iteration_bounds = array<i64: 1, 2>, scalar_prefetch = 0 : i64, scratch_operands = 1 : i64, tpu.core_type = #tpu.core_type<tc>, window_params = [{transform_indices = @transform_0, window_bounds = array<i64: 2, 8, 32>}, {transform_indices = @transform_1, window_bounds = array<i64: 2, 8, 32>}, {transform_indices = @transform_2, window_bounds = array<i64: 2, 8, 8>}, {transform_indices = @transform_3, window_bounds = array<i64: 2, 1, 8>}, {transform_indices = @transform_4, window_bounds = array<i64: 1, 3, 32, 32>}, {transform_indices = @transform_5, window_bounds = array<i64: 1, 3, 32>}, {transform_indices = @transform_6, window_bounds = array<i64: 1, 4, 8, 32>}, {transform_indices = @transform_7, window_bounds = array<i64: 1, 1, 32>}, {transform_indices = @transform_8, window_bounds = array<i64: 1, 3, 32, 32>}, {transform_indices = @transform_9, window_bounds = array<i64: 1, 3, 32>}, {transform_indices = @transform_10, window_bounds = array<i64: 1, 4, 8, 32>}, {transform_indices = @transform_11, window_bounds = array<i64: 1, 1, 32>}, {transform_indices = @transform_12, window_bounds = array<i64: 1, 3, 32>}, {transform_indices = @transform_13, window_bounds = array<i64: 1, 3, 32>}, {transform_indices = @transform_14, window_bounds = array<i64: 1, 32, 64>}, {transform_indices = @transform_15, window_bounds = array<i64: 1, 1, 64>}, {transform_indices = @transform_16, window_bounds = array<i64: 1, 64, 32>}, {transform_indices = @transform_17, window_bounds = array<i64: 1, 1, 32>}, {pipeline_mode = #tpu.pipeline_mode<synchronous>, transform_indices = @transform_18, window_bounds = array<i64: 32, 128>}, {pipeline_mode = #tpu.pipeline_mode<synchronous>, transform_indices = @transform_19, window_bounds = array<i64: 1, 128>}, {transform_indices = @transform_20, window_bounds = array<i64: 2, 8, 128>}]} {
    %c0_i32 = arith.constant 0 : i32
    %0 = arith.cmpi eq, %arg1, %c0_i32 : i32
    %1 = arith.extui %0 : i1 to i32
    %c0_i32_0 = arith.constant 0 : i32
    %2 = arith.cmpi ne, %1, %c0_i32_0 : i32
    scf.if %2 {
      %c0_139 = arith.constant 0 : index
      %c0_140 = arith.constant 0 : index
      %c0_141 = arith.constant 0 : index
      %393 = vector.load %arg2[%c0_139, %c0_140, %c0_141] : memref<2x8x32xf32, #tpu.memory_space<vmem>>, vector<2x8x32xf32>
      %c0_142 = arith.constant 0 : index
      %c0_143 = arith.constant 0 : index
      %c0_144 = arith.constant 0 : index
      %394 = vector.load %arg23[%c0_142, %c0_143, %c0_144] : memref<2x8x32xf32, #tpu.memory_space<vmem>>, vector<2x8x32xf32>
      tpu.vector_store %arg23[%c0_142, %c0_143, %c0_144], %393 {strides = array<i32>} : memref<2x8x32xf32, #tpu.memory_space<vmem>>, vector<2x8x32xf32>,
    } else {
    }
    %c0 = arith.constant 0 : index
    %c0_1 = arith.constant 0 : index
    %c0_2 = arith.constant 0 : index
    %3 = vector.load %arg23[%c0, %c0_1, %c0_2] : memref<2x8x32xf32, #tpu.memory_space<vmem>>, vector<2x8x32xf32>
    %4 = vector.shape_cast %3 : vector<2x8x32xf32> to vector<16x32xf32>
    %c0_3 = arith.constant 0 : index
    %c0_4 = arith.constant 0 : index
    %c0_5 = arith.constant 0 : index
    %5 = vector.load %arg3[%c0_3, %c0_4, %c0_5] : memref<2x8x32xf32, #tpu.memory_space<vmem>>, vector<2x8x32xf32>
    %6 = vector.shape_cast %5 : vector<2x8x32xf32> to vector<16x32xf32>
    %c0_6 = arith.constant 0 : index
    %c0_7 = arith.constant 0 : index
    %c0_8 = arith.constant 0 : index
    %7 = vector.load %arg4[%c0_6, %c0_7, %c0_8] : memref<2x8x8xf32, #tpu.memory_space<vmem>>, vector<2x8x8xf32>
    %cst = arith.constant 0.000000e+00 : f32
    %8 = vector.broadcast %cst : f32 to vector<2x8x8xf32>
    %9 = arith.cmpf one, %7, %8 : vector<2x8x8xf32>
    %c0_9 = arith.constant 0 : index
    %c0_10 = arith.constant 0 : index
    %c0_11 = arith.constant 0 : index
    %10 = vector.load %arg5[%c0_9, %c0_10, %c0_11] : memref<2x1x8xf32, #tpu.memory_space<vmem>>, vector<2x1x8xf32>
    %cst_12 = arith.constant 0.000000e+00 : f32
    %11 = vector.broadcast %cst_12 : f32 to vector<2x1x8xf32>
    %12 = arith.cmpf one, %10, %11 : vector<2x1x8xf32>
    %c0_13 = arith.constant 0 : index
    %c0_14 = arith.constant 0 : index
    %c0_15 = arith.constant 0 : index
    %c0_16 = arith.constant 0 : index
    %13 = vector.load %arg6[%c0_13, %c0_14, %c0_15, %c0_16] : memref<1x3x32x32xbf16, #tpu.memory_space<vmem>>, vector<1x3x32x32xbf16>
    %14 = vector.shape_cast %13 : vector<1x3x32x32xbf16> to vector<3x32x32xbf16>
    %c0_17 = arith.constant 0 : index
    %c0_18 = arith.constant 0 : index
    %c0_19 = arith.constant 0 : index
    %15 = vector.load %arg7[%c0_17, %c0_18, %c0_19] : memref<1x3x32xf32, #tpu.memory_space<vmem>>, vector<1x3x32xf32>
    %16 = vector.shape_cast %15 : vector<1x3x32xf32> to vector<3x32xf32>
    %c0_20 = arith.constant 0 : index
    %c0_21 = arith.constant 0 : index
    %c0_22 = arith.constant 0 : index
    %c0_23 = arith.constant 0 : index
    %17 = vector.load %arg8[%c0_20, %c0_21, %c0_22, %c0_23] : memref<1x4x8x32xbf16, #tpu.memory_space<vmem>>, vector<1x4x8x32xbf16>
    %18 = vector.shape_cast %17 : vector<1x4x8x32xbf16> to vector<4x8x32xbf16>
    %c0_24 = arith.constant 0 : index
    %c0_25 = arith.constant 0 : index
    %c0_26 = arith.constant 0 : index
    %19 = vector.load %arg9[%c0_24, %c0_25, %c0_26] : memref<1x1x32xf32, #tpu.memory_space<vmem>>, vector<1x1x32xf32>
    %20 = vector.shape_cast %19 : vector<1x1x32xf32> to vector<1x32xf32>
    %c0_27 = arith.constant 0 : index
    %c0_28 = arith.constant 0 : index
    %c0_29 = arith.constant 0 : index
    %c0_30 = arith.constant 0 : index
    %21 = vector.load %arg10[%c0_27, %c0_28, %c0_29, %c0_30] : memref<1x3x32x32xbf16, #tpu.memory_space<vmem>>, vector<1x3x32x32xbf16>
    %22 = vector.shape_cast %21 : vector<1x3x32x32xbf16> to vector<3x32x32xbf16>
    %c0_31 = arith.constant 0 : index
    %c0_32 = arith.constant 0 : index
    %c0_33 = arith.constant 0 : index
    %23 = vector.load %arg11[%c0_31, %c0_32, %c0_33] : memref<1x3x32xf32, #tpu.memory_space<vmem>>, vector<1x3x32xf32>
    %24 = vector.shape_cast %23 : vector<1x3x32xf32> to vector<3x32xf32>
    %c0_34 = arith.constant 0 : index
    %c0_35 = arith.constant 0 : index
    %c0_36 = arith.constant 0 : index
    %c0_37 = arith.constant 0 : index
    %25 = vector.load %arg12[%c0_34, %c0_35, %c0_36, %c0_37] : memref<1x4x8x32xbf16, #tpu.memory_space<vmem>>, vector<1x4x8x32xbf16>
    %26 = vector.shape_cast %25 : vector<1x4x8x32xbf16> to vector<4x8x32xbf16>
    %c0_38 = arith.constant 0 : index
    %c0_39 = arith.constant 0 : index
    %c0_40 = arith.constant 0 : index
    %27 = vector.load %arg13[%c0_38, %c0_39, %c0_40] : memref<1x1x32xf32, #tpu.memory_space<vmem>>, vector<1x1x32xf32>
    %28 = vector.shape_cast %27 : vector<1x1x32xf32> to vector<1x32xf32>
    %c0_41 = arith.constant 0 : index
    %c0_42 = arith.constant 0 : index
    %c0_43 = arith.constant 0 : index
    %29 = vector.load %arg14[%c0_41, %c0_42, %c0_43] : memref<1x3x32xf32, #tpu.memory_space<vmem>>, vector<1x3x32xf32>
    %30 = vector.shape_cast %29 : vector<1x3x32xf32> to vector<3x32xf32>
    %c0_44 = arith.constant 0 : index
    %c0_45 = arith.constant 0 : index
    %c0_46 = arith.constant 0 : index
    %31 = vector.load %arg15[%c0_44, %c0_45, %c0_46] : memref<1x3x32xf32, #tpu.memory_space<vmem>>, vector<1x3x32xf32>
    %32 = vector.shape_cast %31 : vector<1x3x32xf32> to vector<3x32xf32>
    %c0_47 = arith.constant 0 : index
    %c0_48 = arith.constant 0 : index
    %c0_49 = arith.constant 0 : index
    %33 = vector.load %arg16[%c0_47, %c0_48, %c0_49] : memref<1x32x64xbf16, #tpu.memory_space<vmem>>, vector<1x32x64xbf16>
    %34 = vector.shape_cast %33 : vector<1x32x64xbf16> to vector<32x64xbf16>
    %c0_50 = arith.constant 0 : index
    %c0_51 = arith.constant 0 : index
    %c0_52 = arith.constant 0 : index
    %35 = vector.load %arg17[%c0_50, %c0_51, %c0_52] : memref<1x1x64xf32, #tpu.memory_space<vmem>>, vector<1x1x64xf32>
    %36 = vector.shape_cast %35 : vector<1x1x64xf32> to vector<1x64xf32>
    %c0_53 = arith.constant 0 : index
    %c0_54 = arith.constant 0 : index
    %c0_55 = arith.constant 0 : index
    %37 = vector.load %arg18[%c0_53, %c0_54, %c0_55] : memref<1x64x32xbf16, #tpu.memory_space<vmem>>, vector<1x64x32xbf16>
    %38 = vector.shape_cast %37 : vector<1x64x32xbf16> to vector<64x32xbf16>
    %c0_56 = arith.constant 0 : index
    %c0_57 = arith.constant 0 : index
    %c0_58 = arith.constant 0 : index
    %39 = vector.load %arg19[%c0_56, %c0_57, %c0_58] : memref<1x1x32xf32, #tpu.memory_space<vmem>>, vector<1x1x32xf32>
    %40 = vector.shape_cast %39 : vector<1x1x32xf32> to vector<1x32xf32>
    %41 = arith.truncf %4 : vector<16x32xf32> to vector<16x32xbf16>
    %42 = arith.truncf %4 : vector<16x32xf32> to vector<16x32xbf16>
    %43 = vector.extract_strided_slice %14 {offsets = [0, 0, 0], sizes = [1, 32, 32], strides = [1, 1, 1]} : vector<3x32x32xbf16> to vector<1x32x32xbf16>
    %44 = vector.shape_cast %43 : vector<1x32x32xbf16> to vector<32x32xbf16>
    %cst_59 = arith.constant dense<0.000000e+00> : vector<16x32xf32>
    %45 = tpu.matmul %41, %44, %cst_59 {dimension_numbers = #tpu.dot_dimension_numbers<[1], [0], [0], [1], [0, 0, 1, 1], [], []>} : vector<16x32xbf16>, vector<32x32xbf16>, vector<16x32xf32> -> vector<16x32xf32>
    %46 = vector.extract_strided_slice %16 {offsets = [0, 0], sizes = [1, 32], strides = [1, 1]} : vector<3x32xf32> to vector<1x32xf32>
    %47 = vector.broadcast %46 : vector<1x32xf32> to vector<16x32xf32>
    %48 = arith.addf %45, %47 : vector<16x32xf32>
    %49 = vector.extract_strided_slice %14 {offsets = [1, 0, 0], sizes = [1, 32, 32], strides = [1, 1, 1]} : vector<3x32x32xbf16> to vector<1x32x32xbf16>
    %50 = vector.shape_cast %49 : vector<1x32x32xbf16> to vector<32x32xbf16>
    %cst_60 = arith.constant dense<0.000000e+00> : vector<16x32xf32>
    %51 = tpu.matmul %42, %50, %cst_60 {dimension_numbers = #tpu.dot_dimension_numbers<[1], [0], [0], [1], [0, 0, 1, 1], [], []>} : vector<16x32xbf16>, vector<32x32xbf16>, vector<16x32xf32> -> vector<16x32xf32>
    %52 = vector.extract_strided_slice %16 {offsets = [1, 0], sizes = [1, 32], strides = [1, 1]} : vector<3x32xf32> to vector<1x32xf32>
    %53 = vector.broadcast %52 : vector<1x32xf32> to vector<16x32xf32>
    %54 = arith.addf %51, %53 : vector<16x32xf32>
    %55 = vector.extract_strided_slice %14 {offsets = [2, 0, 0], sizes = [1, 32, 32], strides = [1, 1, 1]} : vector<3x32x32xbf16> to vector<1x32x32xbf16>
    %56 = vector.shape_cast %55 : vector<1x32x32xbf16> to vector<32x32xbf16>
    %cst_61 = arith.constant dense<0.000000e+00> : vector<16x32xf32>
    %57 = tpu.matmul %42, %56, %cst_61 {dimension_numbers = #tpu.dot_dimension_numbers<[1], [0], [0], [1], [0, 0, 1, 1], [], []>} : vector<16x32xbf16>, vector<32x32xbf16>, vector<16x32xf32> -> vector<16x32xf32>
    %58 = vector.extract_strided_slice %16 {offsets = [2, 0], sizes = [1, 32], strides = [1, 1]} : vector<3x32xf32> to vector<1x32xf32>
    %59 = vector.broadcast %58 : vector<1x32xf32> to vector<16x32xf32>
    %60 = arith.addf %57, %59 : vector<16x32xf32>
    %cst_62 = arith.constant 0.353553385 : f32
    %61 = vector.broadcast %cst_62 : f32 to vector<16x32xf32>
    %62 = arith.mulf %48, %61 : vector<16x32xf32>
    %63 = vector.shape_cast %62 : vector<16x32xf32> to vector<2x8x32xf32>
    %64 = arith.truncf %63 : vector<2x8x32xf32> to vector<2x8x32xbf16>
    %65 = vector.shape_cast %54 : vector<16x32xf32> to vector<2x8x32xf32>
    %66 = arith.truncf %65 : vector<2x8x32xf32> to vector<2x8x32xbf16>
    %67 = vector.shape_cast %60 : vector<16x32xf32> to vector<2x8x32xf32>
    %68 = arith.truncf %67 : vector<2x8x32xf32> to vector<2x8x32xbf16>
    %cst_63 = arith.constant 0.000000e+00 : f32
    %69 = vector.broadcast %cst_63 : f32 to vector<16x32xf32>
    %70 = vector.extract_strided_slice %64 {offsets = [0, 0, 0], sizes = [2, 8, 8], strides = [1, 1, 1]} : vector<2x8x32xbf16> to vector<2x8x8xbf16>
    %71 = vector.extract_strided_slice %66 {offsets = [0, 0, 0], sizes = [2, 8, 8], strides = [1, 1, 1]} : vector<2x8x32xbf16> to vector<2x8x8xbf16>
    %72 = vector.extract_strided_slice %68 {offsets = [0, 0, 0], sizes = [2, 8, 8], strides = [1, 1, 1]} : vector<2x8x32xbf16> to vector<2x8x8xbf16>
    "tpu.trace_start"() <{level = 10 : i32, message = "bqd,bkd->bqk"}> : () -> ()
    %cst_64 = arith.constant dense<0.000000e+00> : vector<2x8x8xf32>
    %73 = tpu.matmul %70, %71, %cst_64 {dimension_numbers = #tpu.dot_dimension_numbers<[2], [2], [1], [1], [0, 0, 0, 1, 1, 1], [0], [0]>} : vector<2x8x8xbf16>, vector<2x8x8xbf16>, vector<2x8x8xf32> -> vector<2x8x8xf32>
    %cst_65 = arith.constant -1.000000e+04 : f32
    "tpu.trace_stop"() : () -> ()
    %74 = vector.broadcast %cst_65 : f32 to vector<2x8x8xf32>
    %75 = arith.select %9, %73, %74 : vector<2x8x8xi1>, vector<2x8x8xf32>
    %cst_66 = arith.constant dense<0xFF800000> : vector<2x8xf32>
    %76 = vector.multi_reduction <maximumf>, %75, %cst_66 [2] : vector<2x8x8xf32> to vector<2x8xf32>
    %77 = vector.shape_cast %76 : vector<2x8xf32> to vector<2x8x1xf32>
    %78 = vector.broadcast %77 : vector<2x8x1xf32> to vector<2x8x8xf32>
    %79 = arith.subf %75, %78 : vector<2x8x8xf32>
    %80 = math.exp %79 : vector<2x8x8xf32>
    %cst_67 = arith.constant dense<0.000000e+00> : vector<2x8xf32>
    %81 = vector.multi_reduction <add>, %80, %cst_67 [2] : vector<2x8x8xf32> to vector<2x8xf32>
    %82 = vector.shape_cast %81 : vector<2x8xf32> to vector<2x8x1xf32>
    %83 = tpu.reciprocal %82 {approx = true} : vector<2x8x1xf32> -> vector<2x8x1xf32>
    %84 = vector.broadcast %83 : vector<2x8x1xf32> to vector<2x8x8xf32>
    %85 = arith.mulf %80, %84 : vector<2x8x8xf32>
    %86 = arith.truncf %85 : vector<2x8x8xf32> to vector<2x8x8xbf16>
    "tpu.trace_start"() <{level = 10 : i32, message = "bqk,bkd->bqd"}> : () -> ()
    %cst_68 = arith.constant dense<0.000000e+00> : vector<2x8x8xf32>
    %87 = tpu.matmul %86, %72, %cst_68 {dimension_numbers = #tpu.dot_dimension_numbers<[2], [1], [1], [2], [0, 0, 0, 1, 1, 2], [0], [0]>} : vector<2x8x8xbf16>, vector<2x8x8xbf16>, vector<2x8x8xf32> -> vector<2x8x8xf32>
    "tpu.trace_stop"() : () -> ()
    %88 = vector.shape_cast %87 : vector<2x8x8xf32> to vector<16x8xf32>
    %89 = arith.truncf %88 : vector<16x8xf32> to vector<16x8xbf16>
    %90 = vector.extract_strided_slice %18 {offsets = [0, 0, 0], sizes = [1, 8, 32], strides = [1, 1, 1]} : vector<4x8x32xbf16> to vector<1x8x32xbf16>
    %91 = vector.shape_cast %90 : vector<1x8x32xbf16> to vector<8x32xbf16>
    %cst_69 = arith.constant dense<0.000000e+00> : vector<16x32xf32>
    %92 = tpu.matmul %89, %91, %cst_69 {dimension_numbers = #tpu.dot_dimension_numbers<[1], [0], [0], [1], [0, 0, 1, 1], [], []>} : vector<16x8xbf16>, vector<8x32xbf16>, vector<16x32xf32> -> vector<16x32xf32>
    %93 = arith.addf %69, %92 : vector<16x32xf32>
    %94 = vector.extract_strided_slice %64 {offsets = [0, 0, 8], sizes = [2, 8, 8], strides = [1, 1, 1]} : vector<2x8x32xbf16> to vector<2x8x8xbf16>
    %95 = vector.extract_strided_slice %66 {offsets = [0, 0, 8], sizes = [2, 8, 8], strides = [1, 1, 1]} : vector<2x8x32xbf16> to vector<2x8x8xbf16>
    %96 = vector.extract_strided_slice %68 {offsets = [0, 0, 8], sizes = [2, 8, 8], strides = [1, 1, 1]} : vector<2x8x32xbf16> to vector<2x8x8xbf16>
    "tpu.trace_start"() <{level = 10 : i32, message = "bqd,bkd->bqk"}> : () -> ()
    %cst_70 = arith.constant dense<0.000000e+00> : vector<2x8x8xf32>
    %97 = tpu.matmul %94, %95, %cst_70 {dimension_numbers = #tpu.dot_dimension_numbers<[2], [2], [1], [1], [0, 0, 0, 1, 1, 1], [0], [0]>} : vector<2x8x8xbf16>, vector<2x8x8xbf16>, vector<2x8x8xf32> -> vector<2x8x8xf32>
    %cst_71 = arith.constant -1.000000e+04 : f32
    "tpu.trace_stop"() : () -> ()
    %98 = vector.broadcast %cst_71 : f32 to vector<2x8x8xf32>
    %99 = arith.select %9, %97, %98 : vector<2x8x8xi1>, vector<2x8x8xf32>
    %cst_72 = arith.constant dense<0xFF800000> : vector<2x8xf32>
    %100 = vector.multi_reduction <maximumf>, %99, %cst_72 [2] : vector<2x8x8xf32> to vector<2x8xf32>
    %101 = vector.shape_cast %100 : vector<2x8xf32> to vector<2x8x1xf32>
    %102 = vector.broadcast %101 : vector<2x8x1xf32> to vector<2x8x8xf32>
    %103 = arith.subf %99, %102 : vector<2x8x8xf32>
    %104 = math.exp %103 : vector<2x8x8xf32>
    %cst_73 = arith.constant dense<0.000000e+00> : vector<2x8xf32>
    %105 = vector.multi_reduction <add>, %104, %cst_73 [2] : vector<2x8x8xf32> to vector<2x8xf32>
    %106 = vector.shape_cast %105 : vector<2x8xf32> to vector<2x8x1xf32>
    %107 = tpu.reciprocal %106 {approx = true} : vector<2x8x1xf32> -> vector<2x8x1xf32>
    %108 = vector.broadcast %107 : vector<2x8x1xf32> to vector<2x8x8xf32>
    %109 = arith.mulf %104, %108 : vector<2x8x8xf32>
    %110 = arith.truncf %109 : vector<2x8x8xf32> to vector<2x8x8xbf16>
    "tpu.trace_start"() <{level = 10 : i32, message = "bqk,bkd->bqd"}> : () -> ()
    %cst_74 = arith.constant dense<0.000000e+00> : vector<2x8x8xf32>
    %111 = tpu.matmul %110, %96, %cst_74 {dimension_numbers = #tpu.dot_dimension_numbers<[2], [1], [1], [2], [0, 0, 0, 1, 1, 2], [0], [0]>} : vector<2x8x8xbf16>, vector<2x8x8xbf16>, vector<2x8x8xf32> -> vector<2x8x8xf32>
    "tpu.trace_stop"() : () -> ()
    %112 = vector.shape_cast %111 : vector<2x8x8xf32> to vector<16x8xf32>
    %113 = arith.truncf %112 : vector<16x8xf32> to vector<16x8xbf16>
    %114 = vector.extract_strided_slice %18 {offsets = [1, 0, 0], sizes = [1, 8, 32], strides = [1, 1, 1]} : vector<4x8x32xbf16> to vector<1x8x32xbf16>
    %115 = vector.shape_cast %114 : vector<1x8x32xbf16> to vector<8x32xbf16>
    %cst_75 = arith.constant dense<0.000000e+00> : vector<16x32xf32>
    %116 = tpu.matmul %113, %115, %cst_75 {dimension_numbers = #tpu.dot_dimension_numbers<[1], [0], [0], [1], [0, 0, 1, 1], [], []>} : vector<16x8xbf16>, vector<8x32xbf16>, vector<16x32xf32> -> vector<16x32xf32>
    %117 = arith.addf %93, %116 : vector<16x32xf32>
    %118 = vector.extract_strided_slice %64 {offsets = [0, 0, 16], sizes = [2, 8, 8], strides = [1, 1, 1]} : vector<2x8x32xbf16> to vector<2x8x8xbf16>
    %119 = vector.extract_strided_slice %66 {offsets = [0, 0, 16], sizes = [2, 8, 8], strides = [1, 1, 1]} : vector<2x8x32xbf16> to vector<2x8x8xbf16>
    %120 = vector.extract_strided_slice %68 {offsets = [0, 0, 16], sizes = [2, 8, 8], strides = [1, 1, 1]} : vector<2x8x32xbf16> to vector<2x8x8xbf16>
    "tpu.trace_start"() <{level = 10 : i32, message = "bqd,bkd->bqk"}> : () -> ()
    %cst_76 = arith.constant dense<0.000000e+00> : vector<2x8x8xf32>
    %121 = tpu.matmul %118, %119, %cst_76 {dimension_numbers = #tpu.dot_dimension_numbers<[2], [2], [1], [1], [0, 0, 0, 1, 1, 1], [0], [0]>} : vector<2x8x8xbf16>, vector<2x8x8xbf16>, vector<2x8x8xf32> -> vector<2x8x8xf32>
    %cst_77 = arith.constant -1.000000e+04 : f32
    "tpu.trace_stop"() : () -> ()
    %122 = vector.broadcast %cst_77 : f32 to vector<2x8x8xf32>
    %123 = arith.select %9, %121, %122 : vector<2x8x8xi1>, vector<2x8x8xf32>
    %cst_78 = arith.constant dense<0xFF800000> : vector<2x8xf32>
    %124 = vector.multi_reduction <maximumf>, %123, %cst_78 [2] : vector<2x8x8xf32> to vector<2x8xf32>
    %125 = vector.shape_cast %124 : vector<2x8xf32> to vector<2x8x1xf32>
    %126 = vector.broadcast %125 : vector<2x8x1xf32> to vector<2x8x8xf32>
    %127 = arith.subf %123, %126 : vector<2x8x8xf32>
    %128 = math.exp %127 : vector<2x8x8xf32>
    %cst_79 = arith.constant dense<0.000000e+00> : vector<2x8xf32>
    %129 = vector.multi_reduction <add>, %128, %cst_79 [2] : vector<2x8x8xf32> to vector<2x8xf32>
    %130 = vector.shape_cast %129 : vector<2x8xf32> to vector<2x8x1xf32>
    %131 = tpu.reciprocal %130 {approx = true} : vector<2x8x1xf32> -> vector<2x8x1xf32>
    %132 = vector.broadcast %131 : vector<2x8x1xf32> to vector<2x8x8xf32>
    %133 = arith.mulf %128, %132 : vector<2x8x8xf32>
    %134 = arith.truncf %133 : vector<2x8x8xf32> to vector<2x8x8xbf16>
    "tpu.trace_start"() <{level = 10 : i32, message = "bqk,bkd->bqd"}> : () -> ()
    %cst_80 = arith.constant dense<0.000000e+00> : vector<2x8x8xf32>
    %135 = tpu.matmul %134, %120, %cst_80 {dimension_numbers = #tpu.dot_dimension_numbers<[2], [1], [1], [2], [0, 0, 0, 1, 1, 2], [0], [0]>} : vector<2x8x8xbf16>, vector<2x8x8xbf16>, vector<2x8x8xf32> -> vector<2x8x8xf32>
    "tpu.trace_stop"() : () -> ()
    %136 = vector.shape_cast %135 : vector<2x8x8xf32> to vector<16x8xf32>
    %137 = arith.truncf %136 : vector<16x8xf32> to vector<16x8xbf16>
    %138 = vector.extract_strided_slice %18 {offsets = [2, 0, 0], sizes = [1, 8, 32], strides = [1, 1, 1]} : vector<4x8x32xbf16> to vector<1x8x32xbf16>
    %139 = vector.shape_cast %138 : vector<1x8x32xbf16> to vector<8x32xbf16>
    %cst_81 = arith.constant dense<0.000000e+00> : vector<16x32xf32>
    %140 = tpu.matmul %137, %139, %cst_81 {dimension_numbers = #tpu.dot_dimension_numbers<[1], [0], [0], [1], [0, 0, 1, 1], [], []>} : vector<16x8xbf16>, vector<8x32xbf16>, vector<16x32xf32> -> vector<16x32xf32>
    %141 = arith.addf %117, %140 : vector<16x32xf32>
    %142 = vector.extract_strided_slice %64 {offsets = [0, 0, 24], sizes = [2, 8, 8], strides = [1, 1, 1]} : vector<2x8x32xbf16> to vector<2x8x8xbf16>
    %143 = vector.extract_strided_slice %66 {offsets = [0, 0, 24], sizes = [2, 8, 8], strides = [1, 1, 1]} : vector<2x8x32xbf16> to vector<2x8x8xbf16>
    %144 = vector.extract_strided_slice %68 {offsets = [0, 0, 24], sizes = [2, 8, 8], strides = [1, 1, 1]} : vector<2x8x32xbf16> to vector<2x8x8xbf16>
    "tpu.trace_start"() <{level = 10 : i32, message = "bqd,bkd->bqk"}> : () -> ()
    %cst_82 = arith.constant dense<0.000000e+00> : vector<2x8x8xf32>
    %145 = tpu.matmul %142, %143, %cst_82 {dimension_numbers = #tpu.dot_dimension_numbers<[2], [2], [1], [1], [0, 0, 0, 1, 1, 1], [0], [0]>} : vector<2x8x8xbf16>, vector<2x8x8xbf16>, vector<2x8x8xf32> -> vector<2x8x8xf32>
    %cst_83 = arith.constant -1.000000e+04 : f32
    "tpu.trace_stop"() : () -> ()
    %146 = vector.broadcast %cst_83 : f32 to vector<2x8x8xf32>
    %147 = arith.select %9, %145, %146 : vector<2x8x8xi1>, vector<2x8x8xf32>
    %cst_84 = arith.constant dense<0xFF800000> : vector<2x8xf32>
    %148 = vector.multi_reduction <maximumf>, %147, %cst_84 [2] : vector<2x8x8xf32> to vector<2x8xf32>
    %149 = vector.shape_cast %148 : vector<2x8xf32> to vector<2x8x1xf32>
    %150 = vector.broadcast %149 : vector<2x8x1xf32> to vector<2x8x8xf32>
    %151 = arith.subf %147, %150 : vector<2x8x8xf32>
    %152 = math.exp %151 : vector<2x8x8xf32>
    %cst_85 = arith.constant dense<0.000000e+00> : vector<2x8xf32>
    %153 = vector.multi_reduction <add>, %152, %cst_85 [2] : vector<2x8x8xf32> to vector<2x8xf32>
    %154 = vector.shape_cast %153 : vector<2x8xf32> to vector<2x8x1xf32>
    %155 = tpu.reciprocal %154 {approx = true} : vector<2x8x1xf32> -> vector<2x8x1xf32>
    %156 = vector.broadcast %155 : vector<2x8x1xf32> to vector<2x8x8xf32>
    %157 = arith.mulf %152, %156 : vector<2x8x8xf32>
    %158 = arith.truncf %157 : vector<2x8x8xf32> to vector<2x8x8xbf16>
    "tpu.trace_start"() <{level = 10 : i32, message = "bqk,bkd->bqd"}> : () -> ()
    %cst_86 = arith.constant dense<0.000000e+00> : vector<2x8x8xf32>
    %159 = tpu.matmul %158, %144, %cst_86 {dimension_numbers = #tpu.dot_dimension_numbers<[2], [1], [1], [2], [0, 0, 0, 1, 1, 2], [0], [0]>} : vector<2x8x8xbf16>, vector<2x8x8xbf16>, vector<2x8x8xf32> -> vector<2x8x8xf32>
    "tpu.trace_stop"() : () -> ()
    %160 = vector.shape_cast %159 : vector<2x8x8xf32> to vector<16x8xf32>
    %161 = arith.truncf %160 : vector<16x8xf32> to vector<16x8xbf16>
    %162 = vector.extract_strided_slice %18 {offsets = [3, 0, 0], sizes = [1, 8, 32], strides = [1, 1, 1]} : vector<4x8x32xbf16> to vector<1x8x32xbf16>
    %163 = vector.shape_cast %162 : vector<1x8x32xbf16> to vector<8x32xbf16>
    %cst_87 = arith.constant dense<0.000000e+00> : vector<16x32xf32>
    %164 = tpu.matmul %161, %163, %cst_87 {dimension_numbers = #tpu.dot_dimension_numbers<[1], [0], [0], [1], [0, 0, 1, 1], [], []>} : vector<16x8xbf16>, vector<8x32xbf16>, vector<16x32xf32> -> vector<16x32xf32>
    %165 = arith.addf %141, %164 : vector<16x32xf32>
    %166 = vector.broadcast %20 : vector<1x32xf32> to vector<16x32xf32>
    %167 = arith.addf %165, %166 : vector<16x32xf32>
    %168 = arith.addf %167, %4 : vector<16x32xf32>
    %169 = vector.extract_strided_slice %30 {offsets = [0, 0], sizes = [1, 32], strides = [1, 1]} : vector<3x32xf32> to vector<1x32xf32>
    %170 = vector.extract_strided_slice %32 {offsets = [0, 0], sizes = [1, 32], strides = [1, 1]} : vector<3x32xf32> to vector<1x32xf32>
    %cst_88 = arith.constant dense<0.000000e+00> : vector<16xf32>
    %171 = vector.multi_reduction <add>, %168, %cst_88 [1] : vector<16x32xf32> to vector<16xf32>
    %172 = vector.shape_cast %171 : vector<16xf32> to vector<16x1xf32>
    %cst_89 = arith.constant 3.200000e+01 : f32
    %173 = vector.broadcast %cst_89 : f32 to vector<16x1xf32>
    %174 = arith.divf %172, %173 : vector<16x1xf32>
    %175 = vector.broadcast %174 : vector<16x1xf32> to vector<16x32xf32>
    %176 = arith.subf %168, %175 : vector<16x32xf32>
    %177 = arith.mulf %176, %176 : vector<16x32xf32>
    %cst_90 = arith.constant dense<0.000000e+00> : vector<16xf32>
    %178 = vector.multi_reduction <add>, %177, %cst_90 [1] : vector<16x32xf32> to vector<16xf32>
    %179 = vector.shape_cast %178 : vector<16xf32> to vector<16x1xf32>
    %cst_91 = arith.constant 3.200000e+01 : f32
    %180 = vector.broadcast %cst_91 : f32 to vector<16x1xf32>
    %181 = arith.divf %179, %180 : vector<16x1xf32>
    %182 = vector.broadcast %174 : vector<16x1xf32> to vector<16x32xf32>
    %183 = arith.subf %168, %182 : vector<16x32xf32>
    %cst_92 = arith.constant 9.99999996E-13 : f32
    %184 = vector.broadcast %cst_92 : f32 to vector<16x1xf32>
    %185 = arith.addf %181, %184 : vector<16x1xf32>
    %186 = math.rsqrt %185 : vector<16x1xf32>
    %187 = vector.broadcast %186 : vector<16x1xf32> to vector<16x32xf32>
    %188 = arith.mulf %183, %187 : vector<16x32xf32>
    %189 = vector.broadcast %169 : vector<1x32xf32> to vector<16x32xf32>
    %190 = arith.mulf %188, %189 : vector<16x32xf32>
    %191 = vector.broadcast %170 : vector<1x32xf32> to vector<16x32xf32>
    %192 = arith.addf %190, %191 : vector<16x32xf32>
    %193 = arith.truncf %192 : vector<16x32xf32> to vector<16x32xbf16>
    %194 = arith.truncf %6 : vector<16x32xf32> to vector<16x32xbf16>
    %195 = vector.extract_strided_slice %22 {offsets = [0, 0, 0], sizes = [1, 32, 32], strides = [1, 1, 1]} : vector<3x32x32xbf16> to vector<1x32x32xbf16>
    %196 = vector.shape_cast %195 : vector<1x32x32xbf16> to vector<32x32xbf16>
    %cst_93 = arith.constant dense<0.000000e+00> : vector<16x32xf32>
    %197 = tpu.matmul %193, %196, %cst_93 {dimension_numbers = #tpu.dot_dimension_numbers<[1], [0], [0], [1], [0, 0, 1, 1], [], []>} : vector<16x32xbf16>, vector<32x32xbf16>, vector<16x32xf32> -> vector<16x32xf32>
    %198 = vector.extract_strided_slice %24 {offsets = [0, 0], sizes = [1, 32], strides = [1, 1]} : vector<3x32xf32> to vector<1x32xf32>
    %199 = vector.broadcast %198 : vector<1x32xf32> to vector<16x32xf32>
    %200 = arith.addf %197, %199 : vector<16x32xf32>
    %201 = vector.extract_strided_slice %22 {offsets = [1, 0, 0], sizes = [1, 32, 32], strides = [1, 1, 1]} : vector<3x32x32xbf16> to vector<1x32x32xbf16>
    %202 = vector.shape_cast %201 : vector<1x32x32xbf16> to vector<32x32xbf16>
    %cst_94 = arith.constant dense<0.000000e+00> : vector<16x32xf32>
    %203 = tpu.matmul %194, %202, %cst_94 {dimension_numbers = #tpu.dot_dimension_numbers<[1], [0], [0], [1], [0, 0, 1, 1], [], []>} : vector<16x32xbf16>, vector<32x32xbf16>, vector<16x32xf32> -> vector<16x32xf32>
    %204 = vector.extract_strided_slice %24 {offsets = [1, 0], sizes = [1, 32], strides = [1, 1]} : vector<3x32xf32> to vector<1x32xf32>
    %205 = vector.broadcast %204 : vector<1x32xf32> to vector<16x32xf32>
    %206 = arith.addf %203, %205 : vector<16x32xf32>
    %207 = vector.extract_strided_slice %22 {offsets = [2, 0, 0], sizes = [1, 32, 32], strides = [1, 1, 1]} : vector<3x32x32xbf16> to vector<1x32x32xbf16>
    %208 = vector.shape_cast %207 : vector<1x32x32xbf16> to vector<32x32xbf16>
    %cst_95 = arith.constant dense<0.000000e+00> : vector<16x32xf32>
    %209 = tpu.matmul %194, %208, %cst_95 {dimension_numbers = #tpu.dot_dimension_numbers<[1], [0], [0], [1], [0, 0, 1, 1], [], []>} : vector<16x32xbf16>, vector<32x32xbf16>, vector<16x32xf32> -> vector<16x32xf32>
    %210 = vector.extract_strided_slice %24 {offsets = [2, 0], sizes = [1, 32], strides = [1, 1]} : vector<3x32xf32> to vector<1x32xf32>
    %211 = vector.broadcast %210 : vector<1x32xf32> to vector<16x32xf32>
    %212 = arith.addf %209, %211 : vector<16x32xf32>
    %cst_96 = arith.constant 0.353553385 : f32
    %213 = vector.broadcast %cst_96 : f32 to vector<16x32xf32>
    %214 = arith.mulf %200, %213 : vector<16x32xf32>
    %215 = vector.shape_cast %214 : vector<16x32xf32> to vector<2x8x32xf32>
    %216 = arith.truncf %215 : vector<2x8x32xf32> to vector<2x8x32xbf16>
    %217 = vector.shape_cast %206 : vector<16x32xf32> to vector<2x8x32xf32>
    %218 = arith.truncf %217 : vector<2x8x32xf32> to vector<2x8x32xbf16>
    %219 = vector.shape_cast %212 : vector<16x32xf32> to vector<2x8x32xf32>
    %220 = arith.truncf %219 : vector<2x8x32xf32> to vector<2x8x32xbf16>
    %cst_97 = arith.constant 0.000000e+00 : f32
    %221 = vector.broadcast %cst_97 : f32 to vector<16x32xf32>
    %222 = vector.extract_strided_slice %216 {offsets = [0, 0, 0], sizes = [2, 8, 8], strides = [1, 1, 1]} : vector<2x8x32xbf16> to vector<2x8x8xbf16>
    %223 = vector.extract_strided_slice %218 {offsets = [0, 0, 0], sizes = [2, 8, 8], strides = [1, 1, 1]} : vector<2x8x32xbf16> to vector<2x8x8xbf16>
    %224 = vector.extract_strided_slice %220 {offsets = [0, 0, 0], sizes = [2, 8, 8], strides = [1, 1, 1]} : vector<2x8x32xbf16> to vector<2x8x8xbf16>
    "tpu.trace_start"() <{level = 10 : i32, message = "bqd,bkd->bqk"}> : () -> ()
    %cst_98 = arith.constant dense<0.000000e+00> : vector<2x8x8xf32>
    %225 = tpu.matmul %222, %223, %cst_98 {dimension_numbers = #tpu.dot_dimension_numbers<[2], [2], [1], [1], [0, 0, 0, 1, 1, 1], [0], [0]>} : vector<2x8x8xbf16>, vector<2x8x8xbf16>, vector<2x8x8xf32> -> vector<2x8x8xf32>
    %cst_99 = arith.constant -1.000000e+04 : f32
    "tpu.trace_stop"() : () -> ()
    %226 = vector.shape_cast %12 : vector<2x1x8xi1> to vector<2x1x8xi1>
    %227 = vector.broadcast %226 : vector<2x1x8xi1> to vector<2x8x8xi1>
    %228 = vector.broadcast %cst_99 : f32 to vector<2x8x8xf32>
    %229 = arith.select %227, %225, %228 : vector<2x8x8xi1>, vector<2x8x8xf32>
    %cst_100 = arith.constant dense<0xFF800000> : vector<2x8xf32>
    %230 = vector.multi_reduction <maximumf>, %229, %cst_100 [2] : vector<2x8x8xf32> to vector<2x8xf32>
    %231 = vector.shape_cast %230 : vector<2x8xf32> to vector<2x8x1xf32>
    %232 = vector.broadcast %231 : vector<2x8x1xf32> to vector<2x8x8xf32>
    %233 = arith.subf %229, %232 : vector<2x8x8xf32>
    %234 = math.exp %233 : vector<2x8x8xf32>
    %cst_101 = arith.constant dense<0.000000e+00> : vector<2x8xf32>
    %235 = vector.multi_reduction <add>, %234, %cst_101 [2] : vector<2x8x8xf32> to vector<2x8xf32>
    %236 = vector.shape_cast %235 : vector<2x8xf32> to vector<2x8x1xf32>
    %237 = tpu.reciprocal %236 {approx = true} : vector<2x8x1xf32> -> vector<2x8x1xf32>
    %238 = vector.broadcast %237 : vector<2x8x1xf32> to vector<2x8x8xf32>
    %239 = arith.mulf %234, %238 : vector<2x8x8xf32>
    %240 = arith.truncf %239 : vector<2x8x8xf32> to vector<2x8x8xbf16>
    "tpu.trace_start"() <{level = 10 : i32, message = "bqk,bkd->bqd"}> : () -> ()
    %cst_102 = arith.constant dense<0.000000e+00> : vector<2x8x8xf32>
    %241 = tpu.matmul %240, %224, %cst_102 {dimension_numbers = #tpu.dot_dimension_numbers<[2], [1], [1], [2], [0, 0, 0, 1, 1, 2], [0], [0]>} : vector<2x8x8xbf16>, vector<2x8x8xbf16>, vector<2x8x8xf32> -> vector<2x8x8xf32>
    "tpu.trace_stop"() : () -> ()
    %242 = vector.shape_cast %241 : vector<2x8x8xf32> to vector<16x8xf32>
    %243 = arith.truncf %242 : vector<16x8xf32> to vector<16x8xbf16>
    %244 = vector.extract_strided_slice %26 {offsets = [0, 0, 0], sizes = [1, 8, 32], strides = [1, 1, 1]} : vector<4x8x32xbf16> to vector<1x8x32xbf16>
    %245 = vector.shape_cast %244 : vector<1x8x32xbf16> to vector<8x32xbf16>
    %cst_103 = arith.constant dense<0.000000e+00> : vector<16x32xf32>
    %246 = tpu.matmul %243, %245, %cst_103 {dimension_numbers = #tpu.dot_dimension_numbers<[1], [0], [0], [1], [0, 0, 1, 1], [], []>} : vector<16x8xbf16>, vector<8x32xbf16>, vector<16x32xf32> -> vector<16x32xf32>
    %247 = arith.addf %221, %246 : vector<16x32xf32>
    %248 = vector.extract_strided_slice %216 {offsets = [0, 0, 8], sizes = [2, 8, 8], strides = [1, 1, 1]} : vector<2x8x32xbf16> to vector<2x8x8xbf16>
    %249 = vector.extract_strided_slice %218 {offsets = [0, 0, 8], sizes = [2, 8, 8], strides = [1, 1, 1]} : vector<2x8x32xbf16> to vector<2x8x8xbf16>
    %250 = vector.extract_strided_slice %220 {offsets = [0, 0, 8], sizes = [2, 8, 8], strides = [1, 1, 1]} : vector<2x8x32xbf16> to vector<2x8x8xbf16>
    "tpu.trace_start"() <{level = 10 : i32, message = "bqd,bkd->bqk"}> : () -> ()
    %cst_104 = arith.constant dense<0.000000e+00> : vector<2x8x8xf32>
    %251 = tpu.matmul %248, %249, %cst_104 {dimension_numbers = #tpu.dot_dimension_numbers<[2], [2], [1], [1], [0, 0, 0, 1, 1, 1], [0], [0]>} : vector<2x8x8xbf16>, vector<2x8x8xbf16>, vector<2x8x8xf32> -> vector<2x8x8xf32>
    %cst_105 = arith.constant -1.000000e+04 : f32
    "tpu.trace_stop"() : () -> ()
    %252 = vector.shape_cast %12 : vector<2x1x8xi1> to vector<2x1x8xi1>
    %253 = vector.broadcast %252 : vector<2x1x8xi1> to vector<2x8x8xi1>
    %254 = vector.broadcast %cst_105 : f32 to vector<2x8x8xf32>
    %255 = arith.select %253, %251, %254 : vector<2x8x8xi1>, vector<2x8x8xf32>
    %cst_106 = arith.constant dense<0xFF800000> : vector<2x8xf32>
    %256 = vector.multi_reduction <maximumf>, %255, %cst_106 [2] : vector<2x8x8xf32> to vector<2x8xf32>
    %257 = vector.shape_cast %256 : vector<2x8xf32> to vector<2x8x1xf32>
    %258 = vector.broadcast %257 : vector<2x8x1xf32> to vector<2x8x8xf32>
    %259 = arith.subf %255, %258 : vector<2x8x8xf32>
    %260 = math.exp %259 : vector<2x8x8xf32>
    %cst_107 = arith.constant dense<0.000000e+00> : vector<2x8xf32>
    %261 = vector.multi_reduction <add>, %260, %cst_107 [2] : vector<2x8x8xf32> to vector<2x8xf32>
    %262 = vector.shape_cast %261 : vector<2x8xf32> to vector<2x8x1xf32>
    %263 = tpu.reciprocal %262 {approx = true} : vector<2x8x1xf32> -> vector<2x8x1xf32>
    %264 = vector.broadcast %263 : vector<2x8x1xf32> to vector<2x8x8xf32>
    %265 = arith.mulf %260, %264 : vector<2x8x8xf32>
    %266 = arith.truncf %265 : vector<2x8x8xf32> to vector<2x8x8xbf16>
    "tpu.trace_start"() <{level = 10 : i32, message = "bqk,bkd->bqd"}> : () -> ()
    %cst_108 = arith.constant dense<0.000000e+00> : vector<2x8x8xf32>
    %267 = tpu.matmul %266, %250, %cst_108 {dimension_numbers = #tpu.dot_dimension_numbers<[2], [1], [1], [2], [0, 0, 0, 1, 1, 2], [0], [0]>} : vector<2x8x8xbf16>, vector<2x8x8xbf16>, vector<2x8x8xf32> -> vector<2x8x8xf32>
    "tpu.trace_stop"() : () -> ()
    %268 = vector.shape_cast %267 : vector<2x8x8xf32> to vector<16x8xf32>
    %269 = arith.truncf %268 : vector<16x8xf32> to vector<16x8xbf16>
    %270 = vector.extract_strided_slice %26 {offsets = [1, 0, 0], sizes = [1, 8, 32], strides = [1, 1, 1]} : vector<4x8x32xbf16> to vector<1x8x32xbf16>
    %271 = vector.shape_cast %270 : vector<1x8x32xbf16> to vector<8x32xbf16>
    %cst_109 = arith.constant dense<0.000000e+00> : vector<16x32xf32>
    %272 = tpu.matmul %269, %271, %cst_109 {dimension_numbers = #tpu.dot_dimension_numbers<[1], [0], [0], [1], [0, 0, 1, 1], [], []>} : vector<16x8xbf16>, vector<8x32xbf16>, vector<16x32xf32> -> vector<16x32xf32>
    %273 = arith.addf %247, %272 : vector<16x32xf32>
    %274 = vector.extract_strided_slice %216 {offsets = [0, 0, 16], sizes = [2, 8, 8], strides = [1, 1, 1]} : vector<2x8x32xbf16> to vector<2x8x8xbf16>
    %275 = vector.extract_strided_slice %218 {offsets = [0, 0, 16], sizes = [2, 8, 8], strides = [1, 1, 1]} : vector<2x8x32xbf16> to vector<2x8x8xbf16>
    %276 = vector.extract_strided_slice %220 {offsets = [0, 0, 16], sizes = [2, 8, 8], strides = [1, 1, 1]} : vector<2x8x32xbf16> to vector<2x8x8xbf16>
    "tpu.trace_start"() <{level = 10 : i32, message = "bqd,bkd->bqk"}> : () -> ()
    %cst_110 = arith.constant dense<0.000000e+00> : vector<2x8x8xf32>
    %277 = tpu.matmul %274, %275, %cst_110 {dimension_numbers = #tpu.dot_dimension_numbers<[2], [2], [1], [1], [0, 0, 0, 1, 1, 1], [0], [0]>} : vector<2x8x8xbf16>, vector<2x8x8xbf16>, vector<2x8x8xf32> -> vector<2x8x8xf32>
    %cst_111 = arith.constant -1.000000e+04 : f32
    "tpu.trace_stop"() : () -> ()
    %278 = vector.shape_cast %12 : vector<2x1x8xi1> to vector<2x1x8xi1>
    %279 = vector.broadcast %278 : vector<2x1x8xi1> to vector<2x8x8xi1>
    %280 = vector.broadcast %cst_111 : f32 to vector<2x8x8xf32>
    %281 = arith.select %279, %277, %280 : vector<2x8x8xi1>, vector<2x8x8xf32>
    %cst_112 = arith.constant dense<0xFF800000> : vector<2x8xf32>
    %282 = vector.multi_reduction <maximumf>, %281, %cst_112 [2] : vector<2x8x8xf32> to vector<2x8xf32>
    %283 = vector.shape_cast %282 : vector<2x8xf32> to vector<2x8x1xf32>
    %284 = vector.broadcast %283 : vector<2x8x1xf32> to vector<2x8x8xf32>
    %285 = arith.subf %281, %284 : vector<2x8x8xf32>
    %286 = math.exp %285 : vector<2x8x8xf32>
    %cst_113 = arith.constant dense<0.000000e+00> : vector<2x8xf32>
    %287 = vector.multi_reduction <add>, %286, %cst_113 [2] : vector<2x8x8xf32> to vector<2x8xf32>
    %288 = vector.shape_cast %287 : vector<2x8xf32> to vector<2x8x1xf32>
    %289 = tpu.reciprocal %288 {approx = true} : vector<2x8x1xf32> -> vector<2x8x1xf32>
    %290 = vector.broadcast %289 : vector<2x8x1xf32> to vector<2x8x8xf32>
    %291 = arith.mulf %286, %290 : vector<2x8x8xf32>
    %292 = arith.truncf %291 : vector<2x8x8xf32> to vector<2x8x8xbf16>
    "tpu.trace_start"() <{level = 10 : i32, message = "bqk,bkd->bqd"}> : () -> ()
    %cst_114 = arith.constant dense<0.000000e+00> : vector<2x8x8xf32>
    %293 = tpu.matmul %292, %276, %cst_114 {dimension_numbers = #tpu.dot_dimension_numbers<[2], [1], [1], [2], [0, 0, 0, 1, 1, 2], [0], [0]>} : vector<2x8x8xbf16>, vector<2x8x8xbf16>, vector<2x8x8xf32> -> vector<2x8x8xf32>
    "tpu.trace_stop"() : () -> ()
    %294 = vector.shape_cast %293 : vector<2x8x8xf32> to vector<16x8xf32>
    %295 = arith.truncf %294 : vector<16x8xf32> to vector<16x8xbf16>
    %296 = vector.extract_strided_slice %26 {offsets = [2, 0, 0], sizes = [1, 8, 32], strides = [1, 1, 1]} : vector<4x8x32xbf16> to vector<1x8x32xbf16>
    %297 = vector.shape_cast %296 : vector<1x8x32xbf16> to vector<8x32xbf16>
    %cst_115 = arith.constant dense<0.000000e+00> : vector<16x32xf32>
    %298 = tpu.matmul %295, %297, %cst_115 {dimension_numbers = #tpu.dot_dimension_numbers<[1], [0], [0], [1], [0, 0, 1, 1], [], []>} : vector<16x8xbf16>, vector<8x32xbf16>, vector<16x32xf32> -> vector<16x32xf32>
    %299 = arith.addf %273, %298 : vector<16x32xf32>
    %300 = vector.extract_strided_slice %216 {offsets = [0, 0, 24], sizes = [2, 8, 8], strides = [1, 1, 1]} : vector<2x8x32xbf16> to vector<2x8x8xbf16>
    %301 = vector.extract_strided_slice %218 {offsets = [0, 0, 24], sizes = [2, 8, 8], strides = [1, 1, 1]} : vector<2x8x32xbf16> to vector<2x8x8xbf16>
    %302 = vector.extract_strided_slice %220 {offsets = [0, 0, 24], sizes = [2, 8, 8], strides = [1, 1, 1]} : vector<2x8x32xbf16> to vector<2x8x8xbf16>
    "tpu.trace_start"() <{level = 10 : i32, message = "bqd,bkd->bqk"}> : () -> ()
    %cst_116 = arith.constant dense<0.000000e+00> : vector<2x8x8xf32>
    %303 = tpu.matmul %300, %301, %cst_116 {dimension_numbers = #tpu.dot_dimension_numbers<[2], [2], [1], [1], [0, 0, 0, 1, 1, 1], [0], [0]>} : vector<2x8x8xbf16>, vector<2x8x8xbf16>, vector<2x8x8xf32> -> vector<2x8x8xf32>
    %cst_117 = arith.constant -1.000000e+04 : f32
    "tpu.trace_stop"() : () -> ()
    %304 = vector.shape_cast %12 : vector<2x1x8xi1> to vector<2x1x8xi1>
    %305 = vector.broadcast %304 : vector<2x1x8xi1> to vector<2x8x8xi1>
    %306 = vector.broadcast %cst_117 : f32 to vector<2x8x8xf32>
    %307 = arith.select %305, %303, %306 : vector<2x8x8xi1>, vector<2x8x8xf32>
    %cst_118 = arith.constant dense<0xFF800000> : vector<2x8xf32>
    %308 = vector.multi_reduction <maximumf>, %307, %cst_118 [2] : vector<2x8x8xf32> to vector<2x8xf32>
    %309 = vector.shape_cast %308 : vector<2x8xf32> to vector<2x8x1xf32>
    %310 = vector.broadcast %309 : vector<2x8x1xf32> to vector<2x8x8xf32>
    %311 = arith.subf %307, %310 : vector<2x8x8xf32>
    %312 = math.exp %311 : vector<2x8x8xf32>
    %cst_119 = arith.constant dense<0.000000e+00> : vector<2x8xf32>
    %313 = vector.multi_reduction <add>, %312, %cst_119 [2] : vector<2x8x8xf32> to vector<2x8xf32>
    %314 = vector.shape_cast %313 : vector<2x8xf32> to vector<2x8x1xf32>
    %315 = tpu.reciprocal %314 {approx = true} : vector<2x8x1xf32> -> vector<2x8x1xf32>
    %316 = vector.broadcast %315 : vector<2x8x1xf32> to vector<2x8x8xf32>
    %317 = arith.mulf %312, %316 : vector<2x8x8xf32>
    %318 = arith.truncf %317 : vector<2x8x8xf32> to vector<2x8x8xbf16>
    "tpu.trace_start"() <{level = 10 : i32, message = "bqk,bkd->bqd"}> : () -> ()
    %cst_120 = arith.constant dense<0.000000e+00> : vector<2x8x8xf32>
    %319 = tpu.matmul %318, %302, %cst_120 {dimension_numbers = #tpu.dot_dimension_numbers<[2], [1], [1], [2], [0, 0, 0, 1, 1, 2], [0], [0]>} : vector<2x8x8xbf16>, vector<2x8x8xbf16>, vector<2x8x8xf32> -> vector<2x8x8xf32>
    "tpu.trace_stop"() : () -> ()
    %320 = vector.shape_cast %319 : vector<2x8x8xf32> to vector<16x8xf32>
    %321 = arith.truncf %320 : vector<16x8xf32> to vector<16x8xbf16>
    %322 = vector.extract_strided_slice %26 {offsets = [3, 0, 0], sizes = [1, 8, 32], strides = [1, 1, 1]} : vector<4x8x32xbf16> to vector<1x8x32xbf16>
    %323 = vector.shape_cast %322 : vector<1x8x32xbf16> to vector<8x32xbf16>
    %cst_121 = arith.constant dense<0.000000e+00> : vector<16x32xf32>
    %324 = tpu.matmul %321, %323, %cst_121 {dimension_numbers = #tpu.dot_dimension_numbers<[1], [0], [0], [1], [0, 0, 1, 1], [], []>} : vector<16x8xbf16>, vector<8x32xbf16>, vector<16x32xf32> -> vector<16x32xf32>
    %325 = arith.addf %299, %324 : vector<16x32xf32>
    %326 = vector.broadcast %28 : vector<1x32xf32> to vector<16x32xf32>
    %327 = arith.addf %325, %326 : vector<16x32xf32>
    %328 = arith.addf %327, %192 : vector<16x32xf32>
    %329 = vector.extract_strided_slice %30 {offsets = [1, 0], sizes = [1, 32], strides = [1, 1]} : vector<3x32xf32> to vector<1x32xf32>
    %330 = vector.extract_strided_slice %32 {offsets = [1, 0], sizes = [1, 32], strides = [1, 1]} : vector<3x32xf32> to vector<1x32xf32>
    %cst_122 = arith.constant dense<0.000000e+00> : vector<16xf32>
    %331 = vector.multi_reduction <add>, %328, %cst_122 [1] : vector<16x32xf32> to vector<16xf32>
    %332 = vector.shape_cast %331 : vector<16xf32> to vector<16x1xf32>
    %cst_123 = arith.constant 3.200000e+01 : f32
    %333 = vector.broadcast %cst_123 : f32 to vector<16x1xf32>
    %334 = arith.divf %332, %333 : vector<16x1xf32>
    %335 = vector.broadcast %334 : vector<16x1xf32> to vector<16x32xf32>
    %336 = arith.subf %328, %335 : vector<16x32xf32>
    %337 = arith.mulf %336, %336 : vector<16x32xf32>
    %cst_124 = arith.constant dense<0.000000e+00> : vector<16xf32>
    %338 = vector.multi_reduction <add>, %337, %cst_124 [1] : vector<16x32xf32> to vector<16xf32>
    %339 = vector.shape_cast %338 : vector<16xf32> to vector<16x1xf32>
    %cst_125 = arith.constant 3.200000e+01 : f32
    %340 = vector.broadcast %cst_125 : f32 to vector<16x1xf32>
    %341 = arith.divf %339, %340 : vector<16x1xf32>
    %342 = vector.broadcast %334 : vector<16x1xf32> to vector<16x32xf32>
    %343 = arith.subf %328, %342 : vector<16x32xf32>
    %cst_126 = arith.constant 9.99999996E-13 : f32
    %344 = vector.broadcast %cst_126 : f32 to vector<16x1xf32>
    %345 = arith.addf %341, %344 : vector<16x1xf32>
    %346 = math.rsqrt %345 : vector<16x1xf32>
    %347 = vector.broadcast %346 : vector<16x1xf32> to vector<16x32xf32>
    %348 = arith.mulf %343, %347 : vector<16x32xf32>
    %349 = vector.broadcast %329 : vector<1x32xf32> to vector<16x32xf32>
    %350 = arith.mulf %348, %349 : vector<16x32xf32>
    %351 = vector.broadcast %330 : vector<1x32xf32> to vector<16x32xf32>
    %352 = arith.addf %350, %351 : vector<16x32xf32>
    %353 = arith.truncf %352 : vector<16x32xf32> to vector<16x32xbf16>
    %cst_127 = arith.constant dense<0.000000e+00> : vector<16x64xf32>
    %354 = tpu.matmul %353, %34, %cst_127 {dimension_numbers = #tpu.dot_dimension_numbers<[1], [0], [0], [1], [0, 0, 1, 1], [], []>} : vector<16x32xbf16>, vector<32x64xbf16>, vector<16x64xf32> -> vector<16x64xf32>
    %355 = vector.broadcast %36 : vector<1x64xf32> to vector<16x64xf32>
    %356 = arith.addf %354, %355 : vector<16x64xf32>
    %cst_128 = arith.constant 0.000000e+00 : f32
    %357 = vector.broadcast %cst_128 : f32 to vector<16x64xf32>
    %358 = arith.maximumf %356, %357 : vector<16x64xf32>
    %359 = arith.truncf %358 : vector<16x64xf32> to vector<16x64xbf16>
    %cst_129 = arith.constant dense<0.000000e+00> : vector<16x32xf32>
    %360 = tpu.matmul %359, %38, %cst_129 {dimension_numbers = #tpu.dot_dimension_numbers<[1], [0], [0], [1], [0, 0, 1, 1], [], []>} : vector<16x64xbf16>, vector<64x32xbf16>, vector<16x32xf32> -> vector<16x32xf32>
    %361 = vector.broadcast %40 : vector<1x32xf32> to vector<16x32xf32>
    %362 = arith.addf %360, %361 : vector<16x32xf32>
    %363 = arith.addf %362, %352 : vector<16x32xf32>
    %364 = vector.extract_strided_slice %30 {offsets = [2, 0], sizes = [1, 32], strides = [1, 1]} : vector<3x32xf32> to vector<1x32xf32>
    %365 = vector.extract_strided_slice %32 {offsets = [2, 0], sizes = [1, 32], strides = [1, 1]} : vector<3x32xf32> to vector<1x32xf32>
    %cst_130 = arith.constant dense<0.000000e+00> : vector<16xf32>
    %366 = vector.multi_reduction <add>, %363, %cst_130 [1] : vector<16x32xf32> to vector<16xf32>
    %367 = vector.shape_cast %366 : vector<16xf32> to vector<16x1xf32>
    %cst_131 = arith.constant 3.200000e+01 : f32
    %368 = vector.broadcast %cst_131 : f32 to vector<16x1xf32>
    %369 = arith.divf %367, %368 : vector<16x1xf32>
    %370 = vector.broadcast %369 : vector<16x1xf32> to vector<16x32xf32>
    %371 = arith.subf %363, %370 : vector<16x32xf32>
    %372 = arith.mulf %371, %371 : vector<16x32xf32>
    %cst_132 = arith.constant dense<0.000000e+00> : vector<16xf32>
    %373 = vector.multi_reduction <add>, %372, %cst_132 [1] : vector<16x32xf32> to vector<16xf32>
    %374 = vector.shape_cast %373 : vector<16xf32> to vector<16x1xf32>
    %cst_133 = arith.constant 3.200000e+01 : f32
    %375 = vector.broadcast %cst_133 : f32 to vector<16x1xf32>
    %376 = arith.divf %374, %375 : vector<16x1xf32>
    %377 = vector.broadcast %369 : vector<16x1xf32> to vector<16x32xf32>
    %378 = arith.subf %363, %377 : vector<16x32xf32>
    %cst_134 = arith.constant 9.99999996E-13 : f32
    %379 = vector.broadcast %cst_134 : f32 to vector<16x1xf32>
    %380 = arith.addf %376, %379 : vector<16x1xf32>
    %381 = math.rsqrt %380 : vector<16x1xf32>
    %382 = vector.broadcast %381 : vector<16x1xf32> to vector<16x32xf32>
    %383 = arith.mulf %378, %382 : vector<16x32xf32>
    %384 = vector.broadcast %364 : vector<1x32xf32> to vector<16x32xf32>
    %385 = arith.mulf %383, %384 : vector<16x32xf32>
    %386 = vector.broadcast %365 : vector<1x32xf32> to vector<16x32xf32>
    %387 = arith.addf %385, %386 : vector<16x32xf32>
    %388 = vector.shape_cast %387 : vector<16x32xf32> to vector<2x8x32xf32>
    %c0_135 = arith.constant 0 : index
    %c0_136 = arith.constant 0 : index
    %c0_137 = arith.constant 0 : index
    %389 = vector.load %arg23[%c0_135, %c0_136, %c0_137] : memref<2x8x32xf32, #tpu.memory_space<vmem>>, vector<2x8x32xf32>
    tpu.vector_store %arg23[%c0_135, %c0_136, %c0_137], %388 {strides = array<i32>} : memref<2x8x32xf32, #tpu.memory_space<vmem>>, vector<2x8x32xf32>,
    %c1_i32 = arith.constant 1 : i32
    %390 = arith.cmpi eq, %arg1, %c1_i32 : i32
    %391 = arith.extui %390 : i1 to i32
    %c0_i32_138 = arith.constant 0 : i32
    %392 = arith.cmpi ne, %391, %c0_i32_138 : i32
    scf.if %392 {
      %393 = arith.truncf %387 : vector<16x32xf32> to vector<16x32xbf16>
      %c0_139 = arith.constant 0 : index
      %c0_140 = arith.constant 0 : index
      %394 = vector.load %arg20[%c0_139, %c0_140] : memref<32x128xbf16, #tpu.memory_space<vmem>>, vector<32x128xbf16>
      %cst_141 = arith.constant dense<0.000000e+00> : vector<16x128xf32>
      %395 = tpu.matmul %393, %394, %cst_141 {dimension_numbers = #tpu.dot_dimension_numbers<[1], [0], [0], [1], [0, 0, 1, 1], [], []>} : vector<16x32xbf16>, vector<32x128xbf16>, vector<16x128xf32> -> vector<16x128xf32>
      %c0_142 = arith.constant 0 : index
      %c0_143 = arith.constant 0 : index
      %396 = vector.load %arg21[%c0_142, %c0_143] : memref<1x128xf32, #tpu.memory_space<vmem>>, vector<1x128xf32>
      %397 = vector.broadcast %396 : vector<1x128xf32> to vector<16x128xf32>
      %398 = arith.addf %395, %397 : vector<16x128xf32>
      %399 = vector.shape_cast %398 : vector<16x128xf32> to vector<2x8x128xf32>
      %c0_144 = arith.constant 0 : index
      %c0_145 = arith.constant 0 : index
      %c0_146 = arith.constant 0 : index
      %400 = vector.load %arg22[%c0_144, %c0_145, %c0_146] : memref<2x8x128xf32, #tpu.memory_space<vmem>>, vector<2x8x128xf32>
      tpu.vector_store %arg22[%c0_144, %c0_145, %c0_146], %399 {strides = array<i32>} : memref<2x8x128xf32, #tpu.memory_space<vmem>>, vector<2x8x128xf32>,
    } else {
    }
    return
  }
  func.func @transform_0(%arg0: i32, %arg1: i32) -> (i32, i32, i32) {
    %c0_i32 = arith.constant 0 : i32
    %c0_i32_0 = arith.constant 0 : i32
    %c0_i32_1 = arith.constant 0 : i32
    return %arg0, %c0_i32, %c0_i32_0 : i32, i32, i32
  }
  func.func @transform_1(%arg0: i32, %arg1: i32) -> (i32, i32, i32) {
    %c0_i32 = arith.constant 0 : i32
    %c0_i32_0 = arith.constant 0 : i32
    %c0_i32_1 = arith.constant 0 : i32
    return %arg0, %c0_i32, %c0_i32_0 : i32, i32, i32
  }
  func.func @transform_2(%arg0: i32, %arg1: i32) -> (i32, i32, i32) {
    %c0_i32 = arith.constant 0 : i32
    %c0_i32_0 = arith.constant 0 : i32
    %c0_i32_1 = arith.constant 0 : i32
    return %arg0, %c0_i32, %c0_i32_0 : i32, i32, i32
  }
  func.func @transform_3(%arg0: i32, %arg1: i32) -> (i32, i32, i32) {
    %c0_i32 = arith.constant 0 : i32
    %c0_i32_0 = arith.constant 0 : i32
    %c0_i32_1 = arith.constant 0 : i32
    return %arg0, %c0_i32, %c0_i32_0 : i32, i32, i32
  }
  func.func @transform_4(%arg0: i32, %arg1: i32) -> (i32, i32, i32, i32) {
    %c0_i32 = arith.constant 0 : i32
    %c0_i32_0 = arith.constant 0 : i32
    %c0_i32_1 = arith.constant 0 : i32
    %c0_i32_2 = arith.constant 0 : i32
    return %arg1, %c0_i32, %c0_i32_0, %c0_i32_1 : i32, i32, i32, i32
  }
  func.func @transform_5(%arg0: i32, %arg1: i32) -> (i32, i32, i32) {
    %c0_i32 = arith.constant 0 : i32
    %c0_i32_0 = arith.constant 0 : i32
    %c0_i32_1 = arith.constant 0 : i32
    return %arg1, %c0_i32, %c0_i32_0 : i32, i32, i32
  }
  func.func @transform_6(%arg0: i32, %arg1: i32) -> (i32, i32, i32, i32) {
    %c0_i32 = arith.constant 0 : i32
    %c0_i32_0 = arith.constant 0 : i32
    %c0_i32_1 = arith.constant 0 : i32
    %c0_i32_2 = arith.constant 0 : i32
    return %arg1, %c0_i32, %c0_i32_0, %c0_i32_1 : i32, i32, i32, i32
  }
  func.func @transform_7(%arg0: i32, %arg1: i32) -> (i32, i32, i32) {
    %c0_i32 = arith.constant 0 : i32
    %c0_i32_0 = arith.constant 0 : i32
    %c0_i32_1 = arith.constant 0 : i32
    return %arg1, %c0_i32, %c0_i32_0 : i32, i32, i32
  }
  func.func @transform_8(%arg0: i32, %arg1: i32) -> (i32, i32, i32, i32) {
    %c0_i32 = arith.constant 0 : i32
    %c0_i32_0 = arith.constant 0 : i32
    %c0_i32_1 = arith.constant 0 : i32
    %c0_i32_2 = arith.constant 0 : i32
    return %arg1, %c0_i32, %c0_i32_0, %c0_i32_1 : i32, i32, i32, i32
  }
  func.func @transform_9(%arg0: i32, %arg1: i32) -> (i32, i32, i32) {
    %c0_i32 = arith.constant 0 : i32
    %c0_i32_0 = arith.constant 0 : i32
    %c0_i32_1 = arith.constant 0 : i32
    return %arg1, %c0_i32, %c0_i32_0 : i32, i32, i32
  }
  func.func @transform_10(%arg0: i32, %arg1: i32) -> (i32, i32, i32, i32) {
    %c0_i32 = arith.constant 0 : i32
    %c0_i32_0 = arith.constant 0 : i32
    %c0_i32_1 = arith.constant 0 : i32
    %c0_i32_2 = arith.constant 0 : i32
    return %arg1, %c0_i32, %c0_i32_0, %c0_i32_1 : i32, i32, i32, i32
  }
  func.func @transform_11(%arg0: i32, %arg1: i32) -> (i32, i32, i32) {
    %c0_i32 = arith.constant 0 : i32
    %c0_i32_0 = arith.constant 0 : i32
    %c0_i32_1 = arith.constant 0 : i32
    return %arg1, %c0_i32, %c0_i32_0 : i32, i32, i32
  }
  func.func @transform_12(%arg0: i32, %arg1: i32) -> (i32, i32, i32) {
    %c0_i32 = arith.constant 0 : i32
    %c0_i32_0 = arith.constant 0 : i32
    %c0_i32_1 = arith.constant 0 : i32
    return %arg1, %c0_i32, %c0_i32_0 : i32, i32, i32
  }
  func.func @transform_13(%arg0: i32, %arg1: i32) -> (i32, i32, i32) {
    %c0_i32 = arith.constant 0 : i32
    %c0_i32_0 = arith.constant 0 : i32
    %c0_i32_1 = arith.constant 0 : i32
    return %arg1, %c0_i32, %c0_i32_0 : i32, i32, i32
  }
  func.func @transform_14(%arg0: i32, %arg1: i32) -> (i32, i32, i32) {
    %c0_i32 = arith.constant 0 : i32
    %c0_i32_0 = arith.constant 0 : i32
    %c0_i32_1 = arith.constant 0 : i32
    return %arg1, %c0_i32, %c0_i32_0 : i32, i32, i32
  }
  func.func @transform_15(%arg0: i32, %arg1: i32) -> (i32, i32, i32) {
    %c0_i32 = arith.constant 0 : i32
    %c0_i32_0 = arith.constant 0 : i32
    %c0_i32_1 = arith.constant 0 : i32
    return %arg1, %c0_i32, %c0_i32_0 : i32, i32, i32
  }
  func.func @transform_16(%arg0: i32, %arg1: i32) -> (i32, i32, i32) {
    %c0_i32 = arith.constant 0 : i32
    %c0_i32_0 = arith.constant 0 : i32
    %c0_i32_1 = arith.constant 0 : i32
    return %arg1, %c0_i32, %c0_i32_0 : i32, i32, i32
  }
  func.func @transform_17(%arg0: i32, %arg1: i32) -> (i32, i32, i32) {
    %c0_i32 = arith.constant 0 : i32
    %c0_i32_0 = arith.constant 0 : i32
    %c0_i32_1 = arith.constant 0 : i32
    return %arg1, %c0_i32, %c0_i32_0 : i32, i32, i32
  }
  func.func @transform_18(%arg0: i32, %arg1: i32) -> (i32, i32) {
    %c0_i32 = arith.constant 0 : i32
    %c0_i32_0 = arith.constant 0 : i32
    %c0_i32_1 = arith.constant 0 : i32
    return %c0_i32, %c0_i32_0 : i32, i32
  }
  func.func @transform_19(%arg0: i32, %arg1: i32) -> (i32, i32) {
    %c0_i32 = arith.constant 0 : i32
    %c0_i32_0 = arith.constant 0 : i32
    %c0_i32_1 = arith.constant 0 : i32
    return %c0_i32, %c0_i32_0 : i32, i32
  }
  func.func @transform_20(%arg0: i32, %arg1: i32) -> (i32, i32, i32) {
    %c0_i32 = arith.constant 0 : i32
    %c0_i32_0 = arith.constant 0 : i32
    %c0_i32_1 = arith.constant 0 : i32
    return %arg0, %c0_i32, %c0_i32_0 : i32, i32, i32
  }
}

</mosaic_0001>

<llo_original>
// kernel: tpu_custom_call.1
$region0: #{tpu_custom_call.1}
  #allocation0 [shape = 'u32[]', space=smem, size = 0x4, offset = 0x4, fixed_abs, tag = 'smem constant byte address 0x4 - core index']
  #allocation1 [shape = 'u32[72,128]{1,0:T(1,128)}', space=vmem, size = 0x9000, scoped, tag = 'internal scratch']
  #allocation2 [shape = 'f32[2,8,32]{2,1,0:T(8,128)}', space=vmem, size = 0x2000, scoped, tag = 'scratch operand']
  %s0 = inlined_call_operand.hbm [shape: f32[2,8,32], index: 0, kind: input, shape index: {}]
  %s1 = inlined_call_operand.hbm [shape: f32[2,8,32], index: 1, kind: input, shape index: {}]
  %s2 = inlined_call_operand.hbm [shape: f32[2,8,8], index: 2, kind: input, shape index: {}]
  %s3 = inlined_call_operand.vmem [shape: f32[2,1,8], index: 3, kind: input, shape index: {}]
  %s4 = inlined_call_operand.vmem [shape: bf16[2,3,32,32], index: 4, kind: input, shape index: {}]
  %s5 = inlined_call_operand.vmem [shape: f32[2,3,32], index: 5, kind: input, shape index: {}]
  %s6 = inlined_call_operand.hbm [shape: bf16[2,4,8,32], index: 6, kind: input, shape index: {}]
  %s7 = inlined_call_operand.vmem [shape: f32[2,1,32], index: 7, kind: input, shape index: {}]
  %s8 = inlined_call_operand.hbm [shape: bf16[2,3,32,32], index: 8, kind: input, shape index: {}]
  %s9 = inlined_call_operand.vmem [shape: f32[2,3,32], index: 9, kind: input, shape index: {}]
  %s10 = inlined_call_operand.hbm [shape: bf16[2,4,8,32], index: 10, kind: input, shape index: {}]
  %s11 = inlined_call_operand.vmem [shape: f32[2,1,32], index: 11, kind: input, shape index: {}]
  %s12 = inlined_call_operand.vmem [shape: f32[2,3,32], index: 12, kind: input, shape index: {}]
  %s13 = inlined_call_operand.vmem [shape: f32[2,3,32], index: 13, kind: input, shape index: {}]
  %s14 = inlined_call_operand.hbm [shape: bf16[2,32,64], index: 14, kind: input, shape index: {}]
  %s15 = inlined_call_operand.vmem [shape: f32[2,1,64], index: 15, kind: input, shape index: {}]
  %s16 = inlined_call_operand.vmem [shape: bf16[2,64,32], index: 16, kind: input, shape index: {}]
  %s17 = inlined_call_operand.vmem [shape: f32[2,1,32], index: 17, kind: input, shape index: {}]
  %s18 = inlined_call_operand.hbm [shape: bf16[32,128], index: 18, kind: input, shape index: {}]
  %s19 = inlined_call_operand.vmem [shape: f32[1,128], index: 19, kind: input, shape index: {}]
  %s20 = inlined_call_operand.hbm [shape: f32[2,8,128], index: 20, kind: output, shape index: {}]
  %s21 = sld [smem:[#allocation0]]
  $region153: #{tpu_custom_call.1} parent=0
    _
  %s23 = ssub.s32 1, %s21
  %s24 = scalar_select 0, %s23, %s21
  $region1: #{tpu_custom_call.1} parent=0
    #allocation3 [shape = 'u8[8192]{0}', space=vmem, size = 0x2000, scoped, tag = 'input window, operand 0, single buffered']
    #allocation4 [shape = 's32[2]{0}', space=sflag, size = 0x8, scoped, tag = 'scoped memory for tpu_custom_call.1']
    #allocation5 [shape = 's32[2]{0}', space=sflag, size = 0x8, scoped, tag = 'scoped memory for tpu_custom_call.1']
    #allocation6 [shape = 'u8[8192]{0}', space=vmem, size = 0x2000, scoped, tag = 'input window, operand 1, single buffered']
    #allocation7 [shape = 's32[1]{0}', space=sflag, size = 0x4, scoped, tag = 'scoped memory for tpu_custom_call.1']
    #allocation8 [shape = 'u8[8192]{0}', space=vmem, size = 0x2000, scoped, tag = 'input window, operand 2, single buffered']
    #allocation9 [shape = 'u8[16384]{0}', space=vmem, size = 0x4000, scoped, tag = 'input window, operand 6']
    #allocation10 [shape = 's32[2]{0}', space=sflag, size = 0x8, scoped, tag = 'scoped memory for tpu_custom_call.1']
    #allocation11 [shape = 'u8[49152]{0}', space=vmem, size = 0xc000, scoped, tag = 'input window, operand 8']
    #allocation12 [shape = 'u8[16384]{0}', space=vmem, size = 0x4000, scoped, tag = 'input window, operand 10']
    #allocation13 [shape = 's32[2]{0}', space=sflag, size = 0x8, scoped, tag = 'scoped memory for tpu_custom_call.1']
    #allocation14 [shape = 'u8[16384]{0}', space=vmem, size = 0x4000, scoped, tag = 'input window, operand 14']
    #allocation15 [shape = 'u8[8192]{0}', space=vmem, size = 0x2000, scoped, tag = 'input window, operand 18, single buffered']
    #allocation16 [shape = 's32[1]{0}', space=sflag, size = 0x4, scoped, tag = 'scoped memory for tpu_custom_call.1']
    #allocation17 [shape = 'u8[8192]{0}', space=vmem, size = 0x2000, scoped, tag = 'output window, operand 0, single buffered']
    %25 = vsyncpa [#allocation4], 0
    %26 = vsyncpa [#allocation7], 0
    %27 = vsyncpa [#allocation10], 0
    %s28 = scalar_lea.sflag [#allocation10], 1
    %29 = vsyncpa %s28, 0
    %30 = vsyncpa [#allocation13], 0
    %s31 = scalar_lea.sflag [#allocation13], 1
    %32 = vsyncpa %s31, 0
    %33 = vsyncpa [#allocation16], 0
    %34 = vsyncpa [#allocation5], 0
    loop: start=0, step=1, limit=4
    $region2: #{tpu_custom_call.1} parent=1 // loop_pre_header
      _
    $region3: #{tpu_custom_call.1} parent=1 // loop_header
      %s36 = sphi 0, %s40
      %p37 = scmp.ge.s32.totalorder %s36, 4
      %s43 = sphi 0, %s55
      %s44 = sphi 0, %s51
      %s45 = sphi 0, %s43
      %s46 = sphi 0, %s44
      %s47 = sphi 0, %s45
      %s48 = sphi 0, %s46
      %s58 = sphi 0, %s60
      %s61 = sphi 0, %s58
      %s62 = sphi 0, %s61
      %s78 = sphi 0, %s62
      %s84 = sphi 0, %s86
      %s87 = sphi 0, %s84
      %s88 = sphi 0, %s87
      %s104 = sphi 0, %s88
      %s110 = sphi 0, %s112
      %s113 = sphi 0, %s110
      %s114 = sphi 0, %s113
      %s130 = sphi 0, %s114
      %s136 = sphi 0, %s138
      %s139 = sphi 0, %s136
      %s140 = sphi 0, %s139
      %s156 = sphi 0, %s140
      %s162 = sphi 0, %s164
      %s165 = sphi 0, %s162
      %s166 = sphi 0, %s165
      %s182 = sphi 0, %s166
      %s188 = sphi 0, %s190
      %s191 = sphi 0, %s188
      %s192 = sphi 0, %s191
      %s208 = sphi 0, %s192
      %s214 = sphi 0, %s216
      %s217 = sphi 0, %s214
      %s218 = sphi 0, %s217
      %s234 = sphi 0, %s218
      %s240 = sphi 0, %s242
      %s243 = sphi 0, %s240
      %s244 = sphi 0, %s243
      %s260 = sphi 0, %s244
      %s266 = sphi 0, %s268
      %s269 = sphi 0, %s266
      %s270 = sphi 0, %s269
      %s286 = sphi 0, %s270
      %s292 = sphi 0, %s294
      %s295 = sphi 0, %s292
      %s296 = sphi 0, %s295
      %s312 = sphi 0, %s296
      %s318 = sphi 0, %s320
      %s321 = sphi 0, %s318
      %s322 = sphi 0, %s321
      %s338 = sphi 0, %s322
      %s344 = sphi 0, %s346
      %s347 = sphi 0, %s344
      %s348 = sphi 0, %s347
      %s364 = sphi 0, %s348
      %s370 = sphi 0, %s372
      %s373 = sphi 0, %s370
      %s374 = sphi 0, %s373
      %s390 = sphi 0, %s374
      %s396 = sphi 0, %s398
      %s399 = sphi 0, %s396
      %s400 = sphi 0, %s399
      %s416 = sphi 0, %s400
      %s422 = sphi 0, %s424
      %s425 = sphi 0, %s422
      %s426 = sphi 0, %s425
      %s442 = sphi 0, %s426
      %s448 = sphi 0, %s450
      %s451 = sphi 0, %s448
      %s452 = sphi 0, %s451
      %s468 = sphi 0, %s452
      %s474 = sphi 0, %s476
      %s477 = sphi 0, %s474
      %s478 = sphi 0, %s477
      %s494 = sphi 0, %s478
      %s500 = sphi 0, %s502
      %s503 = sphi 0, %s500
      %s504 = sphi 0, %s503
      %s520 = sphi 0, %s504
      %s524 = sphi 0, %s524
      %s526 = sphi 0, %s524
      %s527 = sphi 0, %s526
      %s541 = sphi 0, %s527
      %s545 = sphi 0, %s545
      %s547 = sphi 0, %s545
      %s548 = sphi 0, %s547
      %s562 = sphi 0, %s548
      %s568 = sphi 0, %s570
      %s571 = sphi 0, %s568
      %s572 = sphi 0, %s571
      %s588 = sphi 0, %s572
    $region4: #{tpu_custom_call.1} parent=1 // loop_header_branch
      %39 = sbr.rel (%p37) target = $region8
    $region5: #{tpu_custom_call.1} parent=1 // loop_body
      %s41 = ssub.s32 %s36, 1
      %s42 = ssub.s32 %s36, 2
      %s49 = sadd.s32 1, %s44
      %p50 = scmp.ge.s32.totalorder %s49, 2
      %s51 = scalar_select %p50, 0, %s49
      %s52 = sadd.s32 1, %s43
      %s53 = scalar_select %p50, %s52, %s43
      %p54 = scmp.ge.s32.totalorder %s53, 1
      %s55 = scalar_select %p54, 0, %s53
      %s56 = ssub.s32 %s43, %s55
      %p57 = scmp.eq.s32.totalorder %s56, 0
      %s59 = sadd.s32 %s58, 1
      %s60 = scalar_select %p57, %s58, %s59
      %p63 = pneg %p57
      %p64 = scmp.eq.s32.totalorder %s36, 1
      %p65 = por %p63, %p64
      %p66 = scmp.ne.s32.totalorder %s58, %s61
      %p67 = scmp.eq.s32.totalorder %s36, 0
      %p68 = por %p66, %p67
      %p69 = scmp.ne.s32.totalorder %s58, %s61
      %p70 = scmp.eq.s32.totalorder %s41, 1
      %p71 = por %p69, %p70
      %p72 = scmp.ne.s32.totalorder %s61, %s62
      %p73 = scmp.eq.s32.totalorder %s41, 0
      %p74 = por %p72, %p73
      %p75 = scmp.ne.s32.totalorder %s61, %s62
      %p76 = scmp.eq.s32.totalorder %s42, 1
      %p77 = por %p75, %p76
      %p79 = scmp.ne.s32.totalorder %s62, %s78
      %p80 = scmp.eq.s32.totalorder %s42, 0
      %p81 = por %p79, %p80
      %s82 = ssub.s32 %s43, %s55
      %p83 = scmp.eq.s32.totalorder %s82, 0
      %s85 = sadd.s32 %s84, 1
      %s86 = scalar_select %p83, %s84, %s85
      %p89 = pneg %p83
      %p90 = scmp.eq.s32.totalorder %s36, 1
      %p91 = por %p89, %p90
      %p92 = scmp.ne.s32.totalorder %s84, %s87
      %p93 = scmp.eq.s32.totalorder %s36, 0
      %p94 = por %p92, %p93
      %p95 = scmp.ne.s32.totalorder %s84, %s87
      %p96 = scmp.eq.s32.totalorder %s41, 1
      %p97 = por %p95, %p96
      %p98 = scmp.ne.s32.totalorder %s87, %s88
      %p99 = scmp.eq.s32.totalorder %s41, 0
      %p100 = por %p98, %p99
      %p101 = scmp.ne.s32.totalorder %s87, %s88
      %p102 = scmp.eq.s32.totalorder %s42, 1
      %p103 = por %p101, %p102
      %p105 = scmp.ne.s32.totalorder %s88, %s104
      %p106 = scmp.eq.s32.totalorder %s42, 0
      %p107 = por %p105, %p106
      %s108 = ssub.s32 %s43, %s55
      %p109 = scmp.eq.s32.totalorder %s108, 0
      %s111 = sadd.s32 %s110, 1
      %s112 = scalar_select %p109, %s110, %s111
      %p115 = pneg %p109
      %p116 = scmp.eq.s32.totalorder %s36, 1
      %p117 = por %p115, %p116
      %p118 = scmp.ne.s32.totalorder %s110, %s113
      %p119 = scmp.eq.s32.totalorder %s36, 0
      %p120 = por %p118, %p119
      %p121 = scmp.ne.s32.totalorder %s110, %s113
      %p122 = scmp.eq.s32.totalorder %s41, 1
      %p123 = por %p121, %p122
      %p124 = scmp.ne.s32.totalorder %s113, %s114
      %p125 = scmp.eq.s32.totalorder %s41, 0
      %p126 = por %p124, %p125
      %p127 = scmp.ne.s32.totalorder %s113, %s114
      %p128 = scmp.eq.s32.totalorder %s42, 1
      %p129 = por %p127, %p128
      %p131 = scmp.ne.s32.totalorder %s114, %s130
      %p132 = scmp.eq.s32.totalorder %s42, 0
      %p133 = por %p131, %p132
      %s134 = ssub.s32 %s43, %s55
      %p135 = scmp.eq.s32.totalorder %s134, 0
      %s137 = sadd.s32 %s136, 1
      %s138 = scalar_select %p135, %s136, %s137
      %p141 = pneg %p135
      %p142 = scmp.eq.s32.totalorder %s36, 1
      %p143 = por %p141, %p142
      %p144 = scmp.ne.s32.totalorder %s136, %s139
      %p145 = scmp.eq.s32.totalorder %s36, 0
      %p146 = por %p144, %p145
      %p147 = scmp.ne.s32.totalorder %s136, %s139
      %p148 = scmp.eq.s32.totalorder %s41, 1
      %p149 = por %p147, %p148
      %p150 = scmp.ne.s32.totalorder %s139, %s140
      %p151 = scmp.eq.s32.totalorder %s41, 0
      %p152 = por %p150, %p151
      %p153 = scmp.ne.s32.totalorder %s139, %s140
      %p154 = scmp.eq.s32.totalorder %s42, 1
      %p155 = por %p153, %p154
      %p157 = scmp.ne.s32.totalorder %s140, %s156
      %p158 = scmp.eq.s32.totalorder %s42, 0
      %p159 = por %p157, %p158
      %s160 = ssub.s32 %s44, %s51
      %p161 = scmp.eq.s32.totalorder %s160, 0
      %s163 = sadd.s32 %s162, 1
      %s164 = scalar_select %p161, %s162, %s163
      %p167 = pneg %p161
      %p168 = scmp.eq.s32.totalorder %s36, 1
      %p169 = por %p167, %p168
      %p170 = scmp.ne.s32.totalorder %s162, %s165
      %p171 = scmp.eq.s32.totalorder %s36, 0
      %p172 = por %p170, %p171
      %p173 = scmp.ne.s32.totalorder %s162, %s165
      %p174 = scmp.eq.s32.totalorder %s41, 1
      %p175 = por %p173, %p174
      %p176 = scmp.ne.s32.totalorder %s165, %s166
      %p177 = scmp.eq.s32.totalorder %s41, 0
      %p178 = por %p176, %p177
      %p179 = scmp.ne.s32.totalorder %s165, %s166
      %p180 = scmp.eq.s32.totalorder %s42, 1
      %p181 = por %p179, %p180
      %p183 = scmp.ne.s32.totalorder %s166, %s182
      %p184 = scmp.eq.s32.totalorder %s42, 0
      %p185 = por %p183, %p184
      %s186 = ssub.s32 %s44, %s51
      %p187 = scmp.eq.s32.totalorder %s186, 0
      %s189 = sadd.s32 %s188, 1
      %s190 = scalar_select %p187, %s188, %s189
      %p193 = pneg %p187
      %p194 = scmp.eq.s32.totalorder %s36, 1
      %p195 = por %p193, %p194
      %p196 = scmp.ne.s32.totalorder %s188, %s191
      %p197 = scmp.eq.s32.totalorder %s36, 0
      %p198 = por %p196, %p197
      %p199 = scmp.ne.s32.totalorder %s188, %s191
      %p200 = scmp.eq.s32.totalorder %s41, 1
      %p201 = por %p199, %p200
      %p202 = scmp.ne.s32.totalorder %s191, %s192
      %p203 = scmp.eq.s32.totalorder %s41, 0
      %p204 = por %p202, %p203
      %p205 = scmp.ne.s32.totalorder %s191, %s192
      %p206 = scmp.eq.s32.totalorder %s42, 1
      %p207 = por %p205, %p206
      %p209 = scmp.ne.s32.totalorder %s192, %s208
      %p210 = scmp.eq.s32.totalorder %s42, 0
      %p211 = por %p209, %p210
      %s212 = ssub.s32 %s44, %s51
      %p213 = scmp.eq.s32.totalorder %s212, 0
      %s215 = sadd.s32 %s214, 1
      %s216 = scalar_select %p213, %s214, %s215
      %p219 = pneg %p213
      %p220 = scmp.eq.s32.totalorder %s36, 1
      %p221 = por %p219, %p220
      %p222 = scmp.ne.s32.totalorder %s214, %s217
      %p223 = scmp.eq.s32.totalorder %s36, 0
      %p224 = por %p222, %p223
      %p225 = scmp.ne.s32.totalorder %s214, %s217
      %p226 = scmp.eq.s32.totalorder %s41, 1
      %p227 = por %p225, %p226
      %p228 = scmp.ne.s32.totalorder %s217, %s218
      %p229 = scmp.eq.s32.totalorder %s41, 0
      %p230 = por %p228, %p229
      %p231 = scmp.ne.s32.totalorder %s217, %s218
      %p232 = scmp.eq.s32.totalorder %s42, 1
      %p233 = por %p231, %p232
      %p235 = scmp.ne.s32.totalorder %s218, %s234
      %p236 = scmp.eq.s32.totalorder %s42, 0
      %p237 = por %p235, %p236
      %s238 = ssub.s32 %s44, %s51
      %p239 = scmp.eq.s32.totalorder %s238, 0
      %s241 = sadd.s32 %s240, 1
      %s242 = scalar_select %p239, %s240, %s241
      %p245 = pneg %p239
      %p246 = scmp.eq.s32.totalorder %s36, 1
      %p247 = por %p245, %p246
      %p248 = scmp.ne.s32.totalorder %s240, %s243
      %p249 = scmp.eq.s32.totalorder %s36, 0
      %p250 = por %p248, %p249
      %p251 = scmp.ne.s32.totalorder %s240, %s243
      %p252 = scmp.eq.s32.totalorder %s41, 1
      %p253 = por %p251, %p252
      %p254 = scmp.ne.s32.totalorder %s243, %s244
      %p255 = scmp.eq.s32.totalorder %s41, 0
      %p256 = por %p254, %p255
      %p257 = scmp.ne.s32.totalorder %s243, %s244
      %p258 = scmp.eq.s32.totalorder %s42, 1
      %p259 = por %p257, %p258
      %p261 = scmp.ne.s32.totalorder %s244, %s260
      %p262 = scmp.eq.s32.totalorder %s42, 0
      %p263 = por %p261, %p262
      %s264 = ssub.s32 %s44, %s51
      %p265 = scmp.eq.s32.totalorder %s264, 0
      %s267 = sadd.s32 %s266, 1
      %s268 = scalar_select %p265, %s266, %s267
      %p271 = pneg %p265
      %p272 = scmp.eq.s32.totalorder %s36, 1
      %p273 = por %p271, %p272
      %p274 = scmp.ne.s32.totalorder %s266, %s269
      %p275 = scmp.eq.s32.totalorder %s36, 0
      %p276 = por %p274, %p275
      %p277 = scmp.ne.s32.totalorder %s266, %s269
      %p278 = scmp.eq.s32.totalorder %s41, 1
      %p279 = por %p277, %p278
      %p280 = scmp.ne.s32.totalorder %s269, %s270
      %p281 = scmp.eq.s32.totalorder %s41, 0
      %p282 = por %p280, %p281
      %p283 = scmp.ne.s32.totalorder %s269, %s270
      %p284 = scmp.eq.s32.totalorder %s42, 1
      %p285 = por %p283, %p284
      %p287 = scmp.ne.s32.totalorder %s270, %s286
      %p288 = scmp.eq.s32.totalorder %s42, 0
      %p289 = por %p287, %p288
      %s290 = ssub.s32 %s44, %s51
      %p291 = scmp.eq.s32.totalorder %s290, 0
      %s293 = sadd.s32 %s292, 1
      %s294 = scalar_select %p291, %s292, %s293
      %p297 = pneg %p291
      %p298 = scmp.eq.s32.totalorder %s36, 1
      %p299 = por %p297, %p298
      %p300 = scmp.ne.s32.totalorder %s292, %s295
      %p301 = scmp.eq.s32.totalorder %s36, 0
      %p302 = por %p300, %p301
      %p303 = scmp.ne.s32.totalorder %s292, %s295
      %p304 = scmp.eq.s32.totalorder %s41, 1
      %p305 = por %p303, %p304
      %p306 = scmp.ne.s32.totalorder %s295, %s296
      %p307 = scmp.eq.s32.totalorder %s41, 0
      %p308 = por %p306, %p307
      %p309 = scmp.ne.s32.totalorder %s295, %s296
      %p310 = scmp.eq.s32.totalorder %s42, 1
      %p311 = por %p309, %p310
      %p313 = scmp.ne.s32.totalorder %s296, %s312
      %p314 = scmp.eq.s32.totalorder %s42, 0
      %p315 = por %p313, %p314
      %s316 = ssub.s32 %s44, %s51
      %p317 = scmp.eq.s32.totalorder %s316, 0
      %s319 = sadd.s32 %s318, 1
      %s320 = scalar_select %p317, %s318, %s319
      %p323 = pneg %p317
      %p324 = scmp.eq.s32.totalorder %s36, 1
      %p325 = por %p323, %p324
      %p326 = scmp.ne.s32.totalorder %s318, %s321
      %p327 = scmp.eq.s32.totalorder %s36, 0
      %p328 = por %p326, %p327
      %p329 = scmp.ne.s32.totalorder %s318, %s321
      %p330 = scmp.eq.s32.totalorder %s41, 1
      %p331 = por %p329, %p330
      %p332 = scmp.ne.s32.totalorder %s321, %s322
      %p333 = scmp.eq.s32.totalorder %s41, 0
      %p334 = por %p332, %p333
      %p335 = scmp.ne.s32.totalorder %s321, %s322
      %p336 = scmp.eq.s32.totalorder %s42, 1
      %p337 = por %p335, %p336
      %p339 = scmp.ne.s32.totalorder %s322, %s338
      %p340 = scmp.eq.s32.totalorder %s42, 0
      %p341 = por %p339, %p340
      %s342 = ssub.s32 %s44, %s51
      %p343 = scmp.eq.s32.totalorder %s342, 0
      %s345 = sadd.s32 %s344, 1
      %s346 = scalar_select %p343, %s344, %s345
      %p349 = pneg %p343
      %p350 = scmp.eq.s32.totalorder %s36, 1
      %p351 = por %p349, %p350
      %p352 = scmp.ne.s32.totalorder %s344, %s347
      %p353 = scmp.eq.s32.totalorder %s36, 0
      %p354 = por %p352, %p353
      %p355 = scmp.ne.s32.totalorder %s344, %s347
      %p356 = scmp.eq.s32.totalorder %s41, 1
      %p357 = por %p355, %p356
      %p358 = scmp.ne.s32.totalorder %s347, %s348
      %p359 = scmp.eq.s32.totalorder %s41, 0
      %p360 = por %p358, %p359
      %p361 = scmp.ne.s32.totalorder %s347, %s348
      %p362 = scmp.eq.s32.totalorder %s42, 1
      %p363 = por %p361, %p362
      %p365 = scmp.ne.s32.totalorder %s348, %s364
      %p366 = scmp.eq.s32.totalorder %s42, 0
      %p367 = por %p365, %p366
      %s368 = ssub.s32 %s44, %s51
      %p369 = scmp.eq.s32.totalorder %s368, 0
      %s371 = sadd.s32 %s370, 1
      %s372 = scalar_select %p369, %s370, %s371
      %p375 = pneg %p369
      %p376 = scmp.eq.s32.totalorder %s36, 1
      %p377 = por %p375, %p376
      %p378 = scmp.ne.s32.totalorder %s370, %s373
      %p379 = scmp.eq.s32.totalorder %s36, 0
      %p380 = por %p378, %p379
      %p381 = scmp.ne.s32.totalorder %s370, %s373
      %p382 = scmp.eq.s32.totalorder %s41, 1
      %p383 = por %p381, %p382
      %p384 = scmp.ne.s32.totalorder %s373, %s374
      %p385 = scmp.eq.s32.totalorder %s41, 0
      %p386 = por %p384, %p385
      %p387 = scmp.ne.s32.totalorder %s373, %s374
      %p388 = scmp.eq.s32.totalorder %s42, 1
      %p389 = por %p387, %p388
      %p391 = scmp.ne.s32.totalorder %s374, %s390
      %p392 = scmp.eq.s32.totalorder %s42, 0
      %p393 = por %p391, %p392
      %s394 = ssub.s32 %s44, %s51
      %p395 = scmp.eq.s32.totalorder %s394, 0
      %s397 = sadd.s32 %s396, 1
      %s398 = scalar_select %p395, %s396, %s397
      %p401 = pneg %p395
      %p402 = scmp.eq.s32.totalorder %s36, 1
      %p403 = por %p401, %p402
      %p404 = scmp.ne.s32.totalorder %s396, %s399
      %p405 = scmp.eq.s32.totalorder %s36, 0
      %p406 = por %p404, %p405
      %p407 = scmp.ne.s32.totalorder %s396, %s399
      %p408 = scmp.eq.s32.totalorder %s41, 1
      %p409 = por %p407, %p408
      %p410 = scmp.ne.s32.totalorder %s399, %s400
      %p411 = scmp.eq.s32.totalorder %s41, 0
      %p412 = por %p410, %p411
      %p413 = scmp.ne.s32.totalorder %s399, %s400
      %p414 = scmp.eq.s32.totalorder %s42, 1
      %p415 = por %p413, %p414
      %p417 = scmp.ne.s32.totalorder %s400, %s416
      %p418 = scmp.eq.s32.totalorder %s42, 0
      %p419 = por %p417, %p418
      %s420 = ssub.s32 %s44, %s51
      %p421 = scmp.eq.s32.totalorder %s420, 0
      %s423 = sadd.s32 %s422, 1
      %s424 = scalar_select %p421, %s422, %s423
      %p427 = pneg %p421
      %p428 = scmp.eq.s32.totalorder %s36, 1
      %p429 = por %p427, %p428
      %p430 = scmp.ne.s32.totalorder %s422, %s425
      %p431 = scmp.eq.s32.totalorder %s36, 0
      %p432 = por %p430, %p431
      %p433 = scmp.ne.s32.totalorder %s422, %s425
      %p434 = scmp.eq.s32.totalorder %s41, 1
      %p435 = por %p433, %p434
      %p436 = scmp.ne.s32.totalorder %s425, %s426
      %p437 = scmp.eq.s32.totalorder %s41, 0
      %p438 = por %p436, %p437
      %p439 = scmp.ne.s32.totalorder %s425, %s426
      %p440 = scmp.eq.s32.totalorder %s42, 1
      %p441 = por %p439, %p440
      %p443 = scmp.ne.s32.totalorder %s426, %s442
      %p444 = scmp.eq.s32.totalorder %s42, 0
      %p445 = por %p443, %p444
      %s446 = ssub.s32 %s44, %s51
      %p447 = scmp.eq.s32.totalorder %s446, 0
      %s449 = sadd.s32 %s448, 1
      %s450 = scalar_select %p447, %s448, %s449
      %p453 = pneg %p447
      %p454 = scmp.eq.s32.totalorder %s36, 1
      %p455 = por %p453, %p454
      %p456 = scmp.ne.s32.totalorder %s448, %s451
      %p457 = scmp.eq.s32.totalorder %s36, 0
      %p458 = por %p456, %p457
      %p459 = scmp.ne.s32.totalorder %s448, %s451
      %p460 = scmp.eq.s32.totalorder %s41, 1
      %p461 = por %p459, %p460
      %p462 = scmp.ne.s32.totalorder %s451, %s452
      %p463 = scmp.eq.s32.totalorder %s41, 0
      %p464 = por %p462, %p463
      %p465 = scmp.ne.s32.totalorder %s451, %s452
      %p466 = scmp.eq.s32.totalorder %s42, 1
      %p467 = por %p465, %p466
      %p469 = scmp.ne.s32.totalorder %s452, %s468
      %p470 = scmp.eq.s32.totalorder %s42, 0
      %p471 = por %p469, %p470
      %s472 = ssub.s32 %s44, %s51
      %p473 = scmp.eq.s32.totalorder %s472, 0
      %s475 = sadd.s32 %s474, 1
      %s476 = scalar_select %p473, %s474, %s475
      %p479 = pneg %p473
      %p480 = scmp.eq.s32.totalorder %s36, 1
      %p481 = por %p479, %p480
      %p482 = scmp.ne.s32.totalorder %s474, %s477
      %p483 = scmp.eq.s32.totalorder %s36, 0
      %p484 = por %p482, %p483
      %p485 = scmp.ne.s32.totalorder %s474, %s477
      %p486 = scmp.eq.s32.totalorder %s41, 1
      %p487 = por %p485, %p486
      %p488 = scmp.ne.s32.totalorder %s477, %s478
      %p489 = scmp.eq.s32.totalorder %s41, 0
      %p490 = por %p488, %p489
      %p491 = scmp.ne.s32.totalorder %s477, %s478
      %p492 = scmp.eq.s32.totalorder %s42, 1
      %p493 = por %p491, %p492
      %p495 = scmp.ne.s32.totalorder %s478, %s494
      %p496 = scmp.eq.s32.totalorder %s42, 0
      %p497 = por %p495, %p496
      %s498 = ssub.s32 %s44, %s51
      %p499 = scmp.eq.s32.totalorder %s498, 0
      %s501 = sadd.s32 %s500, 1
      %s502 = scalar_select %p499, %s500, %s501
      %p505 = pneg %p499
      %p506 = scmp.eq.s32.totalorder %s36, 1
      %p507 = por %p505, %p506
      %p508 = scmp.ne.s32.totalorder %s500, %s503
      %p509 = scmp.eq.s32.totalorder %s36, 0
      %p510 = por %p508, %p509
      %p511 = scmp.ne.s32.totalorder %s500, %s503
      %p512 = scmp.eq.s32.totalorder %s41, 1
      %p513 = por %p511, %p512
      %p514 = scmp.ne.s32.totalorder %s503, %s504
      %p515 = scmp.eq.s32.totalorder %s41, 0
      %p516 = por %p514, %p515
      %p517 = scmp.ne.s32.totalorder %s503, %s504
      %p518 = scmp.eq.s32.totalorder %s42, 1
      %p519 = por %p517, %p518
      %p521 = scmp.ne.s32.totalorder %s504, %s520
      %p522 = scmp.eq.s32.totalorder %s42, 0
      %p523 = por %p521, %p522
      %s525 = sadd.s32 %s524, 1
      %p528 = scmp.eq.s32.totalorder %s36, 1
      %p529 = scmp.ne.s32.totalorder %s524, %s526
      %p530 = scmp.eq.s32.totalorder %s36, 0
      %p531 = por %p529, %p530
      %p532 = scmp.ne.s32.totalorder %s524, %s526
      %p533 = scmp.eq.s32.totalorder %s41, 1
      %p534 = por %p532, %p533
      %p535 = scmp.ne.s32.totalorder %s526, %s527
      %p536 = scmp.eq.s32.totalorder %s41, 0
      %p537 = por %p535, %p536
      %p538 = scmp.ne.s32.totalorder %s526, %s527
      %p539 = scmp.eq.s32.totalorder %s42, 1
      %p540 = por %p538, %p539
      %p542 = scmp.ne.s32.totalorder %s527, %s541
      %p543 = scmp.eq.s32.totalorder %s42, 0
      %p544 = por %p542, %p543
      %s546 = sadd.s32 %s545, 1
      %p549 = scmp.eq.s32.totalorder %s36, 1
      %p550 = scmp.ne.s32.totalorder %s545, %s547
      %p551 = scmp.eq.s32.totalorder %s36, 0
      %p552 = por %p550, %p551
      %p553 = scmp.ne.s32.totalorder %s545, %s547
      %p554 = scmp.eq.s32.totalorder %s41, 1
      %p555 = por %p553, %p554
      %p556 = scmp.ne.s32.totalorder %s547, %s548
      %p557 = scmp.eq.s32.totalorder %s41, 0
      %p558 = por %p556, %p557
      %p559 = scmp.ne.s32.totalorder %s547, %s548
      %p560 = scmp.eq.s32.totalorder %s42, 1
      %p561 = por %p559, %p560
      %p563 = scmp.ne.s32.totalorder %s548, %s562
      %p564 = scmp.eq.s32.totalorder %s42, 0
      %p565 = por %p563, %p564
      %s566 = ssub.s32 %s43, %s55
      %p567 = scmp.eq.s32.totalorder %s566, 0
      %s569 = sadd.s32 %s568, 1
      %s570 = scalar_select %p567, %s568, %s569
      %p573 = pneg %p567
      %p574 = scmp.eq.s32.totalorder %s36, 1
      %p575 = por %p573, %p574
      %p576 = scmp.ne.s32.totalorder %s568, %s571
      %p577 = scmp.eq.s32.totalorder %s36, 0
      %p578 = por %p576, %p577
      %p579 = scmp.ne.s32.totalorder %s568, %s571
      %p580 = scmp.eq.s32.totalorder %s41, 1
      %p581 = por %p579, %p580
      %p582 = scmp.ne.s32.totalorder %s571, %s572
      %p583 = scmp.eq.s32.totalorder %s41, 0
      %p584 = por %p582, %p583
      %p585 = scmp.ne.s32.totalorder %s571, %s572
      %p586 = scmp.eq.s32.totalorder %s42, 1
      %p587 = por %p585, %p586
      %p589 = scmp.ne.s32.totalorder %s572, %s588
      %p590 = scmp.eq.s32.totalorder %s42, 0
      %p591 = por %p589, %p590
      %p592 = scmp.le.s32.totalorder 1, %s36
      %p593 = scmp.lt.s32.totalorder %s36, 3
      %p594 = pnand %p592, %p593
      %p595 = pneg %p594
      // Predicated region
      $region9: #{tpu_custom_call.1} parent=5 // pred_check
        _
      $region10: #{tpu_custom_call.1} parent=5 // pred_check_branch
        %597 = sbr.rel (%p594) target = $region12
      $region11: #{tpu_custom_call.1} parent=5 // pred_region
        %s598 = ssub.s32 %s36, 1
        // Predicated region
        $region13: #{tpu_custom_call.1} parent=11 // pred_check
          %p599 = pneg %p74
        $region14: #{tpu_custom_call.1} parent=11 // pred_check_branch
          %601 = sbr.rel (%p599) target = $region16
        $region15: #{tpu_custom_call.1} parent=11 // pred_region
          %s602 = smul.u32 2, %s45
          %604 = vsyncadd [#allocation4], 0
          %s605 = smul.addr %s602, 8
          %s606 = scalar_lea.hbm %s0, %s605
          %s607 = sshll.u32 %s606, 4
          %s608 = int_to_ptr.hbm [resolvable:$true] %s607
          %s609 = sshll.u32 [#allocation3], 4
          %s610 = int_to_ptr.vmem [resolvable:$true] %s609
          %615 = dma.hbm_to_vmem [thread:$0]  %s608, 256, %s610, [#allocation4], 128, 128, 8
        $region16: #{tpu_custom_call.1} parent=11 // pred_fallthru
          _
        // Predicated region
        $region17: #{tpu_custom_call.1} parent=11 // pred_check
          %p616 = pneg %p100
        $region18: #{tpu_custom_call.1} parent=11 // pred_check_branch
          %618 = sbr.rel (%p616) target = $region20
        $region19: #{tpu_custom_call.1} parent=11 // pred_region
          %s619 = smul.u32 2, %s45
          %621 = vsyncadd [#allocation7], 0
          %s622 = smul.addr %s619, 8
          %s623 = scalar_lea.hbm %s1, %s622
          %s624 = sshll.u32 %s623, 4
          %s625 = int_to_ptr.hbm [resolvable:$true] %s624
          %s626 = sshll.u32 [#allocation6], 4
          %s627 = int_to_ptr.vmem [resolvable:$true] %s626
          %632 = dma.hbm_to_vmem [thread:$0]  %s625, 256, %s627, [#allocation7], 128, 128, 8
        $region20: #{tpu_custom_call.1} parent=11 // pred_fallthru
          _
        // Predicated region
        $region21: #{tpu_custom_call.1} parent=11 // pred_check
          %p633 = pneg %p126
        $region22: #{tpu_custom_call.1} parent=11 // pred_check_branch
          %635 = sbr.rel (%p633) target = $region24
        $region23: #{tpu_custom_call.1} parent=11 // pred_region
          %s636 = smul.u32 2, %s45
          %638 = vsyncadd [#allocation7], 0
          %s639 = smul.addr %s636, 8
          %s640 = scalar_lea.hbm %s2, %s639
          %s641 = sshll.u32 %s640, 4
          %s642 = int_to_ptr.hbm [resolvable:$true] %s641
          %s643 = sshll.u32 [#allocation8], 4
          %s644 = int_to_ptr.vmem [resolvable:$true] %s643
          %649 = dma.hbm_to_vmem [thread:$0]  %s642, 256, %s644, [#allocation7], 128, 128, 8
        $region24: #{tpu_custom_call.1} parent=11 // pred_fallthru
          _
        // Predicated region
        $region25: #{tpu_custom_call.1} parent=11 // pred_check
          %p650 = pneg %p152
        $region26: #{tpu_custom_call.1} parent=11 // pred_check_branch
          %652 = sbr.rel (%p650) target = $region28
        $region27: #{tpu_custom_call.1} parent=11 // pred_region
          %s653 = smul.u32 2, %s45
          %p654 = scmp.lt.s32.totalorder %s653, 1
          %s655 = scalar_select %p654, %s653, 1
          %s656 = scalar_lea.vmem %s3, %s655
          %s657 = smul.u32 2, %s45
        $region28: #{tpu_custom_call.1} parent=11 // pred_fallthru
          _
        // Predicated region
        $region29: #{tpu_custom_call.1} parent=11 // pred_check
          %p658 = pneg %p537
        $region30: #{tpu_custom_call.1} parent=11 // pred_check_branch
          %660 = sbr.rel (%p658) target = $region32
        $region31: #{tpu_custom_call.1} parent=11 // pred_region
          %662 = vsyncadd [#allocation16], 0
          %s663 = sshll.u32 %s18, 4
          %s664 = int_to_ptr.hbm [resolvable:$true] %s663
          %s665 = sshll.u32 [#allocation15], 4
          %s666 = int_to_ptr.vmem [resolvable:$true] %s665
          %671 = dma.hbm_to_vmem [thread:$0]  %s664, 256, %s666, [#allocation16], 64, 64, 4
        $region32: #{tpu_custom_call.1} parent=11 // pred_fallthru
          _
        // Predicated region
        $region33: #{tpu_custom_call.1} parent=11 // pred_check
          %p672 = pneg %p558
        $region34: #{tpu_custom_call.1} parent=11 // pred_check_branch
          %674 = sbr.rel (%p672) target = $region36
        $region35: #{tpu_custom_call.1} parent=11 // pred_region
          _
        $region36: #{tpu_custom_call.1} parent=11 // pred_fallthru
          _
      $region12: #{tpu_custom_call.1} parent=5 // pred_fallthru
        _
      %p675 = scmp.lt.s32.totalorder %s36, 2
      // Predicated region
      $region37: #{tpu_custom_call.1} parent=5 // pred_check
        %p676 = pneg %p675
      $region38: #{tpu_custom_call.1} parent=5 // pred_check_branch
        %678 = sbr.rel (%p676) target = $region40
      $region39: #{tpu_custom_call.1} parent=5 // pred_region
        // Predicated region
        $region41: #{tpu_custom_call.1} parent=39 // pred_check
          %p679 = pneg %p172
        $region42: #{tpu_custom_call.1} parent=39 // pred_check_branch
          %681 = sbr.rel (%p679) target = $region44
        $region43: #{tpu_custom_call.1} parent=39 // pred_region
          %p682 = scmp.lt.s32.totalorder %s44, 1
          %s683 = scalar_select %p682, %s44, 1
          %s684 = smul.addr %s683, 12
          %s685 = smul.addr %s684, 4
          %s686 = scalar_lea.vmem %s4, %s685
        $region44: #{tpu_custom_call.1} parent=39 // pred_fallthru
          _
        // Predicated region
        $region45: #{tpu_custom_call.1} parent=39 // pred_check
          %p687 = pneg %p198
        $region46: #{tpu_custom_call.1} parent=39 // pred_check_branch
          %689 = sbr.rel (%p687) target = $region48
        $region47: #{tpu_custom_call.1} parent=39 // pred_region
          %p690 = scmp.lt.s32.totalorder %s44, 1
          %s691 = scalar_select %p690, %s44, 1
          %s692 = smul.addr %s691, 4
          %s693 = scalar_lea.vmem %s5, %s692
        $region48: #{tpu_custom_call.1} parent=39 // pred_fallthru
          _
        // Predicated region
        $region49: #{tpu_custom_call.1} parent=39 // pred_check
          %p694 = pneg %p224
        $region50: #{tpu_custom_call.1} parent=39 // pred_check_branch
          %696 = sbr.rel (%p694) target = $region52
        $region51: #{tpu_custom_call.1} parent=39 // pred_region
          %s697 = sand.u32 %s36, 1
          %s698 = scalar_lea.sflag [#allocation10], %s697
          %s699 = sand.u32 %s214, 1
          %s700 = smul.addr %s699, 16
          %s701 = scalar_lea.vmem [#allocation9], %s700
          %703 = vsyncadd %s698, 0
          %s704 = smul.addr %s44, 4
          %s705 = smul.addr %s704, 4
          %s706 = scalar_lea.hbm %s6, %s705
          %s707 = sshll.u32 %s706, 4
          %s708 = int_to_ptr.hbm [resolvable:$true] %s707
          %s709 = sshll.u32 %s701, 4
          %s710 = int_to_ptr.vmem [resolvable:$true] %s709
          %715 = dma.hbm_to_vmem [thread:$0]  %s708, 256, %s710, %s698, 64, 64, 4
        $region52: #{tpu_custom_call.1} parent=39 // pred_fallthru
          _
        // Predicated region
        $region53: #{tpu_custom_call.1} parent=39 // pred_check
          %p716 = pneg %p250
        $region54: #{tpu_custom_call.1} parent=39 // pred_check_branch
          %718 = sbr.rel (%p716) target = $region56
        $region55: #{tpu_custom_call.1} parent=39 // pred_region
          %p719 = scmp.lt.s32.totalorder %s44, 1
          %s720 = scalar_select %p719, %s44, 1
          %s721 = scalar_lea.vmem %s7, %s720
        $region56: #{tpu_custom_call.1} parent=39 // pred_fallthru
          _
        // Predicated region
        $region57: #{tpu_custom_call.1} parent=39 // pred_check
          %p722 = pneg %p276
        $region58: #{tpu_custom_call.1} parent=39 // pred_check_branch
          %724 = sbr.rel (%p722) target = $region60
        $region59: #{tpu_custom_call.1} parent=39 // pred_region
          %s725 = sand.u32 %s36, 1
          %s726 = scalar_lea.sflag [#allocation10], %s725
          %s727 = sand.u32 %s266, 1
          %s728 = smul.addr %s727, 48
          %s729 = scalar_lea.vmem [#allocation11], %s728
          %731 = vsyncadd %s726, 0
          %s732 = smul.addr %s44, 12
          %s733 = smul.addr %s732, 4
          %s734 = scalar_lea.hbm %s8, %s733
          %s735 = sshll.u32 %s734, 4
          %s736 = int_to_ptr.hbm [resolvable:$true] %s735
          %s737 = sshll.u32 %s729, 4
          %s738 = int_to_ptr.vmem [resolvable:$true] %s737
          %743 = dma.hbm_to_vmem [thread:$0]  %s736, 768, %s738, %s726, 64, 64, 4
        $region60: #{tpu_custom_call.1} parent=39 // pred_fallthru
          _
        // Predicated region
        $region61: #{tpu_custom_call.1} parent=39 // pred_check
          %p744 = pneg %p302
        $region62: #{tpu_custom_call.1} parent=39 // pred_check_branch
          %746 = sbr.rel (%p744) target = $region64
        $region63: #{tpu_custom_call.1} parent=39 // pred_region
          %p747 = scmp.lt.s32.totalorder %s44, 1
          %s748 = scalar_select %p747, %s44, 1
          %s749 = smul.addr %s748, 4
          %s750 = scalar_lea.vmem %s9, %s749
        $region64: #{tpu_custom_call.1} parent=39 // pred_fallthru
          _
        // Predicated region
        $region65: #{tpu_custom_call.1} parent=39 // pred_check
          %p751 = pneg %p328
        $region66: #{tpu_custom_call.1} parent=39 // pred_check_branch
          %753 = sbr.rel (%p751) target = $region68
        $region67: #{tpu_custom_call.1} parent=39 // pred_region
          %s754 = sand.u32 %s36, 1
          %s755 = scalar_lea.sflag [#allocation13], %s754
          %s756 = sand.u32 %s318, 1
          %s757 = smul.addr %s756, 16
          %s758 = scalar_lea.vmem [#allocation12], %s757
          %760 = vsyncadd %s755, 0
          %s761 = smul.addr %s44, 4
          %s762 = smul.addr %s761, 4
          %s763 = scalar_lea.hbm %s10, %s762
          %s764 = sshll.u32 %s763, 4
          %s765 = int_to_ptr.hbm [resolvable:$true] %s764
          %s766 = sshll.u32 %s758, 4
          %s767 = int_to_ptr.vmem [resolvable:$true] %s766
          %772 = dma.hbm_to_vmem [thread:$0]  %s765, 256, %s767, %s755, 64, 64, 4
        $region68: #{tpu_custom_call.1} parent=39 // pred_fallthru
          _
        // Predicated region
        $region69: #{tpu_custom_call.1} parent=39 // pred_check
          %p773 = pneg %p354
        $region70: #{tpu_custom_call.1} parent=39 // pred_check_branch
          %775 = sbr.rel (%p773) target = $region72
        $region71: #{tpu_custom_call.1} parent=39 // pred_region
          %p776 = scmp.lt.s32.totalorder %s44, 1
          %s777 = scalar_select %p776, %s44, 1
          %s778 = scalar_lea.vmem %s11, %s777
        $region72: #{tpu_custom_call.1} parent=39 // pred_fallthru
          _
        // Predicated region
        $region73: #{tpu_custom_call.1} parent=39 // pred_check
          %p779 = pneg %p380
        $region74: #{tpu_custom_call.1} parent=39 // pred_check_branch
          %781 = sbr.rel (%p779) target = $region76
        $region75: #{tpu_custom_call.1} parent=39 // pred_region
          %p782 = scmp.lt.s32.totalorder %s44, 1
          %s783 = scalar_select %p782, %s44, 1
          %s784 = smul.addr %s783, 4
          %s785 = scalar_lea.vmem %s12, %s784
        $region76: #{tpu_custom_call.1} parent=39 // pred_fallthru
          _
        // Predicated region
        $region77: #{tpu_custom_call.1} parent=39 // pred_check
          %p786 = pneg %p406
        $region78: #{tpu_custom_call.1} parent=39 // pred_check_branch
          %788 = sbr.rel (%p786) target = $region80
        $region79: #{tpu_custom_call.1} parent=39 // pred_region
          %p789 = scmp.lt.s32.totalorder %s44, 1
          %s790 = scalar_select %p789, %s44, 1
          %s791 = smul.addr %s790, 4
          %s792 = scalar_lea.vmem %s13, %s791
        $region80: #{tpu_custom_call.1} parent=39 // pred_fallthru
          _
        // Predicated region
        $region81: #{tpu_custom_call.1} parent=39 // pred_check
          %p793 = pneg %p432
        $region82: #{tpu_custom_call.1} parent=39 // pred_check_branch
          %795 = sbr.rel (%p793) target = $region84
        $region83: #{tpu_custom_call.1} parent=39 // pred_region
          %s796 = sand.u32 %s36, 1
          %s797 = scalar_lea.sflag [#allocation13], %s796
          %s798 = sand.u32 %s422, 1
          %s799 = smul.addr %s798, 16
          %s800 = scalar_lea.vmem [#allocation14], %s799
          %802 = vsyncadd %s797, 0
          %s803 = smul.addr %s44, 4
          %s804 = smul.addr %s803, 4
          %s805 = scalar_lea.hbm %s14, %s804
          %s806 = sshll.u32 %s805, 4
          %s807 = int_to_ptr.hbm [resolvable:$true] %s806
          %s808 = sshll.u32 %s800, 4
          %s809 = int_to_ptr.vmem [resolvable:$true] %s808
          %814 = dma.hbm_to_vmem [thread:$0]  %s807, 256, %s809, %s797, 64, 64, 4
        $region84: #{tpu_custom_call.1} parent=39 // pred_fallthru
          _
        // Predicated region
        $region85: #{tpu_custom_call.1} parent=39 // pred_check
          %p815 = pneg %p458
        $region86: #{tpu_custom_call.1} parent=39 // pred_check_branch
          %817 = sbr.rel (%p815) target = $region88
        $region87: #{tpu_custom_call.1} parent=39 // pred_region
          %p818 = scmp.lt.s32.totalorder %s44, 1
          %s819 = scalar_select %p818, %s44, 1
          %s820 = scalar_lea.vmem %s15, %s819
        $region88: #{tpu_custom_call.1} parent=39 // pred_fallthru
          _
        // Predicated region
        $region89: #{tpu_custom_call.1} parent=39 // pred_check
          %p821 = pneg %p484
        $region90: #{tpu_custom_call.1} parent=39 // pred_check_branch
          %823 = sbr.rel (%p821) target = $region92
        $region91: #{tpu_custom_call.1} parent=39 // pred_region
          %p824 = scmp.lt.s32.totalorder %s44, 1
          %s825 = scalar_select %p824, %s44, 1
          %s826 = smul.addr %s825, 8
          %s827 = smul.addr %s826, 4
          %s828 = scalar_lea.vmem %s16, %s827
        $region92: #{tpu_custom_call.1} parent=39 // pred_fallthru
          _
        // Predicated region
        $region93: #{tpu_custom_call.1} parent=39 // pred_check
          %p829 = pneg %p510
        $region94: #{tpu_custom_call.1} parent=39 // pred_check_branch
          %831 = sbr.rel (%p829) target = $region96
        $region95: #{tpu_custom_call.1} parent=39 // pred_region
          %p832 = scmp.lt.s32.totalorder %s44, 1
          %s833 = scalar_select %p832, %s44, 1
          %s834 = scalar_lea.vmem %s17, %s833
        $region96: #{tpu_custom_call.1} parent=39 // pred_fallthru
          _
      $region40: #{tpu_custom_call.1} parent=5 // pred_fallthru
        _
      %p835 = scmp.le.s32.totalorder 1, %s36
      %p836 = scmp.lt.s32.totalorder %s36, 3
      %p837 = pnand %p835, %p836
      %p838 = pneg %p837
      // Predicated region
      $region97: #{tpu_custom_call.1} parent=5 // pred_check
        _
      $region98: #{tpu_custom_call.1} parent=5 // pred_check_branch
        %840 = sbr.rel (%p837) target = $region100
      $region99: #{tpu_custom_call.1} parent=5 // pred_region
        %s841 = ssub.s32 %s36, 1
        // Predicated region
        $region101: #{tpu_custom_call.1} parent=99 // pred_check
          %p842 = pneg %p74
        $region102: #{tpu_custom_call.1} parent=99 // pred_check_branch
          %844 = sbr.rel (%p842) target = $region104
        $region103: #{tpu_custom_call.1} parent=99 // pred_region
          %846 = dma.done [#allocation4], 256
        $region104: #{tpu_custom_call.1} parent=99 // pred_fallthru
          _
        // Predicated region
        $region105: #{tpu_custom_call.1} parent=99 // pred_check
          %p847 = pneg %p100
        $region106: #{tpu_custom_call.1} parent=99 // pred_check_branch
          %849 = sbr.rel (%p847) target = $region108
        $region107: #{tpu_custom_call.1} parent=99 // pred_region
          %851 = dma.done [#allocation7], 256
        $region108: #{tpu_custom_call.1} parent=99 // pred_fallthru
          _
        // Predicated region
        $region109: #{tpu_custom_call.1} parent=99 // pred_check
          %p852 = pneg %p126
        $region110: #{tpu_custom_call.1} parent=99 // pred_check_branch
          %854 = sbr.rel (%p852) target = $region112
        $region111: #{tpu_custom_call.1} parent=99 // pred_region
          %856 = dma.done [#allocation7], 256
        $region112: #{tpu_custom_call.1} parent=99 // pred_fallthru
          _
        %s857 = sand.u32 %s41, 1
        %s858 = scalar_lea.sflag [#allocation10], %s857
        %s859 = sand.u32 %s217, 1
        %s860 = smul.addr %s859, 16
        %s861 = scalar_lea.vmem [#allocation9], %s860
        // Predicated region
        $region113: #{tpu_custom_call.1} parent=99 // pred_check
          %p862 = pneg %p230
        $region114: #{tpu_custom_call.1} parent=99 // pred_check_branch
          %864 = sbr.rel (%p862) target = $region116
        $region115: #{tpu_custom_call.1} parent=99 // pred_region
          %866 = dma.done %s858, 256
        $region116: #{tpu_custom_call.1} parent=99 // pred_fallthru
          _
        %s867 = sand.u32 %s41, 1
        %s868 = scalar_lea.sflag [#allocation10], %s867
        %s869 = sand.u32 %s269, 1
        %s870 = smul.addr %s869, 48
        %s871 = scalar_lea.vmem [#allocation11], %s870
        // Predicated region
        $region117: #{tpu_custom_call.1} parent=99 // pred_check
          %p872 = pneg %p282
        $region118: #{tpu_custom_call.1} parent=99 // pred_check_branch
          %874 = sbr.rel (%p872) target = $region120
        $region119: #{tpu_custom_call.1} parent=99 // pred_region
          %876 = dma.done %s868, 768
        $region120: #{tpu_custom_call.1} parent=99 // pred_fallthru
          _
        %s877 = sand.u32 %s41, 1
        %s878 = scalar_lea.sflag [#allocation13], %s877
        %s879 = sand.u32 %s321, 1
        %s880 = smul.addr %s879, 16
        %s881 = scalar_lea.vmem [#allocation12], %s880
        // Predicated region
        $region121: #{tpu_custom_call.1} parent=99 // pred_check
          %p882 = pneg %p334
        $region122: #{tpu_custom_call.1} parent=99 // pred_check_branch
          %884 = sbr.rel (%p882) target = $region124
        $region123: #{tpu_custom_call.1} parent=99 // pred_region
          %886 = dma.done %s878, 256
        $region124: #{tpu_custom_call.1} parent=99 // pred_fallthru
          _
        %s887 = sand.u32 %s41, 1
        %s888 = scalar_lea.sflag [#allocation13], %s887
        %s889 = sand.u32 %s425, 1
        %s890 = smul.addr %s889, 16
        %s891 = scalar_lea.vmem [#allocation14], %s890
        // Predicated region
        $region125: #{tpu_custom_call.1} parent=99 // pred_check
          %p892 = pneg %p438
        $region126: #{tpu_custom_call.1} parent=99 // pred_check_branch
          %894 = sbr.rel (%p892) target = $region128
        $region127: #{tpu_custom_call.1} parent=99 // pred_region
          %896 = dma.done %s888, 256
        $region128: #{tpu_custom_call.1} parent=99 // pred_fallthru
          _
        // Predicated region
        $region129: #{tpu_custom_call.1} parent=99 // pred_check
          %p897 = pneg %p537
        $region130: #{tpu_custom_call.1} parent=99 // pred_check_branch
          %899 = sbr.rel (%p897) target = $region132
        $region131: #{tpu_custom_call.1} parent=99 // pred_region
          %901 = dma.done [#allocation16], 256
        $region132: #{tpu_custom_call.1} parent=99 // pred_fallthru
          _
        %p902 = pneg %p74
        %p903 = pneg %p71
        %p904 = pneg %p100
        %p905 = pneg %p97
        %p906 = pneg %p126
        %p907 = pneg %p123
        %s908 = smul.u32 2, %s45
        %p909 = scmp.lt.s32.totalorder %s908, 1
        %s910 = scalar_select %p909, %s908, 1
        %s911 = scalar_lea.vmem %s3, %s910
        %p912 = pneg %p152
        %p913 = pneg %p149
        %p914 = scmp.lt.s32.totalorder %s46, 1
        %s915 = scalar_select %p914, %s46, 1
        %s916 = smul.addr %s915, 12
        %s917 = smul.addr %s916, 4
        %s918 = scalar_lea.vmem %s4, %s917
        %p919 = pneg %p178
        %p920 = pneg %p175
        %p921 = scmp.lt.s32.totalorder %s46, 1
        %s922 = scalar_select %p921, %s46, 1
        %s923 = smul.addr %s922, 4
        %s924 = scalar_lea.vmem %s5, %s923
        %p925 = pneg %p204
        %p926 = pneg %p201
        %s927 = sand.u32 %s41, 1
        %s928 = scalar_lea.sflag [#allocation10], %s927
        %s929 = sand.u32 %s217, 1
        %s930 = smul.addr %s929, 16
        %s931 = scalar_lea.vmem [#allocation9], %s930
        %p932 = pneg %p230
        %p933 = pneg %p227
        %p934 = scmp.lt.s32.totalorder %s46, 1
        %s935 = scalar_select %p934, %s46, 1
        %s936 = scalar_lea.vmem %s7, %s935
        %p937 = pneg %p256
        %p938 = pneg %p253
        %s939 = sand.u32 %s41, 1
        %s940 = scalar_lea.sflag [#allocation10], %s939
        %s941 = sand.u32 %s269, 1
        %s942 = smul.addr %s941, 48
        %s943 = scalar_lea.vmem [#allocation11], %s942
        %p944 = pneg %p282
        %p945 = pneg %p279
        %p946 = scmp.lt.s32.totalorder %s46, 1
        %s947 = scalar_select %p946, %s46, 1
        %s948 = smul.addr %s947, 4
        %s949 = scalar_lea.vmem %s9, %s948
        %p950 = pneg %p308
        %p951 = pneg %p305
        %s952 = sand.u32 %s41, 1
        %s953 = scalar_lea.sflag [#allocation13], %s952
        %s954 = sand.u32 %s321, 1
        %s955 = smul.addr %s954, 16
        %s956 = scalar_lea.vmem [#allocation12], %s955
        %p957 = pneg %p334
        %p958 = pneg %p331
        %p959 = scmp.lt.s32.totalorder %s46, 1
        %s960 = scalar_select %p959, %s46, 1
        %s961 = scalar_lea.vmem %s11, %s960
        %p962 = pneg %p360
        %p963 = pneg %p357
        %p964 = scmp.lt.s32.totalorder %s46, 1
        %s965 = scalar_select %p964, %s46, 1
        %s966 = smul.addr %s965, 4
        %s967 = scalar_lea.vmem %s12, %s966
        %p968 = pneg %p386
        %p969 = pneg %p383
        %p970 = scmp.lt.s32.totalorder %s46, 1
        %s971 = scalar_select %p970, %s46, 1
        %s972 = smul.addr %s971, 4
        %s973 = scalar_lea.vmem %s13, %s972
        %p974 = pneg %p412
        %p975 = pneg %p409
        %s976 = sand.u32 %s41, 1
        %s977 = scalar_lea.sflag [#allocation13], %s976
        %s978 = sand.u32 %s425, 1
        %s979 = smul.addr %s978, 16
        %s980 = scalar_lea.vmem [#allocation14], %s979
        %p981 = pneg %p438
        %p982 = pneg %p435
        %p983 = scmp.lt.s32.totalorder %s46, 1
        %s984 = scalar_select %p983, %s46, 1
        %s985 = scalar_lea.vmem %s15, %s984
        %p986 = pneg %p464
        %p987 = pneg %p461
        %p988 = scmp.lt.s32.totalorder %s46, 1
        %s989 = scalar_select %p988, %s46, 1
        %s990 = smul.addr %s989, 8
        %s991 = smul.addr %s990, 4
        %s992 = scalar_lea.vmem %s16, %s991
        %p993 = pneg %p490
        %p994 = pneg %p487
        %p995 = scmp.lt.s32.totalorder %s46, 1
        %s996 = scalar_select %p995, %s46, 1
        %s997 = scalar_lea.vmem %s17, %s996
        %p998 = pneg %p516
        %p999 = pneg %p513
        %p1000 = pneg %p537
        %p1001 = pneg %p534
        %p1002 = pneg %p558
        %p1003 = pneg %p555
        %p1004 = pneg %p584
        %p1005 = pneg %p581
        %s1006 = smul.u32 2, %s45
        %s1007 = smul.u32 2, %s45
        %s1008 = smul.u32 2, %s45
        %s1009 = smul.u32 2, %s45
        %p1010 = scmp.lt.s32.totalorder %s1009, 1
        %s1011 = scalar_select %p1010, %s1009, 1
        %s1012 = scalar_lea.vmem %s3, %s1011
        %s1013 = smul.u32 2, %s45
        %p1014 = scmp.lt.s32.totalorder %s46, 1
        %s1015 = scalar_select %p1014, %s46, 1
        %s1016 = smul.addr %s1015, 12
        %s1017 = smul.addr %s1016, 4
        %s1018 = scalar_lea.vmem %s4, %s1017
        %p1019 = scmp.lt.s32.totalorder %s46, 1
        %s1020 = scalar_select %p1019, %s46, 1
        %s1021 = smul.addr %s1020, 4
        %s1022 = scalar_lea.vmem %s5, %s1021
        %p1023 = scmp.lt.s32.totalorder %s46, 1
        %s1024 = scalar_select %p1023, %s46, 1
        %s1025 = scalar_lea.vmem %s7, %s1024
        %p1026 = scmp.lt.s32.totalorder %s46, 1
        %s1027 = scalar_select %p1026, %s46, 1
        %s1028 = smul.addr %s1027, 4
        %s1029 = scalar_lea.vmem %s9, %s1028
        %p1030 = scmp.lt.s32.totalorder %s46, 1
        %s1031 = scalar_select %p1030, %s46, 1
        %s1032 = scalar_lea.vmem %s11, %s1031
        %p1033 = scmp.lt.s32.totalorder %s46, 1
        %s1034 = scalar_select %p1033, %s46, 1
        %s1035 = smul.addr %s1034, 4
        %s1036 = scalar_lea.vmem %s12, %s1035
        %p1037 = scmp.lt.s32.totalorder %s46, 1
        %s1038 = scalar_select %p1037, %s46, 1
        %s1039 = smul.addr %s1038, 4
        %s1040 = scalar_lea.vmem %s13, %s1039
        %p1041 = scmp.lt.s32.totalorder %s46, 1
        %s1042 = scalar_select %p1041, %s46, 1
        %s1043 = scalar_lea.vmem %s15, %s1042
        %p1044 = scmp.lt.s32.totalorder %s46, 1
        %s1045 = scalar_select %p1044, %s46, 1
        %s1046 = smul.addr %s1045, 8
        %s1047 = smul.addr %s1046, 4
        %s1048 = scalar_lea.vmem %s16, %s1047
        %p1049 = scmp.lt.s32.totalorder %s46, 1
        %s1050 = scalar_select %p1049, %s46, 1
        %s1051 = scalar_lea.vmem %s17, %s1050
        %s1052 = smul.u32 2, %s45
        %p1054 = scmp.eq.s32.totalorder %s46, 0
        // Predicated region
        $region133: #{tpu_custom_call.1} parent=99 // pred_check
          %p1055 = pneg %p1054
        $region134: #{tpu_custom_call.1} parent=99 // pred_check_branch
          %1057 = sbr.rel (%p1055) target = $region136
        $region135: #{tpu_custom_call.1} parent=99 // pred_region
          %v1058 = vld [vmem:[#allocation3] sm:$0xff]
          %v1059 = vld [vmem:[#allocation3 + $0x8] sm:$0xff]
          %vm1060 = vcmask 261120
          %1061 = vst.msk [vmem:[#allocation2] sm:$0xff] %vm1060, %v1058
          %1062 = vst.msk [vmem:[#allocation2 + $0x8] sm:$0xff] %vm1060, %v1059
        $region136: #{tpu_custom_call.1} parent=99 // pred_fallthru
          _
        %v1063 = vld [vmem:[#allocation2] sm:$0xff]
        %v1064 = vld [vmem:[#allocation2 + $0x8] sm:$0xff]
        %v1065 = vld [vmem:[#allocation6] sm:$0xff]
        %v1066 = vld [vmem:[#allocation6 + $0x8] sm:$0xff]
        %v1067 = vld [vmem:[#allocation8] sm:$0xff]
        %v1068 = vld [vmem:[#allocation8 + $0x8] sm:$0xff]
        %vm1069 = vcmp.ne.f32.partialorder %v1067, 0.0
        %vm1070 = vcmp.ne.f32.partialorder %v1068, 0.0
        %v1071 = vld [vmem:[%s1012] sm:$0x1]
        %v1072 = vld [vmem:[%s1012 + $0x1] sm:$0x1]
        %vm1073 = vcmp.ne.f32.partialorder %v1071, 0.0
        %vm1074 = vcmp.ne.f32.partialorder %v1072, 0.0
        %v1075 = vld [vmem:[%s1018] sm:$0xf]
        %v1076 = vld [vmem:[%s1018 + $0x4] sm:$0xf]
        %v1077 = vld [vmem:[%s1018 + $0x8] sm:$0xf]
        %v1078 = vld [vmem:[%s1018 + $0xc] sm:$0xf]
        %v1079 = vld [vmem:[%s1018 + $0x10] sm:$0xf]
        %v1080 = vld [vmem:[%s1018 + $0x14] sm:$0xf]
        %v1081 = vld [vmem:[%s1018 + $0x18] sm:$0xf]
        %v1082 = vld [vmem:[%s1018 + $0x1c] sm:$0xf]
        %v1083 = vld [vmem:[%s1018 + $0x20] sm:$0xf]
        %v1084 = vld [vmem:[%s1018 + $0x24] sm:$0xf]
        %v1085 = vld [vmem:[%s1018 + $0x28] sm:$0xf]
        %v1086 = vld [vmem:[%s1018 + $0x2c] sm:$0xf]
        %v1087 = vld [vmem:[%s1022] sm:$0x7]
        %v1088 = vld [vmem:[%s861] sm:$0xf]
        %v1089 = vld [vmem:[%s861 + $0x4] sm:$0xf]
        %v1090 = vld [vmem:[%s861 + $0x8] sm:$0xf]
        %v1091 = vld [vmem:[%s861 + $0xc] sm:$0xf]
        %v1092 = vld [vmem:[%s1025] sm:$0x1]
        %v1093 = vld [vmem:[%s871] sm:$0xf]
        %v1094 = vld [vmem:[%s871 + $0x4] sm:$0xf]
        %v1095 = vld [vmem:[%s871 + $0x8] sm:$0xf]
        %v1096 = vld [vmem:[%s871 + $0xc] sm:$0xf]
        %v1097 = vld [vmem:[%s871 + $0x10] sm:$0xf]
        %v1098 = vld [vmem:[%s871 + $0x14] sm:$0xf]
        %v1099 = vld [vmem:[%s871 + $0x18] sm:$0xf]
        %v1100 = vld [vmem:[%s871 + $0x1c] sm:$0xf]
        %v1101 = vld [vmem:[%s871 + $0x20] sm:$0xf]
        %v1102 = vld [vmem:[%s871 + $0x24] sm:$0xf]
        %v1103 = vld [vmem:[%s871 + $0x28] sm:$0xf]
        %v1104 = vld [vmem:[%s871 + $0x2c] sm:$0xf]
        %v1105 = vld [vmem:[%s1029] sm:$0x7]
        %v1106 = vld [vmem:[%s881] sm:$0xf]
        %v1107 = vld [vmem:[%s881 + $0x4] sm:$0xf]
        %v1108 = vld [vmem:[%s881 + $0x8] sm:$0xf]
        %v1109 = vld [vmem:[%s881 + $0xc] sm:$0xf]
        %v1110 = vld [vmem:[%s1032] sm:$0x1]
        %v1111 = vld [vmem:[%s1036] sm:$0x7]
        %v1112 = vld [vmem:[%s1040] sm:$0x7]
        %v1113 = vld [vmem:[%s891] sm:$0xf]
        %v1114 = vld [vmem:[%s891 + $0x4] sm:$0xf]
        %v1115 = vld [vmem:[%s891 + $0x8] sm:$0xf]
        %v1116 = vld [vmem:[%s891 + $0xc] sm:$0xf]
        %v1117 = vld [vmem:[%s1043] sm:$0x1]
        %v1118 = vld [vmem:[%s1048] sm:$0xf]
        %v1119 = vld [vmem:[%s1048 + $0x4] sm:$0xf]
        %v1120 = vld [vmem:[%s1048 + $0x8] sm:$0xf]
        %v1121 = vld [vmem:[%s1048 + $0xc] sm:$0xf]
        %v1122 = vld [vmem:[%s1048 + $0x10] sm:$0xf]
        %v1123 = vld [vmem:[%s1048 + $0x14] sm:$0xf]
        %v1124 = vld [vmem:[%s1048 + $0x18] sm:$0xf]
        %v1125 = vld [vmem:[%s1048 + $0x1c] sm:$0xf]
        %v1126 = vld [vmem:[%s1051] sm:$0x1]
        %v1127 = vpack.c.bf16 %v1064, %v1063
        %v1128 = vperm.slane %v1087, 0
        %v1133 = vunpack.c.l.b16 %v1075
        %v1134 = vunpack.c.l.b16 %v1076
        %v1135 = vunpack.c.l.b16 %v1077
        %v1136 = vunpack.c.l.b16 %v1078
        %v1137 = vpack.c.b16 %v1134, %v1133
        %v1138 = vpack.c.b16 %v1136, %v1135
        %vm1141 = vcmask 261120
        %v1143 = vsel %vm1141, %v1127, 0
        %1145 = vmatpush.bf16.msra.mxu0 0
        %1146 = vmatpush.bf16.msra.mxu0 0
        %1147 = vmatpush.bf16.msra.mxu0 0
        %1148 = vmatpush.bf16.msra.mxu0 0
        %1149 = vmatpush.bf16.msra.mxu0 0
        %1150 = vmatpush.bf16.msra.mxu0 0
        %1151 = vmatpush.bf16.msra.mxu0 %v1138
        %1152 = vmatpush.bf16.msra.mxu0 %v1137
        %1153 = vmatmul.bf16.gmra.mxu0 %v1143
        %v1154 = vpop.f32.mrf.mxu0
        %v1155 = vadd.f32 %v1128, %v1154
        %v1156 = vpop.f32.mrf.mxu0
        %v1157 = vadd.f32 %v1128, %v1156
        %1158 = vdwg.mxu0
        %v1159 = vperm.slane %v1087, 1
        %v1164 = vunpack.c.l.b16 %v1079
        %v1165 = vunpack.c.l.b16 %v1080
        %v1166 = vunpack.c.l.b16 %v1081
        %v1167 = vunpack.c.l.b16 %v1082
        %v1168 = vpack.c.b16 %v1165, %v1164
        %v1169 = vpack.c.b16 %v1167, %v1166
        %1172 = vmatpush.bf16.msra.mxu0 0
        %1173 = vmatpush.bf16.msra.mxu0 0
        %1174 = vmatpush.bf16.msra.mxu0 0
        %1175 = vmatpush.bf16.msra.mxu0 0
        %1176 = vmatpush.bf16.msra.mxu0 0
        %1177 = vmatpush.bf16.msra.mxu0 0
        %1178 = vmatpush.bf16.msra.mxu0 %v1169
        %1179 = vmatpush.bf16.msra.mxu0 %v1168
        %1180 = vmatmul.bf16.gmra.mxu0 %v1143
        %v1181 = vpop.f32.mrf.mxu0
        %v1182 = vadd.f32 %v1159, %v1181
        %v1183 = vpop.f32.mrf.mxu0
        %v1184 = vadd.f32 %v1159, %v1183
        %1185 = vdwg.mxu0
        %v1186 = vperm.slane %v1087, 2
        %v1191 = vunpack.c.l.b16 %v1083
        %v1192 = vunpack.c.l.b16 %v1084
        %v1193 = vunpack.c.l.b16 %v1085
        %v1194 = vunpack.c.l.b16 %v1086
        %v1195 = vpack.c.b16 %v1192, %v1191
        %v1196 = vpack.c.b16 %v1194, %v1193
        %1199 = vmatpush.bf16.msra.mxu0 0
        %1200 = vmatpush.bf16.msra.mxu0 0
        %1201 = vmatpush.bf16.msra.mxu0 0
        %1202 = vmatpush.bf16.msra.mxu0 0
        %1203 = vmatpush.bf16.msra.mxu0 0
        %1204 = vmatpush.bf16.msra.mxu0 0
        %1205 = vmatpush.bf16.msra.mxu0 %v1196
        %1206 = vmatpush.bf16.msra.mxu0 %v1195
        %1207 = vmatmul.bf16.gmra.mxu0 %v1143
        %v1208 = vpop.f32.mrf.mxu0
        %v1209 = vadd.f32 %v1186, %v1208
        %v1210 = vpop.f32.mrf.mxu0
        %v1211 = vadd.f32 %v1186, %v1210
        %1212 = vdwg.mxu0
        %v1213 = vmul.f32 %v1155, 0.35355338
        %v1214 = vmul.f32 %v1157, 0.35355338
        %v1215 = vpack.c.bf16 %v1213, %v1213
        %v1216 = vpack.c.bf16 %v1214, %v1214
        %v1217 = vpack.c.bf16 %v1182, %v1182
        %v1218 = vpack.c.bf16 %v1184, %v1184
        %v1219 = vpack.c.bf16 %v1209, %v1209
        %v1220 = vpack.c.bf16 %v1211, %v1211
        %vm1221 = vcmask 64512
        %v1223 = vsel %vm1221, %v1215, 0
        %v1226 = vsel %vm1221, %v1217, 0
        %1228 = vmatpush.bf16.xpose.msra.mxu0 0
        %1229 = vmatpush.bf16.xpose.msra.mxu0 0
        %1230 = vmatpush.bf16.xpose.msra.mxu0 0
        %1231 = vmatpush.bf16.xpose.msra.mxu0 0
        %1232 = vmatpush.bf16.xpose.msra.mxu0 0
        %1233 = vmatpush.bf16.xpose.msra.mxu0 0
        %1234 = vmatpush.bf16.xpose.msra.mxu0 0
        %1235 = vmatpush.bf16.xpose.msra.mxu0 %v1226
        %1236 = vmatmul.bf16.gmra.mxu0 %v1223
        %v1237 = vpop.f32.mrf.mxu0
        %v1238 = vadd.f32 0.0, %v1237
        %v1239 = vpop.f32.mrf.mxu0
        %1240 = vdwg.mxu0
        %v1242 = vsel %vm1221, %v1216, 0
        %v1245 = vsel %vm1221, %v1218, 0
        %1247 = vmatpush.bf16.xpose.msra.mxu0 0
        %1248 = vmatpush.bf16.xpose.msra.mxu0 0
        %1249 = vmatpush.bf16.xpose.msra.mxu0 0
        %1250 = vmatpush.bf16.xpose.msra.mxu0 0
        %1251 = vmatpush.bf16.xpose.msra.mxu0 0
        %1252 = vmatpush.bf16.xpose.msra.mxu0 0
        %1253 = vmatpush.bf16.xpose.msra.mxu0 0
        %1254 = vmatpush.bf16.xpose.msra.mxu0 %v1245
        %1255 = vmatmul.bf16.gmra.mxu0 %v1242
        %v1256 = vpop.f32.mrf.mxu0
        %v1257 = vadd.f32 0.0, %v1256
        %v1258 = vpop.f32.mrf.mxu0
        %1259 = vdwg.mxu0
        %v1260 = vsel %vm1069, %v1238, -10000.0
        %v1261 = vsel %vm1070, %v1257, -10000.0
        %v1262 = vsel %vm1221, %v1260, -inf
        %1263 = vmax.xlane.f32.xlu0 %v1262
        %v1264 = vpop.xlane.xlu0 %1263
        %v1265 = vsel %vm1221, %v1261, -inf
        %1266 = vmax.xlane.f32.xlu0 %v1265
        %v1267 = vpop.xlane.xlu0 %1266
        %v1268 = vsub.f32 %v1260, %v1264
        %v1269 = vsub.f32 %v1261, %v1267
        %v1270 = vmul.f32 %v1268, 1.442695
        %v1271 = vpow.pop %v1270
        %v1272 = vmul.f32 %v1269, 1.442695
        %v1273 = vpow.pop %v1272
        %v1274 = vsel %vm1221, %v1271, 0.0
        %1275 = vadd.xlane.f32.xlu0 %v1274
        %v1276 = vpop.xlane.xlu0 %1275
        %v1277 = vsel %vm1221, %v1273, 0.0
        %1278 = vadd.xlane.f32.xlu0 %v1277
        %v1279 = vpop.xlane.xlu0 %1278
        %v1280 = vrcp.pop %v1276
        %v1281 = vrcp.pop %v1279
        %v1282 = vmul.f32 %v1271, %v1280
        %v1283 = vmul.f32 %v1273, %v1281
        %v1284 = vpack.c.bf16 %v1282, %v1282
        %v1285 = vpack.c.bf16 %v1283, %v1283
        %v1287 = vsel %vm1221, %v1284, 0
        %vm1289 = vcmask 1043456
        %v1291 = vsel %vm1289, %v1219, 0
        %1293 = vmatpush.bf16.msra.mxu0 0
        %1294 = vmatpush.bf16.msra.mxu0 0
        %1295 = vmatpush.bf16.msra.mxu0 0
        %1296 = vmatpush.bf16.msra.mxu0 0
        %1297 = vmatpush.bf16.msra.mxu0 0
        %1298 = vmatpush.bf16.msra.mxu0 0
        %1299 = vmatpush.bf16.msra.mxu0 0
        %1300 = vmatpush.bf16.msra.mxu0 %v1291
        %1301 = vmatmul.bf16.gmra.mxu0 %v1287
        %v1302 = vpop.f32.mrf.mxu0
        %v1303 = vadd.f32 0.0, %v1302
        %v1304 = vpop.f32.mrf.mxu0
        %1305 = vdwg.mxu0
        %v1307 = vsel %vm1221, %v1285, 0
        %v1310 = vsel %vm1289, %v1220, 0
        %1312 = vmatpush.bf16.msra.mxu0 0
        %1313 = vmatpush.bf16.msra.mxu0 0
        %1314 = vmatpush.bf16.msra.mxu0 0
        %1315 = vmatpush.bf16.msra.mxu0 0
        %1316 = vmatpush.bf16.msra.mxu0 0
        %1317 = vmatpush.bf16.msra.mxu0 0
        %1318 = vmatpush.bf16.msra.mxu0 0
        %1319 = vmatpush.bf16.msra.mxu0 %v1310
        %1320 = vmatmul.bf16.gmra.mxu0 %v1307
        %v1321 = vpop.f32.mrf.mxu0
        %v1322 = vadd.f32 0.0, %v1321
        %v1323 = vpop.f32.mrf.mxu0
        %1324 = vdwg.mxu0
        %v1325 = vpack.c.bf16 %v1322, %v1303
        %v1327 = vunpack.c.l.b16 %v1215
        %v1328 = vpack.c.b16 %v1327, %v1327
        %1329 = vrot.lane.b32.xlu0 %v1328, 120
        %v1330 = vpop.permute.xlu0 %1329
        %v1332 = vunpack.c.l.b16 %v1217
        %v1333 = vpack.c.b16 %v1332, %v1332
        %1334 = vrot.lane.b32.xlu0 %v1333, 120
        %v1335 = vpop.permute.xlu0 %1334
        %v1337 = vsel %vm1221, %v1330, 0
        %v1340 = vsel %vm1221, %v1335, 0
        %1342 = vmatpush.bf16.xpose.msra.mxu0 0
        %1343 = vmatpush.bf16.xpose.msra.mxu0 0
        %1344 = vmatpush.bf16.xpose.msra.mxu0 0
        %1345 = vmatpush.bf16.xpose.msra.mxu0 0
        %1346 = vmatpush.bf16.xpose.msra.mxu0 0
        %1347 = vmatpush.bf16.xpose.msra.mxu0 0
        %1348 = vmatpush.bf16.xpose.msra.mxu0 0
        %1349 = vmatpush.bf16.xpose.msra.mxu0 %v1340
        %1350 = vmatmul.bf16.gmra.mxu0 %v1337
        %v1351 = vpop.f32.mrf.mxu0
        %v1352 = vadd.f32 0.0, %v1351
        %v1353 = vpop.f32.mrf.mxu0
        %1354 = vdwg.mxu0
        %v1356 = vunpack.c.l.b16 %v1216
        %v1357 = vpack.c.b16 %v1356, %v1356
        %1358 = vrot.lane.b32.xlu0 %v1357, 120
        %v1359 = vpop.permute.xlu0 %1358
        %v1361 = vunpack.c.l.b16 %v1218
        %v1362 = vpack.c.b16 %v1361, %v1361
        %1363 = vrot.lane.b32.xlu0 %v1362, 120
        %v1364 = vpop.permute.xlu0 %1363
        %v1366 = vsel %vm1221, %v1359, 0
        %v1369 = vsel %vm1221, %v1364, 0
        %1371 = vmatpush.bf16.xpose.msra.mxu0 0
        %1372 = vmatpush.bf16.xpose.msra.mxu0 0
        %1373 = vmatpush.bf16.xpose.msra.mxu0 0
        %1374 = vmatpush.bf16.xpose.msra.mxu0 0
        %1375 = vmatpush.bf16.xpose.msra.mxu0 0
        %1376 = vmatpush.bf16.xpose.msra.mxu0 0
        %1377 = vmatpush.bf16.xpose.msra.mxu0 0
        %1378 = vmatpush.bf16.xpose.msra.mxu0 %v1369
        %1379 = vmatmul.bf16.gmra.mxu0 %v1366
        %v1380 = vpop.f32.mrf.mxu0
        %v1381 = vadd.f32 0.0, %v1380
        %v1382 = vpop.f32.mrf.mxu0
        %1383 = vdwg.mxu0
        %v1384 = vsel %vm1069, %v1352, -10000.0
        %v1385 = vsel %vm1070, %v1381, -10000.0
        %v1386 = vsel %vm1221, %v1384, -inf
        %1387 = vmax.xlane.f32.xlu0 %v1386
        %v1388 = vpop.xlane.xlu0 %1387
        %v1389 = vsel %vm1221, %v1385, -inf
        %1390 = vmax.xlane.f32.xlu0 %v1389
        %v1391 = vpop.xlane.xlu0 %1390
        %v1392 = vsub.f32 %v1384, %v1388
        %v1393 = vsub.f32 %v1385, %v1391
        %v1394 = vmul.f32 %v1392, 1.442695
        %v1395 = vpow.pop %v1394
        %v1396 = vmul.f32 %v1393, 1.442695
        %v1397 = vpow.pop %v1396
        %v1398 = vsel %vm1221, %v1395, 0.0
        %1399 = vadd.xlane.f32.xlu0 %v1398
        %v1400 = vpop.xlane.xlu0 %1399
        %v1401 = vsel %vm1221, %v1397, 0.0
        %1402 = vadd.xlane.f32.xlu0 %v1401
        %v1403 = vpop.xlane.xlu0 %1402
        %v1404 = vrcp.pop %v1400
        %v1405 = vrcp.pop %v1403
        %v1406 = vmul.f32 %v1395, %v1404
        %v1407 = vmul.f32 %v1397, %v1405
        %v1408 = vpack.c.bf16 %v1406, %v1406
        %v1409 = vpack.c.bf16 %v1407, %v1407
        %v1411 = vunpack.c.l.b16 %v1219
        %v1412 = vpack.c.b16 %v1411, %v1411
        %1413 = vrot.lane.b32.xlu0 %v1412, 120
        %v1414 = vpop.permute.xlu0 %1413
        %v1416 = vsel %vm1221, %v1408, 0
        %v1419 = vsel %vm1289, %v1414, 0
        %1421 = vmatpush.bf16.msra.mxu0 0
        %1422 = vmatpush.bf16.msra.mxu0 0
        %1423 = vmatpush.bf16.msra.mxu0 0
        %1424 = vmatpush.bf16.msra.mxu0 0
        %1425 = vmatpush.bf16.msra.mxu0 0
        %1426 = vmatpush.bf16.msra.mxu0 0
        %1427 = vmatpush.bf16.msra.mxu0 0
        %1428 = vmatpush.bf16.msra.mxu0 %v1419
        %1429 = vmatmul.bf16.gmra.mxu0 %v1416
        %v1430 = vpop.f32.mrf.mxu0
        %v1431 = vadd.f32 0.0, %v1430
        %v1432 = vpop.f32.mrf.mxu0
        %1433 = vdwg.mxu0
        %v1435 = vunpack.c.l.b16 %v1220
        %v1436 = vpack.c.b16 %v1435, %v1435
        %1437 = vrot.lane.b32.xlu0 %v1436, 120
        %v1438 = vpop.permute.xlu0 %1437
        %v1440 = vsel %vm1221, %v1409, 0
        %v1443 = vsel %vm1289, %v1438, 0
        %1445 = vmatpush.bf16.msra.mxu0 0
        %1446 = vmatpush.bf16.msra.mxu0 0
        %1447 = vmatpush.bf16.msra.mxu0 0
        %1448 = vmatpush.bf16.msra.mxu0 0
        %1449 = vmatpush.bf16.msra.mxu0 0
        %1450 = vmatpush.bf16.msra.mxu0 0
        %1451 = vmatpush.bf16.msra.mxu0 0
        %1452 = vmatpush.bf16.msra.mxu0 %v1443
        %1453 = vmatmul.bf16.gmra.mxu0 %v1440
        %v1454 = vpop.f32.mrf.mxu0
        %v1455 = vadd.f32 0.0, %v1454
        %v1456 = vpop.f32.mrf.mxu0
        %1457 = vdwg.mxu0
        %v1458 = vpack.c.bf16 %v1455, %v1431
        %v1460 = vsel %vm1221, %v1458, 0
        %v1463 = vsel %vm1289, %v1089, 0
        %1465 = vmatpush.bf16.msra.mxu0 0
        %1466 = vmatpush.bf16.msra.mxu0 0
        %1467 = vmatpush.bf16.msra.mxu0 0
        %1468 = vmatpush.bf16.msra.mxu0 0
        %1469 = vmatpush.bf16.msra.mxu0 0
        %1470 = vmatpush.bf16.msra.mxu0 0
        %1471 = vmatpush.bf16.msra.mxu0 0
        %1472 = vmatpush.bf16.msra.mxu0 %v1463
        %1473 = vmatmul.bf16.gmra.mxu0 %v1460
        %v1474 = vpop.f32.mrf.mxu0
        %v1475 = vadd.f32 0.0, %v1474
        %v1476 = vpop.f32.mrf.mxu0
        %v1477 = vadd.f32 0.0, %v1476
        %1478 = vdwg.mxu0
        %v1480 = vsel %vm1221, %v1325, 0
        %v1483 = vsel %vm1289, %v1088, 0
        %1485 = vmatpush.bf16.msra.mxu0 0
        %1486 = vmatpush.bf16.msra.mxu0 0
        %1487 = vmatpush.bf16.msra.mxu0 0
        %1488 = vmatpush.bf16.msra.mxu0 0
        %1489 = vmatpush.bf16.msra.mxu0 0
        %1490 = vmatpush.bf16.msra.mxu0 0
        %1491 = vmatpush.bf16.msra.mxu0 0
        %1492 = vmatpush.bf16.msra.mxu0 %v1483
        %1493 = vmatmul.bf16.gmra.mxu0 %v1480
        %v1494 = vpop.f32.mrf.mxu0
        %v1495 = vadd.f32 %v1475, %v1494
        %v1496 = vpop.f32.mrf.mxu0
        %v1497 = vadd.f32 %v1477, %v1496
        %1498 = vdwg.mxu0
        %1499 = vrot.lane.b32.xlu0 %v1328, 112
        %v1500 = vpop.permute.xlu0 %1499
        %1501 = vrot.lane.b32.xlu0 %v1333, 112
        %v1502 = vpop.permute.xlu0 %1501
        %v1504 = vsel %vm1221, %v1500, 0
        %v1507 = vsel %vm1221, %v1502, 0
        %1509 = vmatpush.bf16.xpose.msra.mxu0 0
        %1510 = vmatpush.bf16.xpose.msra.mxu0 0
        %1511 = vmatpush.bf16.xpose.msra.mxu0 0
        %1512 = vmatpush.bf16.xpose.msra.mxu0 0
        %1513 = vmatpush.bf16.xpose.msra.mxu0 0
        %1514 = vmatpush.bf16.xpose.msra.mxu0 0
        %1515 = vmatpush.bf16.xpose.msra.mxu0 0
        %1516 = vmatpush.bf16.xpose.msra.mxu0 %v1507
        %1517 = vmatmul.bf16.gmra.mxu0 %v1504
        %v1518 = vpop.f32.mrf.mxu0
        %v1519 = vadd.f32 0.0, %v1518
        %v1520 = vpop.f32.mrf.mxu0
        %1521 = vdwg.mxu0
        %1522 = vrot.lane.b32.xlu0 %v1357, 112
        %v1523 = vpop.permute.xlu0 %1522
        %1524 = vrot.lane.b32.xlu0 %v1362, 112
        %v1525 = vpop.permute.xlu0 %1524
        %v1527 = vsel %vm1221, %v1523, 0
        %v1530 = vsel %vm1221, %v1525, 0
        %1532 = vmatpush.bf16.xpose.msra.mxu0 0
        %1533 = vmatpush.bf16.xpose.msra.mxu0 0
        %1534 = vmatpush.bf16.xpose.msra.mxu0 0
        %1535 = vmatpush.bf16.xpose.msra.mxu0 0
        %1536 = vmatpush.bf16.xpose.msra.mxu0 0
        %1537 = vmatpush.bf16.xpose.msra.mxu0 0
        %1538 = vmatpush.bf16.xpose.msra.mxu0 0
        %1539 = vmatpush.bf16.xpose.msra.mxu0 %v1530
        %1540 = vmatmul.bf16.gmra.mxu0 %v1527
        %v1541 = vpop.f32.mrf.mxu0
        %v1542 = vadd.f32 0.0, %v1541
        %v1543 = vpop.f32.mrf.mxu0
        %1544 = vdwg.mxu0
        %v1545 = vsel %vm1069, %v1519, -10000.0
        %v1546 = vsel %vm1070, %v1542, -10000.0
        %v1547 = vsel %vm1221, %v1545, -inf
        %1548 = vmax.xlane.f32.xlu0 %v1547
        %v1549 = vpop.xlane.xlu0 %1548
        %v1550 = vsel %vm1221, %v1546, -inf
        %1551 = vmax.xlane.f32.xlu0 %v1550
        %v1552 = vpop.xlane.xlu0 %1551
        %v1553 = vsub.f32 %v1545, %v1549
        %v1554 = vsub.f32 %v1546, %v1552
        %v1555 = vmul.f32 %v1553, 1.442695
        %v1556 = vpow.pop %v1555
        %v1557 = vmul.f32 %v1554, 1.442695
        %v1558 = vpow.pop %v1557
        %v1559 = vsel %vm1221, %v1556, 0.0
        %1560 = vadd.xlane.f32.xlu0 %v1559
        %v1561 = vpop.xlane.xlu0 %1560
        %v1562 = vsel %vm1221, %v1558, 0.0
        %1563 = vadd.xlane.f32.xlu0 %v1562
        %v1564 = vpop.xlane.xlu0 %1563
        %v1565 = vrcp.pop %v1561
        %v1566 = vrcp.pop %v1564
        %v1567 = vmul.f32 %v1556, %v1565
        %v1568 = vmul.f32 %v1558, %v1566
        %v1569 = vpack.c.bf16 %v1567, %v1567
        %v1570 = vpack.c.bf16 %v1568, %v1568
        %1571 = vrot.lane.b32.xlu0 %v1412, 112
        %v1572 = vpop.permute.xlu0 %1571
        %v1574 = vsel %vm1221, %v1569, 0
        %v1577 = vsel %vm1289, %v1572, 0
        %1579 = vmatpush.bf16.msra.mxu0 0
        %1580 = vmatpush.bf16.msra.mxu0 0
        %1581 = vmatpush.bf16.msra.mxu0 0
        %1582 = vmatpush.bf16.msra.mxu0 0
        %1583 = vmatpush.bf16.msra.mxu0 0
        %1584 = vmatpush.bf16.msra.mxu0 0
        %1585 = vmatpush.bf16.msra.mxu0 0
        %1586 = vmatpush.bf16.msra.mxu0 %v1577
        %1587 = vmatmul.bf16.gmra.mxu0 %v1574
        %v1588 = vpop.f32.mrf.mxu0
        %v1589 = vadd.f32 0.0, %v1588
        %v1590 = vpop.f32.mrf.mxu0
        %1591 = vdwg.mxu0
        %1592 = vrot.lane.b32.xlu0 %v1436, 112
        %v1593 = vpop.permute.xlu0 %1592
        %v1595 = vsel %vm1221, %v1570, 0
        %v1598 = vsel %vm1289, %v1593, 0
        %1600 = vmatpush.bf16.msra.mxu0 0
        %1601 = vmatpush.bf16.msra.mxu0 0
        %1602 = vmatpush.bf16.msra.mxu0 0
        %1603 = vmatpush.bf16.msra.mxu0 0
        %1604 = vmatpush.bf16.msra.mxu0 0
        %1605 = vmatpush.bf16.msra.mxu0 0
        %1606 = vmatpush.bf16.msra.mxu0 0
        %1607 = vmatpush.bf16.msra.mxu0 %v1598
        %1608 = vmatmul.bf16.gmra.mxu0 %v1595
        %v1609 = vpop.f32.mrf.mxu0
        %v1610 = vadd.f32 0.0, %v1609
        %v1611 = vpop.f32.mrf.mxu0
        %1612 = vdwg.mxu0
        %v1613 = vpack.c.bf16 %v1610, %v1589
        %v1615 = vsel %vm1221, %v1613, 0
        %v1618 = vsel %vm1289, %v1090, 0
        %1620 = vmatpush.bf16.msra.mxu0 0
        %1621 = vmatpush.bf16.msra.mxu0 0
        %1622 = vmatpush.bf16.msra.mxu0 0
        %1623 = vmatpush.bf16.msra.mxu0 0
        %1624 = vmatpush.bf16.msra.mxu0 0
        %1625 = vmatpush.bf16.msra.mxu0 0
        %1626 = vmatpush.bf16.msra.mxu0 0
        %1627 = vmatpush.bf16.msra.mxu0 %v1618
        %1628 = vmatmul.bf16.gmra.mxu0 %v1615
        %v1629 = vpop.f32.mrf.mxu0
        %v1630 = vadd.f32 0.0, %v1629
        %v1631 = vpop.f32.mrf.mxu0
        %v1632 = vadd.f32 0.0, %v1631
        %1633 = vdwg.mxu0
        %v1634 = vadd.f32 %v1495, %v1630
        %v1635 = vadd.f32 %v1497, %v1632
        %1636 = vrot.lane.b32.xlu0 %v1328, 104
        %v1637 = vpop.permute.xlu0 %1636
        %1638 = vrot.lane.b32.xlu0 %v1333, 104
        %v1639 = vpop.permute.xlu0 %1638
        %v1641 = vsel %vm1221, %v1637, 0
        %v1644 = vsel %vm1221, %v1639, 0
        %1646 = vmatpush.bf16.xpose.msra.mxu0 0
        %1647 = vmatpush.bf16.xpose.msra.mxu0 0
        %1648 = vmatpush.bf16.xpose.msra.mxu0 0
        %1649 = vmatpush.bf16.xpose.msra.mxu0 0
        %1650 = vmatpush.bf16.xpose.msra.mxu0 0
        %1651 = vmatpush.bf16.xpose.msra.mxu0 0
        %1652 = vmatpush.bf16.xpose.msra.mxu0 0
        %1653 = vmatpush.bf16.xpose.msra.mxu0 %v1644
        %1654 = vmatmul.bf16.gmra.mxu0 %v1641
        %v1655 = vpop.f32.mrf.mxu0
        %v1656 = vadd.f32 0.0, %v1655
        %v1657 = vpop.f32.mrf.mxu0
        %1658 = vdwg.mxu0
        %1659 = vrot.lane.b32.xlu0 %v1357, 104
        %v1660 = vpop.permute.xlu0 %1659
        %1661 = vrot.lane.b32.xlu0 %v1362, 104
        %v1662 = vpop.permute.xlu0 %1661
        %v1664 = vsel %vm1221, %v1660, 0
        %v1667 = vsel %vm1221, %v1662, 0
        %1669 = vmatpush.bf16.xpose.msra.mxu0 0
        %1670 = vmatpush.bf16.xpose.msra.mxu0 0
        %1671 = vmatpush.bf16.xpose.msra.mxu0 0
        %1672 = vmatpush.bf16.xpose.msra.mxu0 0
        %1673 = vmatpush.bf16.xpose.msra.mxu0 0
        %1674 = vmatpush.bf16.xpose.msra.mxu0 0
        %1675 = vmatpush.bf16.xpose.msra.mxu0 0
        %1676 = vmatpush.bf16.xpose.msra.mxu0 %v1667
        %1677 = vmatmul.bf16.gmra.mxu0 %v1664
        %v1678 = vpop.f32.mrf.mxu0
        %v1679 = vadd.f32 0.0, %v1678
        %v1680 = vpop.f32.mrf.mxu0
        %1681 = vdwg.mxu0
        %v1682 = vsel %vm1069, %v1656, -10000.0
        %v1683 = vsel %vm1070, %v1679, -10000.0
        %v1684 = vsel %vm1221, %v1682, -inf
        %1685 = vmax.xlane.f32.xlu0 %v1684
        %v1686 = vpop.xlane.xlu0 %1685
        %v1687 = vsel %vm1221, %v1683, -inf
        %1688 = vmax.xlane.f32.xlu0 %v1687
        %v1689 = vpop.xlane.xlu0 %1688
        %v1690 = vsub.f32 %v1682, %v1686
        %v1691 = vsub.f32 %v1683, %v1689
        %v1692 = vmul.f32 %v1690, 1.442695
        %v1693 = vpow.pop %v1692
        %v1694 = vmul.f32 %v1691, 1.442695
        %v1695 = vpow.pop %v1694
        %v1696 = vsel %vm1221, %v1693, 0.0
        %1697 = vadd.xlane.f32.xlu0 %v1696
        %v1698 = vpop.xlane.xlu0 %1697
        %v1699 = vsel %vm1221, %v1695, 0.0
        %1700 = vadd.xlane.f32.xlu0 %v1699
        %v1701 = vpop.xlane.xlu0 %1700
        %v1702 = vrcp.pop %v1698
        %v1703 = vrcp.pop %v1701
        %v1704 = vmul.f32 %v1693, %v1702
        %v1705 = vmul.f32 %v1695, %v1703
        %v1706 = vpack.c.bf16 %v1704, %v1704
        %v1707 = vpack.c.bf16 %v1705, %v1705
        %1708 = vrot.lane.b32.xlu0 %v1412, 104
        %v1709 = vpop.permute.xlu0 %1708
        %v1711 = vsel %vm1221, %v1706, 0
        %v1714 = vsel %vm1289, %v1709, 0
        %1716 = vmatpush.bf16.msra.mxu0 0
        %1717 = vmatpush.bf16.msra.mxu0 0
        %1718 = vmatpush.bf16.msra.mxu0 0
        %1719 = vmatpush.bf16.msra.mxu0 0
        %1720 = vmatpush.bf16.msra.mxu0 0
        %1721 = vmatpush.bf16.msra.mxu0 0
        %1722 = vmatpush.bf16.msra.mxu0 0
        %1723 = vmatpush.bf16.msra.mxu0 %v1714
        %1724 = vmatmul.bf16.gmra.mxu0 %v1711
        %v1725 = vpop.f32.mrf.mxu0
        %v1726 = vadd.f32 0.0, %v1725
        %v1727 = vpop.f32.mrf.mxu0
        %1728 = vdwg.mxu0
        %1729 = vrot.lane.b32.xlu0 %v1436, 104
        %v1730 = vpop.permute.xlu0 %1729
        %v1732 = vsel %vm1221, %v1707, 0
        %v1735 = vsel %vm1289, %v1730, 0
        %1737 = vmatpush.bf16.msra.mxu0 0
        %1738 = vmatpush.bf16.msra.mxu0 0
        %1739 = vmatpush.bf16.msra.mxu0 0
        %1740 = vmatpush.bf16.msra.mxu0 0
        %1741 = vmatpush.bf16.msra.mxu0 0
        %1742 = vmatpush.bf16.msra.mxu0 0
        %1743 = vmatpush.bf16.msra.mxu0 0
        %1744 = vmatpush.bf16.msra.mxu0 %v1735
        %1745 = vmatmul.bf16.gmra.mxu0 %v1732
        %v1746 = vpop.f32.mrf.mxu0
        %v1747 = vadd.f32 0.0, %v1746
        %v1748 = vpop.f32.mrf.mxu0
        %1749 = vdwg.mxu0
        %v1750 = vpack.c.bf16 %v1747, %v1726
        %v1752 = vsel %vm1221, %v1750, 0
        %v1755 = vsel %vm1289, %v1091, 0
        %1757 = vmatpush.bf16.msra.mxu0 0
        %1758 = vmatpush.bf16.msra.mxu0 0
        %1759 = vmatpush.bf16.msra.mxu0 0
        %1760 = vmatpush.bf16.msra.mxu0 0
        %1761 = vmatpush.bf16.msra.mxu0 0
        %1762 = vmatpush.bf16.msra.mxu0 0
        %1763 = vmatpush.bf16.msra.mxu0 0
        %1764 = vmatpush.bf16.msra.mxu0 %v1755
        %1765 = vmatmul.bf16.gmra.mxu0 %v1752
        %v1766 = vpop.f32.mrf.mxu0
        %v1767 = vadd.f32 0.0, %v1766
        %v1768 = vpop.f32.mrf.mxu0
        %v1769 = vadd.f32 0.0, %v1768
        %1770 = vdwg.mxu0
        %v1771 = vadd.f32 %v1634, %v1767
        %v1772 = vadd.f32 %v1635, %v1769
        %v1774 = vperm.slane %v1092, 0
        %v1776 = vadd.f32 %v1771, %v1774
        %v1777 = vadd.f32 %v1772, %v1774
        %v1778 = vadd.f32 %v1776, %v1063
        %v1779 = vadd.f32 %v1777, %v1064
        %v1780 = vsel %vm1141, %v1778, 0.0
        %1781 = vadd.xlane.f32.xlu0 %v1780
        %v1782 = vpop.xlane.xlu0 %1781
        %v1783 = vsel %vm1141, %v1779, 0.0
        %1784 = vadd.xlane.f32.xlu0 %v1783
        %v1785 = vpop.xlane.xlu0 %1784
        %v1786 = vrcp.pop 32.0
        %v1787 = vmul.f32 32.0, %v1786
        %v1788 = vsub.f32 1.0, %v1787
        %v1789 = vmul.f32 %v1786, %v1788
        %v1790 = vadd.f32 %v1786, %v1789
        %vm1791 = vweird.f32 %v1786
        %v1792 = vsel %vm1791, %v1786, %v1790
        %v1793 = vmul.f32 %v1782, %v1792
        %v1794 = vmul.f32 %v1785, %v1792
        %v1795 = vsub.f32 %v1778, %v1793
        %v1796 = vsub.f32 %v1779, %v1794
        %v1797 = vmul.f32 %v1795, %v1795
        %v1798 = vmul.f32 %v1796, %v1796
        %v1799 = vsel %vm1141, %v1797, 0.0
        %1800 = vadd.xlane.f32.xlu0 %v1799
        %v1801 = vpop.xlane.xlu0 %1800
        %v1802 = vsel %vm1141, %v1798, 0.0
        %1803 = vadd.xlane.f32.xlu0 %v1802
        %v1804 = vpop.xlane.xlu0 %1803
        %v1805 = vmul.f32 %v1801, %v1792
        %v1806 = vmul.f32 %v1804, %v1792
        %v1807 = vadd.f32 %v1805, 1e-12
        %v1808 = vadd.f32 %v1806, 1e-12
        %v1809 = vrsqrt.pop %v1807
        %v1810 = vmul.f32 %v1809, %v1807
        %v1811 = vmul.f32 %v1810, %v1809
        %v1812 = vmul.f32 0.5, %v1811
        %v1813 = vsub.f32 1.5, %v1812
        %v1814 = vmul.f32 %v1809, %v1813
        %vm1815 = vweird.f32 %v1807
        %vm1816 = vweird.f32 %v1809
        %vm1817 = vmor %vm1815, %vm1816
        %v1818 = vsel %vm1817, %v1809, %v1814
        %v1819 = vrsqrt.pop %v1808
        %v1820 = vmul.f32 %v1819, %v1808
        %v1821 = vmul.f32 %v1820, %v1819
        %v1822 = vmul.f32 0.5, %v1821
        %v1823 = vsub.f32 1.5, %v1822
        %v1824 = vmul.f32 %v1819, %v1823
        %vm1825 = vweird.f32 %v1808
        %vm1826 = vweird.f32 %v1819
        %vm1827 = vmor %vm1825, %vm1826
        %v1828 = vsel %vm1827, %v1819, %v1824
        %v1829 = vmul.f32 %v1795, %v1818
        %v1830 = vmul.f32 %v1796, %v1828
        %v1831 = vperm.slane %v1111, 0
        %v1832 = vmul.f32 %v1829, %v1831
        %v1833 = vmul.f32 %v1830, %v1831
        %v1834 = vperm.slane %v1112, 0
        %v1835 = vadd.f32 %v1832, %v1834
        %v1836 = vadd.f32 %v1833, %v1834
        %v1837 = vpack.c.bf16 %v1836, %v1835
        %v1838 = vpack.c.bf16 %v1066, %v1065
        %v1839 = vperm.slane %v1105, 0
        %v1844 = vunpack.c.l.b16 %v1093
        %v1845 = vunpack.c.l.b16 %v1094
        %v1846 = vunpack.c.l.b16 %v1095
        %v1847 = vunpack.c.l.b16 %v1096
        %v1848 = vpack.c.b16 %v1845, %v1844
        %v1849 = vpack.c.b16 %v1847, %v1846
        %v1853 = vsel %vm1141, %v1837, 0
        %1855 = vmatpush.bf16.msra.mxu0 0
        %1856 = vmatpush.bf16.msra.mxu0 0
        %1857 = vmatpush.bf16.msra.mxu0 0
        %1858 = vmatpush.bf16.msra.mxu0 0
        %1859 = vmatpush.bf16.msra.mxu0 0
        %1860 = vmatpush.bf16.msra.mxu0 0
        %1861 = vmatpush.bf16.msra.mxu0 %v1849
        %1862 = vmatpush.bf16.msra.mxu0 %v1848
        %1863 = vmatmul.bf16.gmra.mxu0 %v1853
        %v1864 = vpop.f32.mrf.mxu0
        %v1865 = vadd.f32 %v1839, %v1864
        %v1866 = vpop.f32.mrf.mxu0
        %v1867 = vadd.f32 %v1839, %v1866
        %1868 = vdwg.mxu0
        %v1869 = vperm.slane %v1105, 1
        %v1874 = vunpack.c.l.b16 %v1097
        %v1875 = vunpack.c.l.b16 %v1098
        %v1876 = vunpack.c.l.b16 %v1099
        %v1877 = vunpack.c.l.b16 %v1100
        %v1878 = vpack.c.b16 %v1875, %v1874
        %v1879 = vpack.c.b16 %v1877, %v1876
        %v1883 = vsel %vm1141, %v1838, 0
        %1885 = vmatpush.bf16.msra.mxu0 0
        %1886 = vmatpush.bf16.msra.mxu0 0
        %1887 = vmatpush.bf16.msra.mxu0 0
        %1888 = vmatpush.bf16.msra.mxu0 0
        %1889 = vmatpush.bf16.msra.mxu0 0
        %1890 = vmatpush.bf16.msra.mxu0 0
        %1891 = vmatpush.bf16.msra.mxu0 %v1879
        %1892 = vmatpush.bf16.msra.mxu0 %v1878
        %1893 = vmatmul.bf16.gmra.mxu0 %v1883
        %v1894 = vpop.f32.mrf.mxu0
        %v1895 = vadd.f32 %v1869, %v1894
        %v1896 = vpop.f32.mrf.mxu0
        %v1897 = vadd.f32 %v1869, %v1896
        %1898 = vdwg.mxu0
        %v1899 = vperm.slane %v1105, 2
        %v1904 = vunpack.c.l.b16 %v1101
        %v1905 = vunpack.c.l.b16 %v1102
        %v1906 = vunpack.c.l.b16 %v1103
        %v1907 = vunpack.c.l.b16 %v1104
        %v1908 = vpack.c.b16 %v1905, %v1904
        %v1909 = vpack.c.b16 %v1907, %v1906
        %1912 = vmatpush.bf16.msra.mxu0 0
        %1913 = vmatpush.bf16.msra.mxu0 0
        %1914 = vmatpush.bf16.msra.mxu0 0
        %1915 = vmatpush.bf16.msra.mxu0 0
        %1916 = vmatpush.bf16.msra.mxu0 0
        %1917 = vmatpush.bf16.msra.mxu0 0
        %1918 = vmatpush.bf16.msra.mxu0 %v1909
        %1919 = vmatpush.bf16.msra.mxu0 %v1908
        %1920 = vmatmul.bf16.gmra.mxu0 %v1883
        %v1921 = vpop.f32.mrf.mxu0
        %v1922 = vadd.f32 %v1899, %v1921
        %v1923 = vpop.f32.mrf.mxu0
        %v1924 = vadd.f32 %v1899, %v1923
        %1925 = vdwg.mxu0
        %v1926 = vmul.f32 %v1865, 0.35355338
        %v1927 = vmul.f32 %v1867, 0.35355338
        %v1928 = vpack.c.bf16 %v1926, %v1926
        %v1929 = vpack.c.bf16 %v1927, %v1927
        %v1930 = vpack.c.bf16 %v1895, %v1895
        %v1931 = vpack.c.bf16 %v1897, %v1897
        %v1932 = vpack.c.bf16 %v1922, %v1922
        %v1933 = vpack.c.bf16 %v1924, %v1924
        %v1935 = vsel %vm1221, %v1928, 0
        %v1938 = vsel %vm1221, %v1930, 0
        %1940 = vmatpush.bf16.xpose.msra.mxu0 0
        %1941 = vmatpush.bf16.xpose.msra.mxu0 0
        %1942 = vmatpush.bf16.xpose.msra.mxu0 0
        %1943 = vmatpush.bf16.xpose.msra.mxu0 0
        %1944 = vmatpush.bf16.xpose.msra.mxu0 0
        %1945 = vmatpush.bf16.xpose.msra.mxu0 0
        %1946 = vmatpush.bf16.xpose.msra.mxu0 0
        %1947 = vmatpush.bf16.xpose.msra.mxu0 %v1938
        %1948 = vmatmul.bf16.gmra.mxu0 %v1935
        %v1949 = vpop.f32.mrf.mxu0
        %v1950 = vadd.f32 0.0, %v1949
        %v1951 = vpop.f32.mrf.mxu0
        %1952 = vdwg.mxu0
        %v1954 = vsel %vm1221, %v1929, 0
        %v1957 = vsel %vm1221, %v1931, 0
        %1959 = vmatpush.bf16.xpose.msra.mxu0 0
        %1960 = vmatpush.bf16.xpose.msra.mxu0 0
        %1961 = vmatpush.bf16.xpose.msra.mxu0 0
        %1962 = vmatpush.bf16.xpose.msra.mxu0 0
        %1963 = vmatpush.bf16.xpose.msra.mxu0 0
        %1964 = vmatpush.bf16.xpose.msra.mxu0 0
        %1965 = vmatpush.bf16.xpose.msra.mxu0 0
        %1966 = vmatpush.bf16.xpose.msra.mxu0 %v1957
        %1967 = vmatmul.bf16.gmra.mxu0 %v1954
        %v1968 = vpop.f32.mrf.mxu0
        %v1969 = vadd.f32 0.0, %v1968
        %v1970 = vpop.f32.mrf.mxu0
        %1971 = vdwg.mxu0
        %v1972 = vsel %vm1073, 1, 0
        %v1973 = vsel %vm1074, 1, 0
        %v1974 = vperm.slane %v1972, 0
        %v1975 = vperm.slane %v1973, 0
        %vm1976 = vcmp.eq.s32.totalorder %v1974, 1
        %vm1977 = vcmp.eq.s32.totalorder %v1975, 1
        %v1978 = vsel %vm1976, %v1950, -10000.0
        %v1979 = vsel %vm1977, %v1969, -10000.0
        %v1980 = vsel %vm1221, %v1978, -inf
        %1981 = vmax.xlane.f32.xlu0 %v1980
        %v1982 = vpop.xlane.xlu0 %1981
        %v1983 = vsel %vm1221, %v1979, -inf
        %1984 = vmax.xlane.f32.xlu0 %v1983
        %v1985 = vpop.xlane.xlu0 %1984
        %v1986 = vsub.f32 %v1978, %v1982
        %v1987 = vsub.f32 %v1979, %v1985
        %v1988 = vmul.f32 %v1986, 1.442695
        %v1989 = vpow.pop %v1988
        %v1990 = vmul.f32 %v1987, 1.442695
        %v1991 = vpow.pop %v1990
        %v1992 = vsel %vm1221, %v1989, 0.0
        %1993 = vadd.xlane.f32.xlu0 %v1992
        %v1994 = vpop.xlane.xlu0 %1993
        %v1995 = vsel %vm1221, %v1991, 0.0
        %1996 = vadd.xlane.f32.xlu0 %v1995
        %v1997 = vpop.xlane.xlu0 %1996
        %v1998 = vrcp.pop %v1994
        %v1999 = vrcp.pop %v1997
        %v2000 = vmul.f32 %v1989, %v1998
        %v2001 = vmul.f32 %v1991, %v1999
        %v2002 = vpack.c.bf16 %v2000, %v2000
        %v2003 = vpack.c.bf16 %v2001, %v2001
        %v2005 = vsel %vm1221, %v2002, 0
        %v2008 = vsel %vm1289, %v1932, 0
        %2010 = vmatpush.bf16.msra.mxu0 0
        %2011 = vmatpush.bf16.msra.mxu0 0
        %2012 = vmatpush.bf16.msra.mxu0 0
        %2013 = vmatpush.bf16.msra.mxu0 0
        %2014 = vmatpush.bf16.msra.mxu0 0
        %2015 = vmatpush.bf16.msra.mxu0 0
        %2016 = vmatpush.bf16.msra.mxu0 0
        %2017 = vmatpush.bf16.msra.mxu0 %v2008
        %2018 = vmatmul.bf16.gmra.mxu0 %v2005
        %v2019 = vpop.f32.mrf.mxu0
        %v2020 = vadd.f32 0.0, %v2019
        %v2021 = vpop.f32.mrf.mxu0
        %2022 = vdwg.mxu0
        %v2024 = vsel %vm1221, %v2003, 0
        %v2027 = vsel %vm1289, %v1933, 0
        %2029 = vmatpush.bf16.msra.mxu0 0
        %2030 = vmatpush.bf16.msra.mxu0 0
        %2031 = vmatpush.bf16.msra.mxu0 0
        %2032 = vmatpush.bf16.msra.mxu0 0
        %2033 = vmatpush.bf16.msra.mxu0 0
        %2034 = vmatpush.bf16.msra.mxu0 0
        %2035 = vmatpush.bf16.msra.mxu0 0
        %2036 = vmatpush.bf16.msra.mxu0 %v2027
        %2037 = vmatmul.bf16.gmra.mxu0 %v2024
        %v2038 = vpop.f32.mrf.mxu0
        %v2039 = vadd.f32 0.0, %v2038
        %v2040 = vpop.f32.mrf.mxu0
        %2041 = vdwg.mxu0
        %v2042 = vpack.c.bf16 %v2039, %v2020
        %v2044 = vunpack.c.l.b16 %v1928
        %v2045 = vpack.c.b16 %v2044, %v2044
        %2046 = vrot.lane.b32.xlu0 %v2045, 120
        %v2047 = vpop.permute.xlu0 %2046
        %v2049 = vunpack.c.l.b16 %v1930
        %v2050 = vpack.c.b16 %v2049, %v2049
        %2051 = vrot.lane.b32.xlu0 %v2050, 120
        %v2052 = vpop.permute.xlu0 %2051
        %v2054 = vsel %vm1221, %v2047, 0
        %v2057 = vsel %vm1221, %v2052, 0
        %2059 = vmatpush.bf16.xpose.msra.mxu0 0
        %2060 = vmatpush.bf16.xpose.msra.mxu0 0
        %2061 = vmatpush.bf16.xpose.msra.mxu0 0
        %2062 = vmatpush.bf16.xpose.msra.mxu0 0
        %2063 = vmatpush.bf16.xpose.msra.mxu0 0
        %2064 = vmatpush.bf16.xpose.msra.mxu0 0
        %2065 = vmatpush.bf16.xpose.msra.mxu0 0
        %2066 = vmatpush.bf16.xpose.msra.mxu0 %v2057
        %2067 = vmatmul.bf16.gmra.mxu0 %v2054
        %v2068 = vpop.f32.mrf.mxu0
        %v2069 = vadd.f32 0.0, %v2068
        %v2070 = vpop.f32.mrf.mxu0
        %2071 = vdwg.mxu0
        %v2073 = vunpack.c.l.b16 %v1929
        %v2074 = vpack.c.b16 %v2073, %v2073
        %2075 = vrot.lane.b32.xlu0 %v2074, 120
        %v2076 = vpop.permute.xlu0 %2075
        %v2078 = vunpack.c.l.b16 %v1931
        %v2079 = vpack.c.b16 %v2078, %v2078
        %2080 = vrot.lane.b32.xlu0 %v2079, 120
        %v2081 = vpop.permute.xlu0 %2080
        %v2083 = vsel %vm1221, %v2076, 0
        %v2086 = vsel %vm1221, %v2081, 0
        %2088 = vmatpush.bf16.xpose.msra.mxu0 0
        %2089 = vmatpush.bf16.xpose.msra.mxu0 0
        %2090 = vmatpush.bf16.xpose.msra.mxu0 0
        %2091 = vmatpush.bf16.xpose.msra.mxu0 0
        %2092 = vmatpush.bf16.xpose.msra.mxu0 0
        %2093 = vmatpush.bf16.xpose.msra.mxu0 0
        %2094 = vmatpush.bf16.xpose.msra.mxu0 0
        %2095 = vmatpush.bf16.xpose.msra.mxu0 %v2086
        %2096 = vmatmul.bf16.gmra.mxu0 %v2083
        %v2097 = vpop.f32.mrf.mxu0
        %v2098 = vadd.f32 0.0, %v2097
        %v2099 = vpop.f32.mrf.mxu0
        %2100 = vdwg.mxu0
        %v2101 = vsel %vm1976, %v2069, -10000.0
        %v2102 = vsel %vm1977, %v2098, -10000.0
        %v2103 = vsel %vm1221, %v2101, -inf
        %2104 = vmax.xlane.f32.xlu0 %v2103
        %v2105 = vpop.xlane.xlu0 %2104
        %v2106 = vsel %vm1221, %v2102, -inf
        %2107 = vmax.xlane.f32.xlu0 %v2106
        %v2108 = vpop.xlane.xlu0 %2107
        %v2109 = vsub.f32 %v2101, %v2105
        %v2110 = vsub.f32 %v2102, %v2108
        %v2111 = vmul.f32 %v2109, 1.442695
        %v2112 = vpow.pop %v2111
        %v2113 = vmul.f32 %v2110, 1.442695
        %v2114 = vpow.pop %v2113
        %v2115 = vsel %vm1221, %v2112, 0.0
        %2116 = vadd.xlane.f32.xlu0 %v2115
        %v2117 = vpop.xlane.xlu0 %2116
        %v2118 = vsel %vm1221, %v2114, 0.0
        %2119 = vadd.xlane.f32.xlu0 %v2118
        %v2120 = vpop.xlane.xlu0 %2119
        %v2121 = vrcp.pop %v2117
        %v2122 = vrcp.pop %v2120
        %v2123 = vmul.f32 %v2112, %v2121
        %v2124 = vmul.f32 %v2114, %v2122
        %v2125 = vpack.c.bf16 %v2123, %v2123
        %v2126 = vpack.c.bf16 %v2124, %v2124
        %v2128 = vunpack.c.l.b16 %v1932
        %v2129 = vpack.c.b16 %v2128, %v2128
        %2130 = vrot.lane.b32.xlu0 %v2129, 120
        %v2131 = vpop.permute.xlu0 %2130
        %v2133 = vsel %vm1221, %v2125, 0
        %v2136 = vsel %vm1289, %v2131, 0
        %2138 = vmatpush.bf16.msra.mxu0 0
        %2139 = vmatpush.bf16.msra.mxu0 0
        %2140 = vmatpush.bf16.msra.mxu0 0
        %2141 = vmatpush.bf16.msra.mxu0 0
        %2142 = vmatpush.bf16.msra.mxu0 0
        %2143 = vmatpush.bf16.msra.mxu0 0
        %2144 = vmatpush.bf16.msra.mxu0 0
        %2145 = vmatpush.bf16.msra.mxu0 %v2136
        %2146 = vmatmul.bf16.gmra.mxu0 %v2133
        %v2147 = vpop.f32.mrf.mxu0
        %v2148 = vadd.f32 0.0, %v2147
        %v2149 = vpop.f32.mrf.mxu0
        %2150 = vdwg.mxu0
        %v2152 = vunpack.c.l.b16 %v1933
        %v2153 = vpack.c.b16 %v2152, %v2152
        %2154 = vrot.lane.b32.xlu0 %v2153, 120
        %v2155 = vpop.permute.xlu0 %2154
        %v2157 = vsel %vm1221, %v2126, 0
        %v2160 = vsel %vm1289, %v2155, 0
        %2162 = vmatpush.bf16.msra.mxu0 0
        %2163 = vmatpush.bf16.msra.mxu0 0
        %2164 = vmatpush.bf16.msra.mxu0 0
        %2165 = vmatpush.bf16.msra.mxu0 0
        %2166 = vmatpush.bf16.msra.mxu0 0
        %2167 = vmatpush.bf16.msra.mxu0 0
        %2168 = vmatpush.bf16.msra.mxu0 0
        %2169 = vmatpush.bf16.msra.mxu0 %v2160
        %2170 = vmatmul.bf16.gmra.mxu0 %v2157
        %v2171 = vpop.f32.mrf.mxu0
        %v2172 = vadd.f32 0.0, %v2171
        %v2173 = vpop.f32.mrf.mxu0
        %2174 = vdwg.mxu0
        %v2175 = vpack.c.bf16 %v2172, %v2148
        %v2177 = vsel %vm1221, %v2175, 0
        %v2180 = vsel %vm1289, %v1107, 0
        %2182 = vmatpush.bf16.msra.mxu0 0
        %2183 = vmatpush.bf16.msra.mxu0 0
        %2184 = vmatpush.bf16.msra.mxu0 0
        %2185 = vmatpush.bf16.msra.mxu0 0
        %2186 = vmatpush.bf16.msra.mxu0 0
        %2187 = vmatpush.bf16.msra.mxu0 0
        %2188 = vmatpush.bf16.msra.mxu0 0
        %2189 = vmatpush.bf16.msra.mxu0 %v2180
        %2190 = vmatmul.bf16.gmra.mxu0 %v2177
        %v2191 = vpop.f32.mrf.mxu0
        %v2192 = vadd.f32 0.0, %v2191
        %v2193 = vpop.f32.mrf.mxu0
        %v2194 = vadd.f32 0.0, %v2193
        %2195 = vdwg.mxu0
        %v2197 = vsel %vm1221, %v2042, 0
        %v2200 = vsel %vm1289, %v1106, 0
        %2202 = vmatpush.bf16.msra.mxu0 0
        %2203 = vmatpush.bf16.msra.mxu0 0
        %2204 = vmatpush.bf16.msra.mxu0 0
        %2205 = vmatpush.bf16.msra.mxu0 0
        %2206 = vmatpush.bf16.msra.mxu0 0
        %2207 = vmatpush.bf16.msra.mxu0 0
        %2208 = vmatpush.bf16.msra.mxu0 0
        %2209 = vmatpush.bf16.msra.mxu0 %v2200
        %2210 = vmatmul.bf16.gmra.mxu0 %v2197
        %v2211 = vpop.f32.mrf.mxu0
        %v2212 = vadd.f32 %v2192, %v2211
        %v2213 = vpop.f32.mrf.mxu0
        %v2214 = vadd.f32 %v2194, %v2213
        %2215 = vdwg.mxu0
        %2216 = vrot.lane.b32.xlu0 %v2045, 112
        %v2217 = vpop.permute.xlu0 %2216
        %2218 = vrot.lane.b32.xlu0 %v2050, 112
        %v2219 = vpop.permute.xlu0 %2218
        %v2221 = vsel %vm1221, %v2217, 0
        %v2224 = vsel %vm1221, %v2219, 0
        %2226 = vmatpush.bf16.xpose.msra.mxu0 0
        %2227 = vmatpush.bf16.xpose.msra.mxu0 0
        %2228 = vmatpush.bf16.xpose.msra.mxu0 0
        %2229 = vmatpush.bf16.xpose.msra.mxu0 0
        %2230 = vmatpush.bf16.xpose.msra.mxu0 0
        %2231 = vmatpush.bf16.xpose.msra.mxu0 0
        %2232 = vmatpush.bf16.xpose.msra.mxu0 0
        %2233 = vmatpush.bf16.xpose.msra.mxu0 %v2224
        %2234 = vmatmul.bf16.gmra.mxu0 %v2221
        %v2235 = vpop.f32.mrf.mxu0
        %v2236 = vadd.f32 0.0, %v2235
        %v2237 = vpop.f32.mrf.mxu0
        %2238 = vdwg.mxu0
        %2239 = vrot.lane.b32.xlu0 %v2074, 112
        %v2240 = vpop.permute.xlu0 %2239
        %2241 = vrot.lane.b32.xlu0 %v2079, 112
        %v2242 = vpop.permute.xlu0 %2241
        %v2244 = vsel %vm1221, %v2240, 0
        %v2247 = vsel %vm1221, %v2242, 0
        %2249 = vmatpush.bf16.xpose.msra.mxu0 0
        %2250 = vmatpush.bf16.xpose.msra.mxu0 0
        %2251 = vmatpush.bf16.xpose.msra.mxu0 0
        %2252 = vmatpush.bf16.xpose.msra.mxu0 0
        %2253 = vmatpush.bf16.xpose.msra.mxu0 0
        %2254 = vmatpush.bf16.xpose.msra.mxu0 0
        %2255 = vmatpush.bf16.xpose.msra.mxu0 0
        %2256 = vmatpush.bf16.xpose.msra.mxu0 %v2247
        %2257 = vmatmul.bf16.gmra.mxu0 %v2244
        %v2258 = vpop.f32.mrf.mxu0
        %v2259 = vadd.f32 0.0, %v2258
        %v2260 = vpop.f32.mrf.mxu0
        %2261 = vdwg.mxu0
        %v2262 = vsel %vm1976, %v2236, -10000.0
        %v2263 = vsel %vm1977, %v2259, -10000.0
        %v2264 = vsel %vm1221, %v2262, -inf
        %2265 = vmax.xlane.f32.xlu0 %v2264
        %v2266 = vpop.xlane.xlu0 %2265
        %v2267 = vsel %vm1221, %v2263, -inf
        %2268 = vmax.xlane.f32.xlu0 %v2267
        %v2269 = vpop.xlane.xlu0 %2268
        %v2270 = vsub.f32 %v2262, %v2266
        %v2271 = vsub.f32 %v2263, %v2269
        %v2272 = vmul.f32 %v2270, 1.442695
        %v2273 = vpow.pop %v2272
        %v2274 = vmul.f32 %v2271, 1.442695
        %v2275 = vpow.pop %v2274
        %v2276 = vsel %vm1221, %v2273, 0.0
        %2277 = vadd.xlane.f32.xlu0 %v2276
        %v2278 = vpop.xlane.xlu0 %2277
        %v2279 = vsel %vm1221, %v2275, 0.0
        %2280 = vadd.xlane.f32.xlu0 %v2279
        %v2281 = vpop.xlane.xlu0 %2280
        %v2282 = vrcp.pop %v2278
        %v2283 = vrcp.pop %v2281
        %v2284 = vmul.f32 %v2273, %v2282
        %v2285 = vmul.f32 %v2275, %v2283
        %v2286 = vpack.c.bf16 %v2284, %v2284
        %v2287 = vpack.c.bf16 %v2285, %v2285
        %2288 = vrot.lane.b32.xlu0 %v2129, 112
        %v2289 = vpop.permute.xlu0 %2288
        %v2291 = vsel %vm1221, %v2286, 0
        %v2294 = vsel %vm1289, %v2289, 0
        %2296 = vmatpush.bf16.msra.mxu0 0
        %2297 = vmatpush.bf16.msra.mxu0 0
        %2298 = vmatpush.bf16.msra.mxu0 0
        %2299 = vmatpush.bf16.msra.mxu0 0
        %2300 = vmatpush.bf16.msra.mxu0 0
        %2301 = vmatpush.bf16.msra.mxu0 0
        %2302 = vmatpush.bf16.msra.mxu0 0
        %2303 = vmatpush.bf16.msra.mxu0 %v2294
        %2304 = vmatmul.bf16.gmra.mxu0 %v2291
        %v2305 = vpop.f32.mrf.mxu0
        %v2306 = vadd.f32 0.0, %v2305
        %v2307 = vpop.f32.mrf.mxu0
        %2308 = vdwg.mxu0
        %2309 = vrot.lane.b32.xlu0 %v2153, 112
        %v2310 = vpop.permute.xlu0 %2309
        %v2312 = vsel %vm1221, %v2287, 0
        %v2315 = vsel %vm1289, %v2310, 0
        %2317 = vmatpush.bf16.msra.mxu0 0
        %2318 = vmatpush.bf16.msra.mxu0 0
        %2319 = vmatpush.bf16.msra.mxu0 0
        %2320 = vmatpush.bf16.msra.mxu0 0
        %2321 = vmatpush.bf16.msra.mxu0 0
        %2322 = vmatpush.bf16.msra.mxu0 0
        %2323 = vmatpush.bf16.msra.mxu0 0
        %2324 = vmatpush.bf16.msra.mxu0 %v2315
        %2325 = vmatmul.bf16.gmra.mxu0 %v2312
        %v2326 = vpop.f32.mrf.mxu0
        %v2327 = vadd.f32 0.0, %v2326
        %v2328 = vpop.f32.mrf.mxu0
        %2329 = vdwg.mxu0
        %v2330 = vpack.c.bf16 %v2327, %v2306
        %v2332 = vsel %vm1221, %v2330, 0
        %v2335 = vsel %vm1289, %v1108, 0
        %2337 = vmatpush.bf16.msra.mxu0 0
        %2338 = vmatpush.bf16.msra.mxu0 0
        %2339 = vmatpush.bf16.msra.mxu0 0
        %2340 = vmatpush.bf16.msra.mxu0 0
        %2341 = vmatpush.bf16.msra.mxu0 0
        %2342 = vmatpush.bf16.msra.mxu0 0
        %2343 = vmatpush.bf16.msra.mxu0 0
        %2344 = vmatpush.bf16.msra.mxu0 %v2335
        %2345 = vmatmul.bf16.gmra.mxu0 %v2332
        %v2346 = vpop.f32.mrf.mxu0
        %v2347 = vadd.f32 0.0, %v2346
        %v2348 = vpop.f32.mrf.mxu0
        %v2349 = vadd.f32 0.0, %v2348
        %2350 = vdwg.mxu0
        %v2351 = vadd.f32 %v2212, %v2347
        %v2352 = vadd.f32 %v2214, %v2349
        %2353 = vrot.lane.b32.xlu0 %v2045, 104
        %v2354 = vpop.permute.xlu0 %2353
        %2355 = vrot.lane.b32.xlu0 %v2050, 104
        %v2356 = vpop.permute.xlu0 %2355
        %v2358 = vsel %vm1221, %v2354, 0
        %v2361 = vsel %vm1221, %v2356, 0
        %2363 = vmatpush.bf16.xpose.msra.mxu0 0
        %2364 = vmatpush.bf16.xpose.msra.mxu0 0
        %2365 = vmatpush.bf16.xpose.msra.mxu0 0
        %2366 = vmatpush.bf16.xpose.msra.mxu0 0
        %2367 = vmatpush.bf16.xpose.msra.mxu0 0
        %2368 = vmatpush.bf16.xpose.msra.mxu0 0
        %2369 = vmatpush.bf16.xpose.msra.mxu0 0
        %2370 = vmatpush.bf16.xpose.msra.mxu0 %v2361
        %2371 = vmatmul.bf16.gmra.mxu0 %v2358
        %v2372 = vpop.f32.mrf.mxu0
        %v2373 = vadd.f32 0.0, %v2372
        %v2374 = vpop.f32.mrf.mxu0
        %2375 = vdwg.mxu0
        %2376 = vrot.lane.b32.xlu0 %v2074, 104
        %v2377 = vpop.permute.xlu0 %2376
        %2378 = vrot.lane.b32.xlu0 %v2079, 104
        %v2379 = vpop.permute.xlu0 %2378
        %v2381 = vsel %vm1221, %v2377, 0
        %v2384 = vsel %vm1221, %v2379, 0
        %2386 = vmatpush.bf16.xpose.msra.mxu0 0
        %2387 = vmatpush.bf16.xpose.msra.mxu0 0
        %2388 = vmatpush.bf16.xpose.msra.mxu0 0
        %2389 = vmatpush.bf16.xpose.msra.mxu0 0
        %2390 = vmatpush.bf16.xpose.msra.mxu0 0
        %2391 = vmatpush.bf16.xpose.msra.mxu0 0
        %2392 = vmatpush.bf16.xpose.msra.mxu0 0
        %2393 = vmatpush.bf16.xpose.msra.mxu0 %v2384
        %2394 = vmatmul.bf16.gmra.mxu0 %v2381
        %v2395 = vpop.f32.mrf.mxu0
        %v2396 = vadd.f32 0.0, %v2395
        %v2397 = vpop.f32.mrf.mxu0
        %2398 = vdwg.mxu0
        %v2399 = vsel %vm1976, %v2373, -10000.0
        %v2400 = vsel %vm1977, %v2396, -10000.0
        %v2401 = vsel %vm1221, %v2399, -inf
        %2402 = vmax.xlane.f32.xlu0 %v2401
        %v2403 = vpop.xlane.xlu0 %2402
        %v2404 = vsel %vm1221, %v2400, -inf
        %2405 = vmax.xlane.f32.xlu0 %v2404
        %v2406 = vpop.xlane.xlu0 %2405
        %v2407 = vsub.f32 %v2399, %v2403
        %v2408 = vsub.f32 %v2400, %v2406
        %v2409 = vmul.f32 %v2407, 1.442695
        %v2410 = vpow.pop %v2409
        %v2411 = vmul.f32 %v2408, 1.442695
        %v2412 = vpow.pop %v2411
        %v2413 = vsel %vm1221, %v2410, 0.0
        %2414 = vadd.xlane.f32.xlu0 %v2413
        %v2415 = vpop.xlane.xlu0 %2414
        %v2416 = vsel %vm1221, %v2412, 0.0
        %2417 = vadd.xlane.f32.xlu0 %v2416
        %v2418 = vpop.xlane.xlu0 %2417
        %v2419 = vrcp.pop %v2415
        %v2420 = vrcp.pop %v2418
        %v2421 = vmul.f32 %v2410, %v2419
        %v2422 = vmul.f32 %v2412, %v2420
        %v2423 = vpack.c.bf16 %v2421, %v2421
        %v2424 = vpack.c.bf16 %v2422, %v2422
        %2425 = vrot.lane.b32.xlu0 %v2129, 104
        %v2426 = vpop.permute.xlu0 %2425
        %v2428 = vsel %vm1221, %v2423, 0
        %v2431 = vsel %vm1289, %v2426, 0
        %2433 = vmatpush.bf16.msra.mxu0 0
        %2434 = vmatpush.bf16.msra.mxu0 0
        %2435 = vmatpush.bf16.msra.mxu0 0
        %2436 = vmatpush.bf16.msra.mxu0 0
        %2437 = vmatpush.bf16.msra.mxu0 0
        %2438 = vmatpush.bf16.msra.mxu0 0
        %2439 = vmatpush.bf16.msra.mxu0 0
        %2440 = vmatpush.bf16.msra.mxu0 %v2431
        %2441 = vmatmul.bf16.gmra.mxu0 %v2428
        %v2442 = vpop.f32.mrf.mxu0
        %v2443 = vadd.f32 0.0, %v2442
        %v2444 = vpop.f32.mrf.mxu0
        %2445 = vdwg.mxu0
        %2446 = vrot.lane.b32.xlu0 %v2153, 104
        %v2447 = vpop.permute.xlu0 %2446
        %v2449 = vsel %vm1221, %v2424, 0
        %v2452 = vsel %vm1289, %v2447, 0
        %2454 = vmatpush.bf16.msra.mxu0 0
        %2455 = vmatpush.bf16.msra.mxu0 0
        %2456 = vmatpush.bf16.msra.mxu0 0
        %2457 = vmatpush.bf16.msra.mxu0 0
        %2458 = vmatpush.bf16.msra.mxu0 0
        %2459 = vmatpush.bf16.msra.mxu0 0
        %2460 = vmatpush.bf16.msra.mxu0 0
        %2461 = vmatpush.bf16.msra.mxu0 %v2452
        %2462 = vmatmul.bf16.gmra.mxu0 %v2449
        %v2463 = vpop.f32.mrf.mxu0
        %v2464 = vadd.f32 0.0, %v2463
        %v2465 = vpop.f32.mrf.mxu0
        %2466 = vdwg.mxu0
        %v2467 = vpack.c.bf16 %v2464, %v2443
        %v2469 = vsel %vm1221, %v2467, 0
        %v2472 = vsel %vm1289, %v1109, 0
        %2474 = vmatpush.bf16.msra.mxu0 0
        %2475 = vmatpush.bf16.msra.mxu0 0
        %2476 = vmatpush.bf16.msra.mxu0 0
        %2477 = vmatpush.bf16.msra.mxu0 0
        %2478 = vmatpush.bf16.msra.mxu0 0
        %2479 = vmatpush.bf16.msra.mxu0 0
        %2480 = vmatpush.bf16.msra.mxu0 0
        %2481 = vmatpush.bf16.msra.mxu0 %v2472
        %2482 = vmatmul.bf16.gmra.mxu0 %v2469
        %v2483 = vpop.f32.mrf.mxu0
        %v2484 = vadd.f32 0.0, %v2483
        %v2485 = vpop.f32.mrf.mxu0
        %v2486 = vadd.f32 0.0, %v2485
        %2487 = vdwg.mxu0
        %v2488 = vadd.f32 %v2351, %v2484
        %v2489 = vadd.f32 %v2352, %v2486
        %v2491 = vperm.slane %v1110, 0
        %v2493 = vadd.f32 %v2488, %v2491
        %v2494 = vadd.f32 %v2489, %v2491
        %v2495 = vadd.f32 %v2493, %v1835
        %v2496 = vadd.f32 %v2494, %v1836
        %v2497 = vsel %vm1141, %v2495, 0.0
        %2498 = vadd.xlane.f32.xlu0 %v2497
        %v2499 = vpop.xlane.xlu0 %2498
        %v2500 = vsel %vm1141, %v2496, 0.0
        %2501 = vadd.xlane.f32.xlu0 %v2500
        %v2502 = vpop.xlane.xlu0 %2501
        %v2503 = vmul.f32 %v2499, %v1792
        %v2504 = vmul.f32 %v2502, %v1792
        %v2505 = vsub.f32 %v2495, %v2503
        %v2506 = vsub.f32 %v2496, %v2504
        %v2507 = vmul.f32 %v2505, %v2505
        %v2508 = vmul.f32 %v2506, %v2506
        %v2509 = vsel %vm1141, %v2507, 0.0
        %2510 = vadd.xlane.f32.xlu0 %v2509
        %v2511 = vpop.xlane.xlu0 %2510
        %v2512 = vsel %vm1141, %v2508, 0.0
        %2513 = vadd.xlane.f32.xlu0 %v2512
        %v2514 = vpop.xlane.xlu0 %2513
        %v2515 = vmul.f32 %v2511, %v1792
        %v2516 = vmul.f32 %v2514, %v1792
        %v2517 = vadd.f32 %v2515, 1e-12
        %v2518 = vadd.f32 %v2516, 1e-12
        %v2519 = vrsqrt.pop %v2517
        %v2520 = vmul.f32 %v2519, %v2517
        %v2521 = vmul.f32 %v2520, %v2519
        %v2522 = vmul.f32 0.5, %v2521
        %v2523 = vsub.f32 1.5, %v2522
        %v2524 = vmul.f32 %v2519, %v2523
        %vm2525 = vweird.f32 %v2517
        %vm2526 = vweird.f32 %v2519
        %vm2527 = vmor %vm2525, %vm2526
        %v2528 = vsel %vm2527, %v2519, %v2524
        %v2529 = vrsqrt.pop %v2518
        %v2530 = vmul.f32 %v2529, %v2518
        %v2531 = vmul.f32 %v2530, %v2529
        %v2532 = vmul.f32 0.5, %v2531
        %v2533 = vsub.f32 1.5, %v2532
        %v2534 = vmul.f32 %v2529, %v2533
        %vm2535 = vweird.f32 %v2518
        %vm2536 = vweird.f32 %v2529
        %vm2537 = vmor %vm2535, %vm2536
        %v2538 = vsel %vm2537, %v2529, %v2534
        %v2539 = vmul.f32 %v2505, %v2528
        %v2540 = vmul.f32 %v2506, %v2538
        %v2541 = vperm.slane %v1111, 1
        %v2542 = vmul.f32 %v2539, %v2541
        %v2543 = vmul.f32 %v2540, %v2541
        %v2544 = vperm.slane %v1112, 1
        %v2545 = vadd.f32 %v2542, %v2544
        %v2546 = vadd.f32 %v2543, %v2544
        %v2547 = vpack.c.bf16 %v2546, %v2545
        %v2549 = vperm.slane %v1117, 0
        %v2555 = vunpack.c.l.b16 %v1113
        %v2556 = vunpack.c.l.b16 %v1114
        %v2557 = vunpack.c.l.b16 %v1115
        %v2558 = vunpack.c.l.b16 %v1116
        %v2559 = vpack.c.b16 %v2556, %v2555
        %v2560 = vpack.c.b16 %v2558, %v2557
        %v2564 = vsel %vm1141, %v2547, 0
        %2566 = vmatpush.bf16.msra.mxu0 0
        %2567 = vmatpush.bf16.msra.mxu0 0
        %2568 = vmatpush.bf16.msra.mxu0 0
        %2569 = vmatpush.bf16.msra.mxu0 0
        %2570 = vmatpush.bf16.msra.mxu0 0
        %2571 = vmatpush.bf16.msra.mxu0 0
        %2572 = vmatpush.bf16.msra.mxu0 %v2560
        %2573 = vmatpush.bf16.msra.mxu0 %v2559
        %2574 = vmatmul.bf16.gmra.mxu0 %v2564
        %v2575 = vpop.f32.mrf.mxu0
        %v2576 = vadd.f32 %v2549, %v2575
        %v2577 = vpop.f32.mrf.mxu0
        %v2578 = vadd.f32 %v2549, %v2577
        %2579 = vdwg.mxu0
        %v2580 = vmax.f32 %v2576, 0.0
        %v2581 = vmax.f32 %v2578, 0.0
        %v2582 = vpack.c.bf16 %v2581, %v2580
        %v2584 = vperm.slane %v1126, 0
        %v2594 = vunpack.c.l.b16 %v1118
        %v2595 = vunpack.c.l.b16 %v1119
        %v2596 = vunpack.c.l.b16 %v1120
        %v2597 = vunpack.c.l.b16 %v1121
        %v2598 = vunpack.c.l.b16 %v1122
        %v2599 = vunpack.c.l.b16 %v1123
        %v2600 = vunpack.c.l.b16 %v1124
        %v2601 = vunpack.c.l.b16 %v1125
        %v2602 = vpack.c.b16 %v2595, %v2594
        %v2603 = vpack.c.b16 %v2597, %v2596
        %v2604 = vpack.c.b16 %v2599, %v2598
        %v2605 = vpack.c.b16 %v2601, %v2600
        %vm2610 = vcmask 523264
        %v2612 = vsel %vm2610, %v2582, 0
        %2614 = vmatpush.bf16.msra.mxu0 0
        %2615 = vmatpush.bf16.msra.mxu0 0
        %2616 = vmatpush.bf16.msra.mxu0 0
        %2617 = vmatpush.bf16.msra.mxu0 0
        %2618 = vmatpush.bf16.msra.mxu0 %v2605
        %2619 = vmatpush.bf16.msra.mxu0 %v2604
        %2620 = vmatpush.bf16.msra.mxu0 %v2603
        %2621 = vmatpush.bf16.msra.mxu0 %v2602
        %2622 = vmatmul.bf16.gmra.mxu0 %v2612
        %v2623 = vpop.f32.mrf.mxu0
        %v2624 = vadd.f32 %v2584, %v2623
        %v2625 = vpop.f32.mrf.mxu0
        %v2626 = vadd.f32 %v2584, %v2625
        %2627 = vdwg.mxu0
        %v2628 = vadd.f32 %v2624, %v2545
        %v2629 = vadd.f32 %v2626, %v2546
        %v2630 = vsel %vm1141, %v2628, 0.0
        %2631 = vadd.xlane.f32.xlu0 %v2630
        %v2632 = vpop.xlane.xlu0 %2631
        %v2633 = vsel %vm1141, %v2629, 0.0
        %2634 = vadd.xlane.f32.xlu0 %v2633
        %v2635 = vpop.xlane.xlu0 %2634
        %v2636 = vmul.f32 %v2632, %v1792
        %v2637 = vmul.f32 %v2635, %v1792
        %v2638 = vsub.f32 %v2628, %v2636
        %v2639 = vsub.f32 %v2629, %v2637
        %v2640 = vmul.f32 %v2638, %v2638
        %v2641 = vmul.f32 %v2639, %v2639
        %v2642 = vsel %vm1141, %v2640, 0.0
        %2643 = vadd.xlane.f32.xlu0 %v2642
        %v2644 = vpop.xlane.xlu0 %2643
        %v2645 = vsel %vm1141, %v2641, 0.0
        %2646 = vadd.xlane.f32.xlu0 %v2645
        %v2647 = vpop.xlane.xlu0 %2646
        %v2648 = vmul.f32 %v2644, %v1792
        %v2649 = vmul.f32 %v2647, %v1792
        %v2650 = vadd.f32 %v2648, 1e-12
        %v2651 = vadd.f32 %v2649, 1e-12
        %v2652 = vrsqrt.pop %v2650
        %v2653 = vmul.f32 %v2652, %v2650
        %v2654 = vmul.f32 %v2653, %v2652
        %v2655 = vmul.f32 0.5, %v2654
        %v2656 = vsub.f32 1.5, %v2655
        %v2657 = vmul.f32 %v2652, %v2656
        %vm2658 = vweird.f32 %v2650
        %vm2659 = vweird.f32 %v2652
        %vm2660 = vmor %vm2658, %vm2659
        %v2661 = vsel %vm2660, %v2652, %v2657
        %v2662 = vrsqrt.pop %v2651
        %v2663 = vmul.f32 %v2662, %v2651
        %v2664 = vmul.f32 %v2663, %v2662
        %v2665 = vmul.f32 0.5, %v2664
        %v2666 = vsub.f32 1.5, %v2665
        %v2667 = vmul.f32 %v2662, %v2666
        %vm2668 = vweird.f32 %v2651
        %vm2669 = vweird.f32 %v2662
        %vm2670 = vmor %vm2668, %vm2669
        %v2671 = vsel %vm2670, %v2662, %v2667
        %v2672 = vmul.f32 %v2638, %v2661
        %v2673 = vmul.f32 %v2639, %v2671
        %v2674 = vperm.slane %v1111, 2
        %v2675 = vmul.f32 %v2672, %v2674
        %v2676 = vmul.f32 %v2673, %v2674
        %v2677 = vperm.slane %v1112, 2
        %v2678 = vadd.f32 %v2675, %v2677
        %v2679 = vadd.f32 %v2676, %v2677
        %2680 = vst.msk [vmem:[#allocation2] sm:$0xff] %vm1141, %v2678
        %2681 = vst.msk [vmem:[#allocation2 + $0x8] sm:$0xff] %vm1141, %v2679
        %p2682 = scmp.eq.s32.totalorder %s46, 1
        // Predicated region
        $region137: #{tpu_custom_call.1} parent=99 // pred_check
          %p2683 = pneg %p2682
        $region138: #{tpu_custom_call.1} parent=99 // pred_check_branch
          %2685 = sbr.rel (%p2683) target = $region140
        $region139: #{tpu_custom_call.1} parent=99 // pred_region
          %v2686 = vpack.c.bf16 %v2679, %v2678
          %v2687 = vld [vmem:[#allocation15] sm:$0xf]
          %v2688 = vld [vmem:[#allocation15 + $0x4] sm:$0xf]
          %v2689 = vld [vmem:[#allocation15 + $0x8] sm:$0xf]
          %v2690 = vld [vmem:[#allocation15 + $0xc] sm:$0xf]
          %v2691 = vld [vmem:[%s19] sm:$0x1]
          %v2693 = vperm.slane %v2691, 0
          %v2699 = vunpack.c.l.b16 %v2687
          %v2700 = vunpack.c.l.b16 %v2688
          %v2701 = vunpack.c.l.b16 %v2689
          %v2702 = vunpack.c.l.b16 %v2690
          %v2703 = vpack.c.b16 %v2700, %v2699
          %v2704 = vpack.c.b16 %v2702, %v2701
          %v2708 = vsel %vm1141, %v2686, 0
          %2710 = vmatpush.bf16.msra.mxu0 0
          %2711 = vmatpush.bf16.msra.mxu0 0
          %2712 = vmatpush.bf16.msra.mxu0 0
          %2713 = vmatpush.bf16.msra.mxu0 0
          %2714 = vmatpush.bf16.msra.mxu0 0
          %2715 = vmatpush.bf16.msra.mxu0 0
          %2716 = vmatpush.bf16.msra.mxu0 %v2704
          %2717 = vmatpush.bf16.msra.mxu0 %v2703
          %2718 = vmatmul.bf16.gmra.mxu0 %v2708
          %v2719 = vpop.f32.mrf.mxu0
          %v2720 = vadd.f32 %v2693, %v2719
          %v2721 = vpop.f32.mrf.mxu0
          %v2722 = vadd.f32 %v2693, %v2721
          %2723 = vdwg.mxu0
          %2724 = vst [vmem:[#allocation17] sm:$0xff] %v2720
          %2725 = vst [vmem:[#allocation17 + $0x8] sm:$0xff] %v2722
        $region140: #{tpu_custom_call.1} parent=99 // pred_fallthru
          _
        // Predicated region
        $region141: #{tpu_custom_call.1} parent=99 // pred_check
          %p2726 = pneg %p581
        $region142: #{tpu_custom_call.1} parent=99 // pred_check_branch
          %2728 = sbr.rel (%p2726) target = $region144
        $region143: #{tpu_custom_call.1} parent=99 // pred_region
          %s2729 = smul.u32 2, %s45
          %2731 = vsyncadd [#allocation5], 0
          %s2732 = smul.addr %s2729, 8
          %s2733 = scalar_lea.hbm %s20, %s2732
          %s2734 = sshll.u32 [#allocation17], 4
          %s2735 = int_to_ptr.vmem [resolvable:$true] %s2734
          %s2736 = sshll.u32 %s2733, 4
          %s2737 = int_to_ptr.hbm [resolvable:$true] %s2736
          %2742 = dma.vmem_to_hbm [thread:$0]  %s2735, 256, %s2737, [#allocation5], 128, 128, 8
        $region144: #{tpu_custom_call.1} parent=99 // pred_fallthru
          _
        // Predicated region
        $region145: #{tpu_custom_call.1} parent=99 // pred_check
          %p2743 = pneg %p581
        $region146: #{tpu_custom_call.1} parent=99 // pred_check_branch
          %2745 = sbr.rel (%p2743) target = $region148
        $region147: #{tpu_custom_call.1} parent=99 // pred_region
          %2747 = dma.done [#allocation5], 256
        $region148: #{tpu_custom_call.1} parent=99 // pred_fallthru
          _
      $region100: #{tpu_custom_call.1} parent=5 // pred_fallthru
        _
      %p2748 = scmp.le.s32.totalorder 2, %s36
      // Predicated region
      $region149: #{tpu_custom_call.1} parent=5 // pred_check
        %p2749 = pneg %p2748
      $region150: #{tpu_custom_call.1} parent=5 // pred_check_branch
        %2751 = sbr.rel (%p2749) target = $region152
      $region151: #{tpu_custom_call.1} parent=5 // pred_region
        %s2752 = ssub.s32 %s36, 2
      $region152: #{tpu_custom_call.1} parent=5 // pred_fallthru
        _
    $region6: #{tpu_custom_call.1} parent=1 // loop_footer
      %s40 = sadd.s32 1, %s36
    $region7: #{tpu_custom_call.1} parent=1 // loop_footer_branch
      %35 = sbr.rel target = $region3
    $region8: #{tpu_custom_call.1} parent=1 // loop_exit
      _
    %2753 = vsyncpa [#allocation4], 1
    %s2754 = scalar_lea.sflag [#allocation4], 1
    %2755 = vsyncpa %s2754, 1
    %2756 = vsyncpa [#allocation7], 1
    %2757 = vsyncpa [#allocation10], 1
    %s2758 = scalar_lea.sflag [#allocation10], 1
    %2759 = vsyncpa %s2758, 1
    %2760 = vsyncpa [#allocation13], 1
    %s2761 = scalar_lea.sflag [#allocation13], 1
    %2762 = vsyncpa %s2761, 1
    %2763 = vsyncpa [#allocation16], 1
    %2764 = vsyncpa [#allocation5], 1
    %s2765 = scalar_lea.sflag [#allocation5], 1
    %2766 = vsyncpa %s2765, 1

</llo_original>
